<compile_context>
chip_gen: v7x
topology: tpu7x:2x2x1
jax: 0.10.0
libtpu: 0.0.40
codegen_flags: <defaults>
</compile_context>

<pallas_src>
import math

import jax
import jax.numpy as jnp
from jax.experimental import pallas as pl
from jax.experimental.pallas import tpu as pltpu


# ----------------------------------------------------------------------------
# In-kernel helpers (operate on VMEM values)
# ----------------------------------------------------------------------------
def _pad_hw1(x):
    """Zero-pad H and W by 1 on each side. x: (H, W, C) f32 value."""
    H, W, C = x.shape
    zr = jnp.zeros((1, W, C), x.dtype)
    x = jnp.concatenate([zr, x, zr], axis=0)
    zc = jnp.zeros((H + 2, 1, C), x.dtype)
    return jnp.concatenate([zc, x, zc], axis=1)


def _im2col3x3(x):
    """x: (H, W, C) -> (H*W, 9*C) patch matrix for a 3x3 'same' conv."""
    H, W, C = x.shape
    xp = _pad_hw1(x)
    cols = []
    for kh in range(3):
        for kw in range(3):
            sl = jax.lax.slice(xp, (kh, kw, 0), (kh + H, kw + W, C))
            cols.append(sl.reshape(H * W, C))
    return jnp.concatenate(cols, axis=-1)


def _mm(a, w_ref):
    """bf16 MXU matmul with f32 accumulation; `a` is an f32 VMEM value."""
    return jnp.dot(a.astype(jnp.bfloat16), w_ref[...],
                   preferred_element_type=jnp.float32)


# ----------------------------------------------------------------------------
# Fused CADDN head kernel: one image per grid step, everything in VMEM.
# ----------------------------------------------------------------------------
def _caddn_kernel(x_ref, wdec_ref, wrt1_ref, wrt2_ref, wrt3_ref,
                  wout_ref, wseg_ref, segb_ref, y_ref):
    H, W = x_ref.shape[1], x_ref.shape[2]
    dec_c = wrt3_ref.shape[-1]
    planes = wrt1_ref.shape[-1]
    classes = wseg_ref.shape[-1]
    cin = wout_ref.shape[-1]

    x = x_ref[0]                                            # (H, W, cin) f32

    # surrogate decoderI | decoderS: one fused conv3x3 + ReLU, split after
    d = jnp.maximum(_mm(_im2col3x3(x), wdec_ref), 0.0)      # (H*W, 2*dec_c)
    dI = d[:, :dec_c]
    dS = d[:, dec_c:]

    # reconstruction_head (RGBTail); BN scales folded into weights on host
    h = jnp.maximum(_mm(dI, wrt1_ref), 0.0)                 # 1x1 + bn1 + relu
    h = jnp.maximum(
        _mm(_im2col3x3(h.reshape(H, W, planes)), wrt2_ref), 0.0)  # 3x3 + bn2 + relu
    h = jnp.maximum(_mm(h, wrt3_ref) + dI, 0.0)             # 1x1 + bn3 + res + relu

    # self.out: conv3x3 (no bias) + tanh
    image = jnp.tanh(_mm(_im2col3x3(h.reshape(H, W, dec_c)), wout_ref))

    # segmentation_head: conv3x3 + bias, identity activation
    masks = _mm(_im2col3x3(dS.reshape(H, W, dec_c)), wseg_ref) + segb_ref[...]

    # single packed store: [masks | image] along channels
    y = jnp.concatenate([masks, image], axis=-1)            # (H*W, classes+cin)
    y_ref[0] = y.reshape(H, W, classes + cin).astype(y_ref.dtype)


# ----------------------------------------------------------------------------
# Parameter init (deterministic, mirrors initialize_decoder / initialize_head)
# ----------------------------------------------------------------------------
def kaiming_uniform(key, kh, kw, cin, cout):
    fan_in = cin * kh * kw
    bound = math.sqrt(6.0 / fan_in)
    return jax.random.uniform(key, (kh, kw, cin, cout), jnp.float32, -bound, bound)


def xavier_uniform(key, kh, kw, cin, cout):
    fan_in, fan_out = cin * kh * kw, cout * kh * kw
    bound = math.sqrt(6.0 / (fan_in + fan_out))
    return jax.random.uniform(key, (kh, kw, cin, cout), jnp.float32, -bound, bound)


def make_params(key, in_channels=3, dec_c=16, planes=8, classes=1):
    ks = jax.random.split(key, 8)
    return {
        # TODO(synk): surrogate weights for the missing encoder/UnetDualDecoder.
        "decI_w": kaiming_uniform(ks[0], 3, 3, in_channels, dec_c),
        "decS_w": kaiming_uniform(ks[1], 3, 3, in_channels, dec_c),
        # reconstruction_head = RGBTail(inplanes=dec_c, planes=8)  (xavier init)
        "rt1_w": xavier_uniform(ks[2], 1, 1, dec_c, planes),
        "rt2_w": xavier_uniform(ks[3], 3, 3, planes, planes),
        "rt3_w": xavier_uniform(ks[4], 1, 1, planes, dec_c),
        # out = Conv2d(dec_c, in_channels, 3, 1, 1, bias=False) + Tanh
        "out_w": xavier_uniform(ks[5], 3, 3, dec_c, in_channels),
        # segmentation_head = Conv2d(dec_c, classes, 3, padding=1) + Identity
        "seg_w": xavier_uniform(ks[6], 3, 3, dec_c, classes),
        "seg_b": jnp.zeros((classes,), jnp.float32),
    }


# ----------------------------------------------------------------------------
# CADDN forward (host wrapper: fold BN, reshape weights to im2col matrices)
# ----------------------------------------------------------------------------
def caddn_forward(x_nchw, p):
    N, cin, H, W = x_nchw.shape
    dec_c = p["decI_w"].shape[-1]
    classes = p["seg_w"].shape[-1]
    bn_s = 1.0 / math.sqrt(1.0 + 1e-5)   # eval-mode BN: gamma=1, mean=0, var=1

    x = jnp.transpose(x_nchw, (0, 2, 3, 1)).astype(jnp.float32)   # NCHW -> NHWC

    def as_mat(w):   # (KH,KW,Cin,Cout) -> (KH*KW*Cin, Cout) bf16 im2col weight
        kh, kw, ci, co = w.shape
        return w.reshape(kh * kw * ci, co).astype(jnp.bfloat16)

    wdec = as_mat(jnp.concatenate([p["decI_w"], p["decS_w"]], axis=-1))
    wrt1 = as_mat(p["rt1_w"] * bn_s)      # fold bn1
    wrt2 = as_mat(p["rt2_w"] * bn_s)      # fold bn2
    wrt3 = as_mat(p["rt3_w"] * bn_s)      # fold bn3
    wout = as_mat(p["out_w"])             # no bn
    wseg = as_mat(p["seg_w"])             # no bn
    segb = p["seg_b"].reshape(1, classes).astype(jnp.float32)

    cout_y = classes + cin

    def full(shape):
        return pl.BlockSpec(shape, lambda n: (0,) * len(shape))

    y = pl.pallas_call(
        _caddn_kernel,
        out_shape=jax.ShapeDtypeStruct((N, H, W, cout_y), jnp.float32),
        grid=(N,),
        in_specs=[
            pl.BlockSpec((1, H, W, cin), lambda n: (n, 0, 0, 0)),
            full(wdec.shape), full(wrt1.shape), full(wrt2.shape),
            full(wrt3.shape), full(wout.shape), full(wseg.shape),
            full(segb.shape),
        ],
        out_specs=pl.BlockSpec((1, H, W, cout_y), lambda n: (n, 0, 0, 0)),
        compiler_params=pltpu.CompilerParams(
            dimension_semantics=("parallel",),
            vmem_limit_bytes=32 * 1024 * 1024),
    )(x, wdec, wrt1, wrt2, wrt3, wout, wseg, segb)

    # split packed output and return PyTorch-style NCHW
    masks = jnp.transpose(y[..., :classes], (0, 3, 1, 2))
    image = jnp.transpose(y[..., classes:], (0, 3, 1, 2))
    return masks, image


if __name__ == "__main__":
    key = jax.random.PRNGKey(0)
    k_x, k_p = jax.random.split(key)

    N, Cin, H, W = 2, 3, 16, 16
    classes = 1

    x = jax.random.normal(k_x, (N, Cin, H, W), jnp.float32)  # NCHW like PyTorch
    params = make_params(k_p, in_channels=Cin, dec_c=16, planes=8, classes=classes)

    masks, image = jax.jit(caddn_forward)(x, params)
    jax.block_until_ready((masks, image))

    assert masks.shape == (N, classes, H, W), masks.shape
    assert image.shape == (N, Cin, H, W), image.shape
    assert bool(jnp.all(jnp.isfinite(masks))) and bool(jnp.all(jnp.isfinite(image)))
    assert bool(jnp.all(jnp.abs(image) <= 1.0))  # tanh range

    print("KERNEL_OK")
</pallas_src>

<mosaic_0001>
module attributes {stable_mosaic.version = 11 : i64} {
  func.func @_caddn_kernel(%arg0: i32, %arg1: memref<1x16x16x3xf32, #tpu.memory_space<vmem>>, %arg2: memref<27x32xbf16, #tpu.memory_space<vmem>>, %arg3: memref<16x8xbf16, #tpu.memory_space<vmem>>, %arg4: memref<72x8xbf16, #tpu.memory_space<vmem>>, %arg5: memref<8x16xbf16, #tpu.memory_space<vmem>>, %arg6: memref<144x3xbf16, #tpu.memory_space<vmem>>, %arg7: memref<144x1xbf16, #tpu.memory_space<vmem>>, %arg8: memref<1x1xf32, #tpu.memory_space<vmem>>, %arg9: memref<1x16x16x4xf32, #tpu.memory_space<vmem>>) attributes {dimension_semantics = [#tpu.dimension_semantics<parallel>], iteration_bounds = array<i64: 2>, scalar_prefetch = 0 : i64, scratch_operands = 0 : i64, tpu.core_type = #tpu.core_type<tc>, window_params = [{transform_indices = @transform_0, window_bounds = array<i64: 1, 16, 16, 3>}, {pipeline_mode = #tpu.pipeline_mode<synchronous>, transform_indices = @transform_1, window_bounds = array<i64: 27, 32>}, {pipeline_mode = #tpu.pipeline_mode<synchronous>, transform_indices = @transform_2, window_bounds = array<i64: 16, 8>}, {pipeline_mode = #tpu.pipeline_mode<synchronous>, transform_indices = @transform_3, window_bounds = array<i64: 72, 8>}, {pipeline_mode = #tpu.pipeline_mode<synchronous>, transform_indices = @transform_4, window_bounds = array<i64: 8, 16>}, {pipeline_mode = #tpu.pipeline_mode<synchronous>, transform_indices = @transform_5, window_bounds = array<i64: 144, 3>}, {pipeline_mode = #tpu.pipeline_mode<synchronous>, transform_indices = @transform_6, window_bounds = array<i64: 144, 1>}, {pipeline_mode = #tpu.pipeline_mode<synchronous>, transform_indices = @transform_7, window_bounds = array<i64: 1, 1>}, {transform_indices = @transform_8, window_bounds = array<i64: 1, 16, 16, 4>}]} {
    %c0 = arith.constant 0 : index
    %c0_0 = arith.constant 0 : index
    %c0_1 = arith.constant 0 : index
    %c0_2 = arith.constant 0 : index
    %0 = vector.load %arg1[%c0, %c0_0, %c0_1, %c0_2] : memref<1x16x16x3xf32, #tpu.memory_space<vmem>>, vector<1x16x16x3xf32>
    %1 = vector.shape_cast %0 : vector<1x16x16x3xf32> to vector<16x16x3xf32>
    %cst = arith.constant 0.000000e+00 : f32
    %2 = vector.broadcast %cst : f32 to vector<1x16x3xf32>
    %3 = tpu.concatenate %2, %1, %2 in 0 : vector<1x16x3xf32>, vector<16x16x3xf32>, vector<1x16x3xf32> -> vector<18x16x3xf32>
    %cst_3 = arith.constant 0.000000e+00 : f32
    %4 = vector.broadcast %cst_3 : f32 to vector<18x1x3xf32>
    %5 = tpu.concatenate %4, %3, %4 in 1 : vector<18x1x3xf32>, vector<18x16x3xf32>, vector<18x1x3xf32> -> vector<18x18x3xf32>
    %6 = vector.extract_strided_slice %5 {offsets = [0, 0, 0], sizes = [16, 16, 3], strides = [1, 1, 1]} : vector<18x18x3xf32> to vector<16x16x3xf32>
    %7 = vector.shape_cast %6 : vector<16x16x3xf32> to vector<256x3xf32>
    %8 = vector.extract_strided_slice %5 {offsets = [0, 1, 0], sizes = [16, 16, 3], strides = [1, 1, 1]} : vector<18x18x3xf32> to vector<16x16x3xf32>
    %9 = vector.shape_cast %8 : vector<16x16x3xf32> to vector<256x3xf32>
    %10 = vector.extract_strided_slice %5 {offsets = [0, 2, 0], sizes = [16, 16, 3], strides = [1, 1, 1]} : vector<18x18x3xf32> to vector<16x16x3xf32>
    %11 = vector.shape_cast %10 : vector<16x16x3xf32> to vector<256x3xf32>
    %12 = vector.extract_strided_slice %5 {offsets = [1, 0, 0], sizes = [16, 16, 3], strides = [1, 1, 1]} : vector<18x18x3xf32> to vector<16x16x3xf32>
    %13 = vector.shape_cast %12 : vector<16x16x3xf32> to vector<256x3xf32>
    %14 = vector.extract_strided_slice %5 {offsets = [1, 1, 0], sizes = [16, 16, 3], strides = [1, 1, 1]} : vector<18x18x3xf32> to vector<16x16x3xf32>
    %15 = vector.shape_cast %14 : vector<16x16x3xf32> to vector<256x3xf32>
    %16 = vector.extract_strided_slice %5 {offsets = [1, 2, 0], sizes = [16, 16, 3], strides = [1, 1, 1]} : vector<18x18x3xf32> to vector<16x16x3xf32>
    %17 = vector.shape_cast %16 : vector<16x16x3xf32> to vector<256x3xf32>
    %18 = vector.extract_strided_slice %5 {offsets = [2, 0, 0], sizes = [16, 16, 3], strides = [1, 1, 1]} : vector<18x18x3xf32> to vector<16x16x3xf32>
    %19 = vector.shape_cast %18 : vector<16x16x3xf32> to vector<256x3xf32>
    %20 = vector.extract_strided_slice %5 {offsets = [2, 1, 0], sizes = [16, 16, 3], strides = [1, 1, 1]} : vector<18x18x3xf32> to vector<16x16x3xf32>
    %21 = vector.shape_cast %20 : vector<16x16x3xf32> to vector<256x3xf32>
    %22 = vector.extract_strided_slice %5 {offsets = [2, 2, 0], sizes = [16, 16, 3], strides = [1, 1, 1]} : vector<18x18x3xf32> to vector<16x16x3xf32>
    %23 = vector.shape_cast %22 : vector<16x16x3xf32> to vector<256x3xf32>
    %24 = tpu.concatenate %7, %9, %11, %13, %15, %17, %19, %21, %23 in 1 : vector<256x3xf32>, vector<256x3xf32>, vector<256x3xf32>, vector<256x3xf32>, vector<256x3xf32>, vector<256x3xf32>, vector<256x3xf32>, vector<256x3xf32>, vector<256x3xf32> -> vector<256x27xf32>
    %25 = arith.truncf %24 : vector<256x27xf32> to vector<256x27xbf16>
    %c0_4 = arith.constant 0 : index
    %c0_5 = arith.constant 0 : index
    %26 = vector.load %arg2[%c0_4, %c0_5] : memref<27x32xbf16, #tpu.memory_space<vmem>>, vector<27x32xbf16>
    %cst_6 = arith.constant dense<0.000000e+00> : vector<256x32xf32>
    %27 = tpu.matmul %25, %26, %cst_6 {dimension_numbers = #tpu.dot_dimension_numbers<[1], [0], [0], [1], [0, 0, 1, 1], [], []>} : vector<256x27xbf16>, vector<27x32xbf16>, vector<256x32xf32> -> vector<256x32xf32>
    %cst_7 = arith.constant 0.000000e+00 : f32
    %28 = vector.broadcast %cst_7 : f32 to vector<256x32xf32>
    %29 = arith.maximumf %27, %28 : vector<256x32xf32>
    %30 = vector.extract_strided_slice %29 {offsets = [0, 0], sizes = [256, 16], strides = [1, 1]} : vector<256x32xf32> to vector<256x16xf32>
    %31 = vector.extract_strided_slice %29 {offsets = [0, 16], sizes = [256, 16], strides = [1, 1]} : vector<256x32xf32> to vector<256x16xf32>
    %32 = arith.truncf %30 : vector<256x16xf32> to vector<256x16xbf16>
    %c0_8 = arith.constant 0 : index
    %c0_9 = arith.constant 0 : index
    %33 = vector.load %arg3[%c0_8, %c0_9] : memref<16x8xbf16, #tpu.memory_space<vmem>>, vector<16x8xbf16>
    %cst_10 = arith.constant dense<0.000000e+00> : vector<256x8xf32>
    %34 = tpu.matmul %32, %33, %cst_10 {dimension_numbers = #tpu.dot_dimension_numbers<[1], [0], [0], [1], [0, 0, 1, 1], [], []>} : vector<256x16xbf16>, vector<16x8xbf16>, vector<256x8xf32> -> vector<256x8xf32>
    %cst_11 = arith.constant 0.000000e+00 : f32
    %35 = vector.broadcast %cst_11 : f32 to vector<256x8xf32>
    %36 = arith.maximumf %34, %35 : vector<256x8xf32>
    %37 = vector.shape_cast %36 : vector<256x8xf32> to vector<16x16x8xf32>
    %cst_12 = arith.constant 0.000000e+00 : f32
    %38 = vector.broadcast %cst_12 : f32 to vector<1x16x8xf32>
    %39 = tpu.concatenate %38, %37, %38 in 0 : vector<1x16x8xf32>, vector<16x16x8xf32>, vector<1x16x8xf32> -> vector<18x16x8xf32>
    %cst_13 = arith.constant 0.000000e+00 : f32
    %40 = vector.broadcast %cst_13 : f32 to vector<18x1x8xf32>
    %41 = tpu.concatenate %40, %39, %40 in 1 : vector<18x1x8xf32>, vector<18x16x8xf32>, vector<18x1x8xf32> -> vector<18x18x8xf32>
    %42 = vector.extract_strided_slice %41 {offsets = [0, 0, 0], sizes = [16, 16, 8], strides = [1, 1, 1]} : vector<18x18x8xf32> to vector<16x16x8xf32>
    %43 = vector.shape_cast %42 : vector<16x16x8xf32> to vector<256x8xf32>
    %44 = vector.extract_strided_slice %41 {offsets = [0, 1, 0], sizes = [16, 16, 8], strides = [1, 1, 1]} : vector<18x18x8xf32> to vector<16x16x8xf32>
    %45 = vector.shape_cast %44 : vector<16x16x8xf32> to vector<256x8xf32>
    %46 = vector.extract_strided_slice %41 {offsets = [0, 2, 0], sizes = [16, 16, 8], strides = [1, 1, 1]} : vector<18x18x8xf32> to vector<16x16x8xf32>
    %47 = vector.shape_cast %46 : vector<16x16x8xf32> to vector<256x8xf32>
    %48 = vector.extract_strided_slice %41 {offsets = [1, 0, 0], sizes = [16, 16, 8], strides = [1, 1, 1]} : vector<18x18x8xf32> to vector<16x16x8xf32>
    %49 = vector.shape_cast %48 : vector<16x16x8xf32> to vector<256x8xf32>
    %50 = vector.extract_strided_slice %41 {offsets = [1, 1, 0], sizes = [16, 16, 8], strides = [1, 1, 1]} : vector<18x18x8xf32> to vector<16x16x8xf32>
    %51 = vector.shape_cast %50 : vector<16x16x8xf32> to vector<256x8xf32>
    %52 = vector.extract_strided_slice %41 {offsets = [1, 2, 0], sizes = [16, 16, 8], strides = [1, 1, 1]} : vector<18x18x8xf32> to vector<16x16x8xf32>
    %53 = vector.shape_cast %52 : vector<16x16x8xf32> to vector<256x8xf32>
    %54 = vector.extract_strided_slice %41 {offsets = [2, 0, 0], sizes = [16, 16, 8], strides = [1, 1, 1]} : vector<18x18x8xf32> to vector<16x16x8xf32>
    %55 = vector.shape_cast %54 : vector<16x16x8xf32> to vector<256x8xf32>
    %56 = vector.extract_strided_slice %41 {offsets = [2, 1, 0], sizes = [16, 16, 8], strides = [1, 1, 1]} : vector<18x18x8xf32> to vector<16x16x8xf32>
    %57 = vector.shape_cast %56 : vector<16x16x8xf32> to vector<256x8xf32>
    %58 = vector.extract_strided_slice %41 {offsets = [2, 2, 0], sizes = [16, 16, 8], strides = [1, 1, 1]} : vector<18x18x8xf32> to vector<16x16x8xf32>
    %59 = vector.shape_cast %58 : vector<16x16x8xf32> to vector<256x8xf32>
    %60 = tpu.concatenate %43, %45, %47, %49, %51, %53, %55, %57, %59 in 1 : vector<256x8xf32>, vector<256x8xf32>, vector<256x8xf32>, vector<256x8xf32>, vector<256x8xf32>, vector<256x8xf32>, vector<256x8xf32>, vector<256x8xf32>, vector<256x8xf32> -> vector<256x72xf32>
    %61 = arith.truncf %60 : vector<256x72xf32> to vector<256x72xbf16>
    %c0_14 = arith.constant 0 : index
    %c0_15 = arith.constant 0 : index
    %62 = vector.load %arg4[%c0_14, %c0_15] : memref<72x8xbf16, #tpu.memory_space<vmem>>, vector<72x8xbf16>
    %cst_16 = arith.constant dense<0.000000e+00> : vector<256x8xf32>
    %63 = tpu.matmul %61, %62, %cst_16 {dimension_numbers = #tpu.dot_dimension_numbers<[1], [0], [0], [1], [0, 0, 1, 1], [], []>} : vector<256x72xbf16>, vector<72x8xbf16>, vector<256x8xf32> -> vector<256x8xf32>
    %cst_17 = arith.constant 0.000000e+00 : f32
    %64 = vector.broadcast %cst_17 : f32 to vector<256x8xf32>
    %65 = arith.maximumf %63, %64 : vector<256x8xf32>
    %66 = arith.truncf %65 : vector<256x8xf32> to vector<256x8xbf16>
    %c0_18 = arith.constant 0 : index
    %c0_19 = arith.constant 0 : index
    %67 = vector.load %arg5[%c0_18, %c0_19] : memref<8x16xbf16, #tpu.memory_space<vmem>>, vector<8x16xbf16>
    %cst_20 = arith.constant dense<0.000000e+00> : vector<256x16xf32>
    %68 = tpu.matmul %66, %67, %cst_20 {dimension_numbers = #tpu.dot_dimension_numbers<[1], [0], [0], [1], [0, 0, 1, 1], [], []>} : vector<256x8xbf16>, vector<8x16xbf16>, vector<256x16xf32> -> vector<256x16xf32>
    %69 = arith.addf %68, %30 : vector<256x16xf32>
    %cst_21 = arith.constant 0.000000e+00 : f32
    %70 = vector.broadcast %cst_21 : f32 to vector<256x16xf32>
    %71 = arith.maximumf %69, %70 : vector<256x16xf32>
    %72 = vector.shape_cast %71 : vector<256x16xf32> to vector<16x16x16xf32>
    %cst_22 = arith.constant 0.000000e+00 : f32
    %73 = vector.broadcast %cst_22 : f32 to vector<1x16x16xf32>
    %74 = tpu.concatenate %73, %72, %73 in 0 : vector<1x16x16xf32>, vector<16x16x16xf32>, vector<1x16x16xf32> -> vector<18x16x16xf32>
    %cst_23 = arith.constant 0.000000e+00 : f32
    %75 = vector.broadcast %cst_23 : f32 to vector<18x1x16xf32>
    %76 = tpu.concatenate %75, %74, %75 in 1 : vector<18x1x16xf32>, vector<18x16x16xf32>, vector<18x1x16xf32> -> vector<18x18x16xf32>
    %77 = vector.extract_strided_slice %76 {offsets = [0, 0, 0], sizes = [16, 16, 16], strides = [1, 1, 1]} : vector<18x18x16xf32> to vector<16x16x16xf32>
    %78 = vector.shape_cast %77 : vector<16x16x16xf32> to vector<256x16xf32>
    %79 = vector.extract_strided_slice %76 {offsets = [0, 1, 0], sizes = [16, 16, 16], strides = [1, 1, 1]} : vector<18x18x16xf32> to vector<16x16x16xf32>
    %80 = vector.shape_cast %79 : vector<16x16x16xf32> to vector<256x16xf32>
    %81 = vector.extract_strided_slice %76 {offsets = [0, 2, 0], sizes = [16, 16, 16], strides = [1, 1, 1]} : vector<18x18x16xf32> to vector<16x16x16xf32>
    %82 = vector.shape_cast %81 : vector<16x16x16xf32> to vector<256x16xf32>
    %83 = vector.extract_strided_slice %76 {offsets = [1, 0, 0], sizes = [16, 16, 16], strides = [1, 1, 1]} : vector<18x18x16xf32> to vector<16x16x16xf32>
    %84 = vector.shape_cast %83 : vector<16x16x16xf32> to vector<256x16xf32>
    %85 = vector.extract_strided_slice %76 {offsets = [1, 1, 0], sizes = [16, 16, 16], strides = [1, 1, 1]} : vector<18x18x16xf32> to vector<16x16x16xf32>
    %86 = vector.shape_cast %85 : vector<16x16x16xf32> to vector<256x16xf32>
    %87 = vector.extract_strided_slice %76 {offsets = [1, 2, 0], sizes = [16, 16, 16], strides = [1, 1, 1]} : vector<18x18x16xf32> to vector<16x16x16xf32>
    %88 = vector.shape_cast %87 : vector<16x16x16xf32> to vector<256x16xf32>
    %89 = vector.extract_strided_slice %76 {offsets = [2, 0, 0], sizes = [16, 16, 16], strides = [1, 1, 1]} : vector<18x18x16xf32> to vector<16x16x16xf32>
    %90 = vector.shape_cast %89 : vector<16x16x16xf32> to vector<256x16xf32>
    %91 = vector.extract_strided_slice %76 {offsets = [2, 1, 0], sizes = [16, 16, 16], strides = [1, 1, 1]} : vector<18x18x16xf32> to vector<16x16x16xf32>
    %92 = vector.shape_cast %91 : vector<16x16x16xf32> to vector<256x16xf32>
    %93 = vector.extract_strided_slice %76 {offsets = [2, 2, 0], sizes = [16, 16, 16], strides = [1, 1, 1]} : vector<18x18x16xf32> to vector<16x16x16xf32>
    %94 = vector.shape_cast %93 : vector<16x16x16xf32> to vector<256x16xf32>
    %95 = tpu.concatenate %78, %80, %82, %84, %86, %88, %90, %92, %94 in 1 : vector<256x16xf32>, vector<256x16xf32>, vector<256x16xf32>, vector<256x16xf32>, vector<256x16xf32>, vector<256x16xf32>, vector<256x16xf32>, vector<256x16xf32>, vector<256x16xf32> -> vector<256x144xf32>
    %96 = arith.truncf %95 : vector<256x144xf32> to vector<256x144xbf16>
    %c0_24 = arith.constant 0 : index
    %c0_25 = arith.constant 0 : index
    %97 = vector.load %arg6[%c0_24, %c0_25] : memref<144x3xbf16, #tpu.memory_space<vmem>>, vector<144x3xbf16>
    %cst_26 = arith.constant dense<0.000000e+00> : vector<256x3xf32>
    %98 = tpu.matmul %96, %97, %cst_26 {dimension_numbers = #tpu.dot_dimension_numbers<[1], [0], [0], [1], [0, 0, 1, 1], [], []>} : vector<256x144xbf16>, vector<144x3xbf16>, vector<256x3xf32> -> vector<256x3xf32>
    %99 = math.tanh %98 : vector<256x3xf32>
    %100 = vector.shape_cast %31 : vector<256x16xf32> to vector<16x16x16xf32>
    %cst_27 = arith.constant 0.000000e+00 : f32
    %101 = vector.broadcast %cst_27 : f32 to vector<1x16x16xf32>
    %102 = tpu.concatenate %101, %100, %101 in 0 : vector<1x16x16xf32>, vector<16x16x16xf32>, vector<1x16x16xf32> -> vector<18x16x16xf32>
    %cst_28 = arith.constant 0.000000e+00 : f32
    %103 = vector.broadcast %cst_28 : f32 to vector<18x1x16xf32>
    %104 = tpu.concatenate %103, %102, %103 in 1 : vector<18x1x16xf32>, vector<18x16x16xf32>, vector<18x1x16xf32> -> vector<18x18x16xf32>
    %105 = vector.extract_strided_slice %104 {offsets = [0, 0, 0], sizes = [16, 16, 16], strides = [1, 1, 1]} : vector<18x18x16xf32> to vector<16x16x16xf32>
    %106 = vector.shape_cast %105 : vector<16x16x16xf32> to vector<256x16xf32>
    %107 = vector.extract_strided_slice %104 {offsets = [0, 1, 0], sizes = [16, 16, 16], strides = [1, 1, 1]} : vector<18x18x16xf32> to vector<16x16x16xf32>
    %108 = vector.shape_cast %107 : vector<16x16x16xf32> to vector<256x16xf32>
    %109 = vector.extract_strided_slice %104 {offsets = [0, 2, 0], sizes = [16, 16, 16], strides = [1, 1, 1]} : vector<18x18x16xf32> to vector<16x16x16xf32>
    %110 = vector.shape_cast %109 : vector<16x16x16xf32> to vector<256x16xf32>
    %111 = vector.extract_strided_slice %104 {offsets = [1, 0, 0], sizes = [16, 16, 16], strides = [1, 1, 1]} : vector<18x18x16xf32> to vector<16x16x16xf32>
    %112 = vector.shape_cast %111 : vector<16x16x16xf32> to vector<256x16xf32>
    %113 = vector.extract_strided_slice %104 {offsets = [1, 1, 0], sizes = [16, 16, 16], strides = [1, 1, 1]} : vector<18x18x16xf32> to vector<16x16x16xf32>
    %114 = vector.shape_cast %113 : vector<16x16x16xf32> to vector<256x16xf32>
    %115 = vector.extract_strided_slice %104 {offsets = [1, 2, 0], sizes = [16, 16, 16], strides = [1, 1, 1]} : vector<18x18x16xf32> to vector<16x16x16xf32>
    %116 = vector.shape_cast %115 : vector<16x16x16xf32> to vector<256x16xf32>
    %117 = vector.extract_strided_slice %104 {offsets = [2, 0, 0], sizes = [16, 16, 16], strides = [1, 1, 1]} : vector<18x18x16xf32> to vector<16x16x16xf32>
    %118 = vector.shape_cast %117 : vector<16x16x16xf32> to vector<256x16xf32>
    %119 = vector.extract_strided_slice %104 {offsets = [2, 1, 0], sizes = [16, 16, 16], strides = [1, 1, 1]} : vector<18x18x16xf32> to vector<16x16x16xf32>
    %120 = vector.shape_cast %119 : vector<16x16x16xf32> to vector<256x16xf32>
    %121 = vector.extract_strided_slice %104 {offsets = [2, 2, 0], sizes = [16, 16, 16], strides = [1, 1, 1]} : vector<18x18x16xf32> to vector<16x16x16xf32>
    %122 = vector.shape_cast %121 : vector<16x16x16xf32> to vector<256x16xf32>
    %123 = tpu.concatenate %106, %108, %110, %112, %114, %116, %118, %120, %122 in 1 : vector<256x16xf32>, vector<256x16xf32>, vector<256x16xf32>, vector<256x16xf32>, vector<256x16xf32>, vector<256x16xf32>, vector<256x16xf32>, vector<256x16xf32>, vector<256x16xf32> -> vector<256x144xf32>
    %124 = arith.truncf %123 : vector<256x144xf32> to vector<256x144xbf16>
    %c0_29 = arith.constant 0 : index
    %c0_30 = arith.constant 0 : index
    %125 = vector.load %arg7[%c0_29, %c0_30] : memref<144x1xbf16, #tpu.memory_space<vmem>>, vector<144x1xbf16>
    %cst_31 = arith.constant dense<0.000000e+00> : vector<256x1xf32>
    %126 = tpu.matmul %124, %125, %cst_31 {dimension_numbers = #tpu.dot_dimension_numbers<[1], [0], [0], [1], [0, 0, 1, 1], [], []>} : vector<256x144xbf16>, vector<144x1xbf16>, vector<256x1xf32> -> vector<256x1xf32>
    %c0_32 = arith.constant 0 : index
    %c0_33 = arith.constant 0 : index
    %127 = vector.load %arg8[%c0_32, %c0_33] : memref<1x1xf32, #tpu.memory_space<vmem>>, vector<1x1xf32>
    %128 = vector.broadcast %127 : vector<1x1xf32> to vector<256x1xf32>
    %129 = arith.addf %126, %128 : vector<256x1xf32>
    %130 = tpu.concatenate %129, %99 in 1 : vector<256x1xf32>, vector<256x3xf32> -> vector<256x4xf32>
    %131 = vector.shape_cast %130 : vector<256x4xf32> to vector<16x16x4xf32>
    %c0_34 = arith.constant 0 : index
    %c0_35 = arith.constant 0 : index
    %c0_36 = arith.constant 0 : index
    %c0_37 = arith.constant 0 : index
    %132 = vector.load %arg9[%c0_34, %c0_35, %c0_36, %c0_37] : memref<1x16x16x4xf32, #tpu.memory_space<vmem>>, vector<1x16x16x4xf32>
    %133 = vector.shape_cast %132 : vector<1x16x16x4xf32> to vector<16x16x4xf32>
    %134 = vector.shape_cast %131 : vector<16x16x4xf32> to vector<1x16x16x4xf32>
    tpu.vector_store %arg9[%c0_34, %c0_35, %c0_36, %c0_37], %134 {strides = array<i32>} : memref<1x16x16x4xf32, #tpu.memory_space<vmem>>, vector<1x16x16x4xf32>,
    return
  }
  func.func @transform_0(%arg0: i32) -> (i32, i32, i32, i32) {
    %c0_i32 = arith.constant 0 : i32
    %c0_i32_0 = arith.constant 0 : i32
    %c0_i32_1 = arith.constant 0 : i32
    %c0_i32_2 = arith.constant 0 : i32
    return %arg0, %c0_i32, %c0_i32_0, %c0_i32_1 : i32, i32, i32, i32
  }
  func.func @transform_1(%arg0: i32) -> (i32, i32) {
    %c0_i32 = arith.constant 0 : i32
    %c0_i32_0 = arith.constant 0 : i32
    %c0_i32_1 = arith.constant 0 : i32
    return %c0_i32, %c0_i32_0 : i32, i32
  }
  func.func @transform_2(%arg0: i32) -> (i32, i32) {
    %c0_i32 = arith.constant 0 : i32
    %c0_i32_0 = arith.constant 0 : i32
    %c0_i32_1 = arith.constant 0 : i32
    return %c0_i32, %c0_i32_0 : i32, i32
  }
  func.func @transform_3(%arg0: i32) -> (i32, i32) {
    %c0_i32 = arith.constant 0 : i32
    %c0_i32_0 = arith.constant 0 : i32
    %c0_i32_1 = arith.constant 0 : i32
    return %c0_i32, %c0_i32_0 : i32, i32
  }
  func.func @transform_4(%arg0: i32) -> (i32, i32) {
    %c0_i32 = arith.constant 0 : i32
    %c0_i32_0 = arith.constant 0 : i32
    %c0_i32_1 = arith.constant 0 : i32
    return %c0_i32, %c0_i32_0 : i32, i32
  }
  func.func @transform_5(%arg0: i32) -> (i32, i32) {
    %c0_i32 = arith.constant 0 : i32
    %c0_i32_0 = arith.constant 0 : i32
    %c0_i32_1 = arith.constant 0 : i32
    return %c0_i32, %c0_i32_0 : i32, i32
  }
  func.func @transform_6(%arg0: i32) -> (i32, i32) {
    %c0_i32 = arith.constant 0 : i32
    %c0_i32_0 = arith.constant 0 : i32
    %c0_i32_1 = arith.constant 0 : i32
    return %c0_i32, %c0_i32_0 : i32, i32
  }
  func.func @transform_7(%arg0: i32) -> (i32, i32) {
    %c0_i32 = arith.constant 0 : i32
    %c0_i32_0 = arith.constant 0 : i32
    %c0_i32_1 = arith.constant 0 : i32
    return %c0_i32, %c0_i32_0 : i32, i32
  }
  func.func @transform_8(%arg0: i32) -> (i32, i32, i32, i32) {
    %c0_i32 = arith.constant 0 : i32
    %c0_i32_0 = arith.constant 0 : i32
    %c0_i32_1 = arith.constant 0 : i32
    %c0_i32_2 = arith.constant 0 : i32
    return %arg0, %c0_i32, %c0_i32_0, %c0_i32_1 : i32, i32, i32, i32
  }
}

</mosaic_0001>

<llo_original>
// kernel: caddn_forward.1
$region0: #{caddn_forward.1}
  #allocation0 [shape = 'u32[]', space=smem, size = 0x4, offset = 0x4, fixed_abs, tag = 'smem constant byte address 0x4 - core index']
  #allocation1 [shape = 'u32[144,128]{1,0:T(1,128)}', space=vmem, size = 0x12000, scoped, tag = 'internal scratch']
  #allocation2 [shape = 'f32[1,1]{1,0:T(1,128)S(1)}', space=vmem, size = 0x200, scoped, tag = 'scoped memory for caddn_forward.1']
  %s0 = inlined_call_operand.vmem [shape: f32[2,16,16,3], index: 0, kind: input, shape index: {}]
  %s1 = inlined_call_operand.vmem [shape: bf16[27,32], index: 1, kind: input, shape index: {}]
  %s2 = inlined_call_operand.vmem [shape: bf16[16,8], index: 2, kind: input, shape index: {}]
  %s3 = inlined_call_operand.vmem [shape: bf16[72,8], index: 3, kind: input, shape index: {}]
  %s4 = inlined_call_operand.vmem [shape: bf16[8,16], index: 4, kind: input, shape index: {}]
  %s5 = inlined_call_operand.vmem [shape: bf16[144,3], index: 5, kind: input, shape index: {}]
  %s6 = inlined_call_operand.vmem [shape: bf16[144,1], index: 6, kind: input, shape index: {}]
  %s7 = inlined_call_operand.<no memory space> [shape: f32[1,1], index: 7, kind: input, shape index: {}]
  %s8 = inlined_call_operand.vmem [shape: f32[2,16,16,4], index: 8, kind: output, shape index: {}]
  %s9 = sld [smem:[#allocation0]]
  $region65: #{caddn_forward.1} parent=0
    _
  %s11 = ssub.s32 1, %s9
  %s12 = scalar_select 0, %s11, %s9
  %v13 = vstv %s7
  %14 = vst [vmem:[#allocation2] sm:$0x1] %v13
  loop: start=0, step=1, limit=4
  $region2: #{caddn_forward.1} parent=0 // loop_pre_header
    _
  $region3: #{caddn_forward.1} parent=0 // loop_header
    %s16 = sphi 0, %s20
    %p17 = scmp.ge.s32.totalorder %s16, 4
    %s26 = sphi 0, %s28
    %s29 = sphi 0, %s26
    %s30 = sphi 0, %s29
    %s46 = sphi 0, %s30
    %s50 = sphi 0, %s50
    %s52 = sphi 0, %s50
    %s53 = sphi 0, %s52
    %s67 = sphi 0, %s53
    %s71 = sphi 0, %s71
    %s73 = sphi 0, %s71
    %s74 = sphi 0, %s73
    %s88 = sphi 0, %s74
    %s92 = sphi 0, %s92
    %s94 = sphi 0, %s92
    %s95 = sphi 0, %s94
    %s109 = sphi 0, %s95
    %s113 = sphi 0, %s113
    %s115 = sphi 0, %s113
    %s116 = sphi 0, %s115
    %s130 = sphi 0, %s116
    %s134 = sphi 0, %s134
    %s136 = sphi 0, %s134
    %s137 = sphi 0, %s136
    %s151 = sphi 0, %s137
    %s155 = sphi 0, %s155
    %s157 = sphi 0, %s155
    %s158 = sphi 0, %s157
    %s172 = sphi 0, %s158
    %s176 = sphi 0, %s176
    %s178 = sphi 0, %s176
    %s179 = sphi 0, %s178
    %s193 = sphi 0, %s179
    %s199 = sphi 0, %s201
    %s202 = sphi 0, %s199
    %s203 = sphi 0, %s202
    %s219 = sphi 0, %s203
  $region4: #{caddn_forward.1} parent=0 // loop_header_branch
    %19 = sbr.rel (%p17) target = $region8
  $region5: #{caddn_forward.1} parent=0 // loop_body
    %s21 = ssub.s32 %s16, 1
    %s22 = ssub.s32 %s16, 2
    %s23 = sadd.s32 %s16, 1
    %s24 = ssub.s32 %s16, %s23
    %p25 = scmp.eq.s32.totalorder %s24, 0
    %s27 = sadd.s32 %s26, 1
    %s28 = scalar_select %p25, %s26, %s27
    %p31 = pneg %p25
    %p32 = scmp.eq.s32.totalorder %s16, 1
    %p33 = por %p31, %p32
    %p34 = scmp.ne.s32.totalorder %s26, %s29
    %p35 = scmp.eq.s32.totalorder %s16, 0
    %p36 = por %p34, %p35
    %p37 = scmp.ne.s32.totalorder %s26, %s29
    %p38 = scmp.eq.s32.totalorder %s21, 1
    %p39 = por %p37, %p38
    %p40 = scmp.ne.s32.totalorder %s29, %s30
    %p41 = scmp.eq.s32.totalorder %s21, 0
    %p42 = por %p40, %p41
    %p43 = scmp.ne.s32.totalorder %s29, %s30
    %p44 = scmp.eq.s32.totalorder %s22, 1
    %p45 = por %p43, %p44
    %p47 = scmp.ne.s32.totalorder %s30, %s46
    %p48 = scmp.eq.s32.totalorder %s22, 0
    %p49 = por %p47, %p48
    %s51 = sadd.s32 %s50, 1
    %p54 = scmp.eq.s32.totalorder %s16, 1
    %p55 = scmp.ne.s32.totalorder %s50, %s52
    %p56 = scmp.eq.s32.totalorder %s16, 0
    %p57 = por %p55, %p56
    %p58 = scmp.ne.s32.totalorder %s50, %s52
    %p59 = scmp.eq.s32.totalorder %s21, 1
    %p60 = por %p58, %p59
    %p61 = scmp.ne.s32.totalorder %s52, %s53
    %p62 = scmp.eq.s32.totalorder %s21, 0
    %p63 = por %p61, %p62
    %p64 = scmp.ne.s32.totalorder %s52, %s53
    %p65 = scmp.eq.s32.totalorder %s22, 1
    %p66 = por %p64, %p65
    %p68 = scmp.ne.s32.totalorder %s53, %s67
    %p69 = scmp.eq.s32.totalorder %s22, 0
    %p70 = por %p68, %p69
    %s72 = sadd.s32 %s71, 1
    %p75 = scmp.eq.s32.totalorder %s16, 1
    %p76 = scmp.ne.s32.totalorder %s71, %s73
    %p77 = scmp.eq.s32.totalorder %s16, 0
    %p78 = por %p76, %p77
    %p79 = scmp.ne.s32.totalorder %s71, %s73
    %p80 = scmp.eq.s32.totalorder %s21, 1
    %p81 = por %p79, %p80
    %p82 = scmp.ne.s32.totalorder %s73, %s74
    %p83 = scmp.eq.s32.totalorder %s21, 0
    %p84 = por %p82, %p83
    %p85 = scmp.ne.s32.totalorder %s73, %s74
    %p86 = scmp.eq.s32.totalorder %s22, 1
    %p87 = por %p85, %p86
    %p89 = scmp.ne.s32.totalorder %s74, %s88
    %p90 = scmp.eq.s32.totalorder %s22, 0
    %p91 = por %p89, %p90
    %s93 = sadd.s32 %s92, 1
    %p96 = scmp.eq.s32.totalorder %s16, 1
    %p97 = scmp.ne.s32.totalorder %s92, %s94
    %p98 = scmp.eq.s32.totalorder %s16, 0
    %p99 = por %p97, %p98
    %p100 = scmp.ne.s32.totalorder %s92, %s94
    %p101 = scmp.eq.s32.totalorder %s21, 1
    %p102 = por %p100, %p101
    %p103 = scmp.ne.s32.totalorder %s94, %s95
    %p104 = scmp.eq.s32.totalorder %s21, 0
    %p105 = por %p103, %p104
    %p106 = scmp.ne.s32.totalorder %s94, %s95
    %p107 = scmp.eq.s32.totalorder %s22, 1
    %p108 = por %p106, %p107
    %p110 = scmp.ne.s32.totalorder %s95, %s109
    %p111 = scmp.eq.s32.totalorder %s22, 0
    %p112 = por %p110, %p111
    %s114 = sadd.s32 %s113, 1
    %p117 = scmp.eq.s32.totalorder %s16, 1
    %p118 = scmp.ne.s32.totalorder %s113, %s115
    %p119 = scmp.eq.s32.totalorder %s16, 0
    %p120 = por %p118, %p119
    %p121 = scmp.ne.s32.totalorder %s113, %s115
    %p122 = scmp.eq.s32.totalorder %s21, 1
    %p123 = por %p121, %p122
    %p124 = scmp.ne.s32.totalorder %s115, %s116
    %p125 = scmp.eq.s32.totalorder %s21, 0
    %p126 = por %p124, %p125
    %p127 = scmp.ne.s32.totalorder %s115, %s116
    %p128 = scmp.eq.s32.totalorder %s22, 1
    %p129 = por %p127, %p128
    %p131 = scmp.ne.s32.totalorder %s116, %s130
    %p132 = scmp.eq.s32.totalorder %s22, 0
    %p133 = por %p131, %p132
    %s135 = sadd.s32 %s134, 1
    %p138 = scmp.eq.s32.totalorder %s16, 1
    %p139 = scmp.ne.s32.totalorder %s134, %s136
    %p140 = scmp.eq.s32.totalorder %s16, 0
    %p141 = por %p139, %p140
    %p142 = scmp.ne.s32.totalorder %s134, %s136
    %p143 = scmp.eq.s32.totalorder %s21, 1
    %p144 = por %p142, %p143
    %p145 = scmp.ne.s32.totalorder %s136, %s137
    %p146 = scmp.eq.s32.totalorder %s21, 0
    %p147 = por %p145, %p146
    %p148 = scmp.ne.s32.totalorder %s136, %s137
    %p149 = scmp.eq.s32.totalorder %s22, 1
    %p150 = por %p148, %p149
    %p152 = scmp.ne.s32.totalorder %s137, %s151
    %p153 = scmp.eq.s32.totalorder %s22, 0
    %p154 = por %p152, %p153
    %s156 = sadd.s32 %s155, 1
    %p159 = scmp.eq.s32.totalorder %s16, 1
    %p160 = scmp.ne.s32.totalorder %s155, %s157
    %p161 = scmp.eq.s32.totalorder %s16, 0
    %p162 = por %p160, %p161
    %p163 = scmp.ne.s32.totalorder %s155, %s157
    %p164 = scmp.eq.s32.totalorder %s21, 1
    %p165 = por %p163, %p164
    %p166 = scmp.ne.s32.totalorder %s157, %s158
    %p167 = scmp.eq.s32.totalorder %s21, 0
    %p168 = por %p166, %p167
    %p169 = scmp.ne.s32.totalorder %s157, %s158
    %p170 = scmp.eq.s32.totalorder %s22, 1
    %p171 = por %p169, %p170
    %p173 = scmp.ne.s32.totalorder %s158, %s172
    %p174 = scmp.eq.s32.totalorder %s22, 0
    %p175 = por %p173, %p174
    %s177 = sadd.s32 %s176, 1
    %p180 = scmp.eq.s32.totalorder %s16, 1
    %p181 = scmp.ne.s32.totalorder %s176, %s178
    %p182 = scmp.eq.s32.totalorder %s16, 0
    %p183 = por %p181, %p182
    %p184 = scmp.ne.s32.totalorder %s176, %s178
    %p185 = scmp.eq.s32.totalorder %s21, 1
    %p186 = por %p184, %p185
    %p187 = scmp.ne.s32.totalorder %s178, %s179
    %p188 = scmp.eq.s32.totalorder %s21, 0
    %p189 = por %p187, %p188
    %p190 = scmp.ne.s32.totalorder %s178, %s179
    %p191 = scmp.eq.s32.totalorder %s22, 1
    %p192 = por %p190, %p191
    %p194 = scmp.ne.s32.totalorder %s179, %s193
    %p195 = scmp.eq.s32.totalorder %s22, 0
    %p196 = por %p194, %p195
    %s197 = ssub.s32 %s16, %s23
    %p198 = scmp.eq.s32.totalorder %s197, 0
    %s200 = sadd.s32 %s199, 1
    %s201 = scalar_select %p198, %s199, %s200
    %p204 = pneg %p198
    %p205 = scmp.eq.s32.totalorder %s16, 1
    %p206 = por %p204, %p205
    %p207 = scmp.ne.s32.totalorder %s199, %s202
    %p208 = scmp.eq.s32.totalorder %s16, 0
    %p209 = por %p207, %p208
    %p210 = scmp.ne.s32.totalorder %s199, %s202
    %p211 = scmp.eq.s32.totalorder %s21, 1
    %p212 = por %p210, %p211
    %p213 = scmp.ne.s32.totalorder %s202, %s203
    %p214 = scmp.eq.s32.totalorder %s21, 0
    %p215 = por %p213, %p214
    %p216 = scmp.ne.s32.totalorder %s202, %s203
    %p217 = scmp.eq.s32.totalorder %s22, 1
    %p218 = por %p216, %p217
    %p220 = scmp.ne.s32.totalorder %s203, %s219
    %p221 = scmp.eq.s32.totalorder %s22, 0
    %p222 = por %p220, %p221
    %p223 = scmp.le.s32.totalorder 1, %s16
    %p224 = scmp.lt.s32.totalorder %s16, 3
    %p225 = pnand %p223, %p224
    %p226 = pneg %p225
    // Predicated region
    $region9: #{caddn_forward.1} parent=5 // pred_check
      _
    $region10: #{caddn_forward.1} parent=5 // pred_check_branch
      %228 = sbr.rel (%p225) target = $region12
    $region11: #{caddn_forward.1} parent=5 // pred_region
      %s229 = ssub.s32 %s16, 1
      // Predicated region
      $region13: #{caddn_forward.1} parent=11 // pred_check
        %p230 = pneg %p63
      $region14: #{caddn_forward.1} parent=11 // pred_check_branch
        %232 = sbr.rel (%p230) target = $region16
      $region15: #{caddn_forward.1} parent=11 // pred_region
        _
      $region16: #{caddn_forward.1} parent=11 // pred_fallthru
        _
      // Predicated region
      $region17: #{caddn_forward.1} parent=11 // pred_check
        %p233 = pneg %p84
      $region18: #{caddn_forward.1} parent=11 // pred_check_branch
        %235 = sbr.rel (%p233) target = $region20
      $region19: #{caddn_forward.1} parent=11 // pred_region
        _
      $region20: #{caddn_forward.1} parent=11 // pred_fallthru
        _
      // Predicated region
      $region21: #{caddn_forward.1} parent=11 // pred_check
        %p236 = pneg %p105
      $region22: #{caddn_forward.1} parent=11 // pred_check_branch
        %238 = sbr.rel (%p236) target = $region24
      $region23: #{caddn_forward.1} parent=11 // pred_region
        _
      $region24: #{caddn_forward.1} parent=11 // pred_fallthru
        _
      // Predicated region
      $region25: #{caddn_forward.1} parent=11 // pred_check
        %p239 = pneg %p126
      $region26: #{caddn_forward.1} parent=11 // pred_check_branch
        %241 = sbr.rel (%p239) target = $region28
      $region27: #{caddn_forward.1} parent=11 // pred_region
        _
      $region28: #{caddn_forward.1} parent=11 // pred_fallthru
        _
      // Predicated region
      $region29: #{caddn_forward.1} parent=11 // pred_check
        %p242 = pneg %p147
      $region30: #{caddn_forward.1} parent=11 // pred_check_branch
        %244 = sbr.rel (%p242) target = $region32
      $region31: #{caddn_forward.1} parent=11 // pred_region
        _
      $region32: #{caddn_forward.1} parent=11 // pred_fallthru
        _
      // Predicated region
      $region33: #{caddn_forward.1} parent=11 // pred_check
        %p245 = pneg %p168
      $region34: #{caddn_forward.1} parent=11 // pred_check_branch
        %247 = sbr.rel (%p245) target = $region36
      $region35: #{caddn_forward.1} parent=11 // pred_region
        _
      $region36: #{caddn_forward.1} parent=11 // pred_fallthru
        _
      // Predicated region
      $region37: #{caddn_forward.1} parent=11 // pred_check
        %p248 = pneg %p189
      $region38: #{caddn_forward.1} parent=11 // pred_check_branch
        %250 = sbr.rel (%p248) target = $region40
      $region39: #{caddn_forward.1} parent=11 // pred_region
        _
      $region40: #{caddn_forward.1} parent=11 // pred_fallthru
        _
    $region12: #{caddn_forward.1} parent=5 // pred_fallthru
      _
    %p251 = scmp.lt.s32.totalorder %s16, 2
    // Predicated region
    $region41: #{caddn_forward.1} parent=5 // pred_check
      %p252 = pneg %p251
    $region42: #{caddn_forward.1} parent=5 // pred_check_branch
      %254 = sbr.rel (%p252) target = $region44
    $region43: #{caddn_forward.1} parent=5 // pred_region
      // Predicated region
      $region45: #{caddn_forward.1} parent=43 // pred_check
        %p255 = pneg %p36
      $region46: #{caddn_forward.1} parent=43 // pred_check_branch
        %257 = sbr.rel (%p255) target = $region48
      $region47: #{caddn_forward.1} parent=43 // pred_region
        %p258 = scmp.lt.s32.totalorder %s16, 1
        %s259 = scalar_select %p258, %s16, 1
        %s260 = smul.addr %s259, 32
        %s261 = smul.addr %s260, 8
        %s262 = scalar_lea.vmem %s0, %s261
      $region48: #{caddn_forward.1} parent=43 // pred_fallthru
        _
    $region44: #{caddn_forward.1} parent=5 // pred_fallthru
      _
    %p263 = scmp.le.s32.totalorder 1, %s16
    %p264 = scmp.lt.s32.totalorder %s16, 3
    %p265 = pnand %p263, %p264
    %p266 = pneg %p265
    // Predicated region
    $region49: #{caddn_forward.1} parent=5 // pred_check
      _
    $region50: #{caddn_forward.1} parent=5 // pred_check_branch
      %268 = sbr.rel (%p265) target = $region52
    $region51: #{caddn_forward.1} parent=5 // pred_region
      %s269 = ssub.s32 %s16, 1
      %p270 = scmp.lt.s32.totalorder %s21, 1
      %s271 = scalar_select %p270, %s21, 1
      %s272 = smul.addr %s271, 32
      %s273 = smul.addr %s272, 8
      %s274 = scalar_lea.vmem %s0, %s273
      %p275 = pneg %p42
      %p276 = pneg %p39
      %p277 = pneg %p63
      %p278 = pneg %p60
      %p279 = pneg %p84
      %p280 = pneg %p81
      %p281 = pneg %p105
      %p282 = pneg %p102
      %p283 = pneg %p126
      %p284 = pneg %p123
      %p285 = pneg %p147
      %p286 = pneg %p144
      %p287 = pneg %p168
      %p288 = pneg %p165
      %p289 = pneg %p189
      %p290 = pneg %p186
      %p291 = pneg %p215
      %p292 = pneg %p212
      %p293 = scmp.lt.s32.totalorder %s21, 1
      %s294 = scalar_select %p293, %s21, 1
      %s295 = smul.addr %s294, 32
      %s296 = smul.addr %s295, 8
      %s297 = scalar_lea.vmem %s8, %s296
      %p298 = scmp.lt.s32.totalorder %s21, 1
      %s299 = scalar_select %p298, %s21, 1
      %s300 = smul.addr %s299, 32
      %s301 = smul.addr %s300, 8
      %s302 = scalar_lea.vmem %s0, %s301
      %p303 = scmp.lt.s32.totalorder %s21, 1
      %s304 = scalar_select %p303, %s21, 1
      %s305 = smul.addr %s304, 32
      %s306 = smul.addr %s305, 8
      %s307 = scalar_lea.vmem %s8, %s306
      %v309 = vld [vmem:[%s302] sm:$0xff]
      %v310 = vld [vmem:[%s302 + $0x8] sm:$0xff]
      %v311 = vld [vmem:[%s302 + $0x10] sm:$0xff]
      %v312 = vld [vmem:[%s302 + $0x18] sm:$0xff]
      %v313 = vld [vmem:[%s302 + $0x20] sm:$0xff]
      %v314 = vld [vmem:[%s302 + $0x28] sm:$0xff]
      %v315 = vld [vmem:[%s302 + $0x30] sm:$0xff]
      %v316 = vld [vmem:[%s302 + $0x38] sm:$0xff]
      %v317 = vld [vmem:[%s302 + $0x40] sm:$0xff]
      %v318 = vld [vmem:[%s302 + $0x48] sm:$0xff]
      %v319 = vld [vmem:[%s302 + $0x50] sm:$0xff]
      %v320 = vld [vmem:[%s302 + $0x58] sm:$0xff]
      %v321 = vld [vmem:[%s302 + $0x60] sm:$0xff]
      %v322 = vld [vmem:[%s302 + $0x68] sm:$0xff]
      %v323 = vld [vmem:[%s302 + $0x70] sm:$0xff]
      %v324 = vld [vmem:[%s302 + $0x78] sm:$0xff]
      %v325 = vld [vmem:[%s302 + $0x80] sm:$0xff]
      %v326 = vld [vmem:[%s302 + $0x88] sm:$0xff]
      %v327 = vld [vmem:[%s302 + $0x90] sm:$0xff]
      %v328 = vld [vmem:[%s302 + $0x98] sm:$0xff]
      %v329 = vld [vmem:[%s302 + $0xa0] sm:$0xff]
      %v330 = vld [vmem:[%s302 + $0xa8] sm:$0xff]
      %v331 = vld [vmem:[%s302 + $0xb0] sm:$0xff]
      %v332 = vld [vmem:[%s302 + $0xb8] sm:$0xff]
      %v333 = vld [vmem:[%s302 + $0xc0] sm:$0xff]
      %v334 = vld [vmem:[%s302 + $0xc8] sm:$0xff]
      %v335 = vld [vmem:[%s302 + $0xd0] sm:$0xff]
      %v336 = vld [vmem:[%s302 + $0xd8] sm:$0xff]
      %v337 = vld [vmem:[%s302 + $0xe0] sm:$0xff]
      %v338 = vld [vmem:[%s302 + $0xe8] sm:$0xff]
      %v339 = vld [vmem:[%s302 + $0xf0] sm:$0xff]
      %v340 = vld [vmem:[%s302 + $0xf8] sm:$0xff]
      %vm374 = vcmask 1040384
      %v375 = vrot.slane 0.0, 7
      %v376 = vsel %vm374, %v375, %v375
      %v377 = vrot.slane %v309, 7
      %v378 = vrot.slane %v310, 7
      %v379 = vsel %vm374, %v377, %v378
      %v380 = vrot.slane %v311, 7
      %v381 = vrot.slane %v312, 7
      %v382 = vsel %vm374, %v380, %v381
      %v383 = vrot.slane %v313, 7
      %v384 = vrot.slane %v314, 7
      %v385 = vsel %vm374, %v383, %v384
      %v386 = vrot.slane %v315, 7
      %v387 = vrot.slane %v316, 7
      %v388 = vsel %vm374, %v386, %v387
      %v389 = vrot.slane %v317, 7
      %v390 = vrot.slane %v318, 7
      %v391 = vsel %vm374, %v389, %v390
      %v392 = vrot.slane %v319, 7
      %v393 = vrot.slane %v320, 7
      %v394 = vsel %vm374, %v392, %v393
      %v395 = vrot.slane %v321, 7
      %v396 = vrot.slane %v322, 7
      %v397 = vsel %vm374, %v395, %v396
      %v398 = vrot.slane %v323, 7
      %v399 = vrot.slane %v324, 7
      %v400 = vsel %vm374, %v398, %v399
      %v401 = vrot.slane %v325, 7
      %v402 = vrot.slane %v326, 7
      %v403 = vsel %vm374, %v401, %v402
      %v404 = vrot.slane %v327, 7
      %v405 = vrot.slane %v328, 7
      %v406 = vsel %vm374, %v404, %v405
      %v407 = vrot.slane %v329, 7
      %v408 = vrot.slane %v330, 7
      %v409 = vsel %vm374, %v407, %v408
      %v410 = vrot.slane %v331, 7
      %v411 = vrot.slane %v332, 7
      %v412 = vsel %vm374, %v410, %v411
      %v413 = vrot.slane %v333, 7
      %v414 = vrot.slane %v334, 7
      %v415 = vsel %vm374, %v413, %v414
      %v416 = vrot.slane %v335, 7
      %v417 = vrot.slane %v336, 7
      %v418 = vsel %vm374, %v416, %v417
      %v419 = vrot.slane %v337, 7
      %v420 = vrot.slane %v338, 7
      %v421 = vsel %vm374, %v419, %v420
      %v422 = vrot.slane %v339, 7
      %v423 = vrot.slane %v340, 7
      %v424 = vsel %vm374, %v422, %v423
      %v474 = vsel %vm374, 0.0, %v375
      %v475 = vsel %vm374, 0.0, %v377
      %v476 = vsel %vm374, 0.0, %v380
      %v477 = vsel %vm374, 0.0, %v383
      %v478 = vsel %vm374, 0.0, %v386
      %v479 = vsel %vm374, 0.0, %v389
      %v480 = vsel %vm374, 0.0, %v392
      %v481 = vsel %vm374, 0.0, %v395
      %v482 = vsel %vm374, 0.0, %v398
      %v483 = vsel %vm374, 0.0, %v401
      %v484 = vsel %vm374, 0.0, %v404
      %v485 = vsel %vm374, 0.0, %v407
      %v486 = vsel %vm374, 0.0, %v410
      %v487 = vsel %vm374, 0.0, %v413
      %v488 = vsel %vm374, 0.0, %v416
      %v489 = vsel %vm374, 0.0, %v419
      %v490 = vsel %vm374, 0.0, %v422
      %v491 = vsel %vm374, %v375, 0.0
      %v492 = vsel %vm374, %v378, 0.0
      %v493 = vsel %vm374, %v381, 0.0
      %v494 = vsel %vm374, %v384, 0.0
      %v495 = vsel %vm374, %v387, 0.0
      %v496 = vsel %vm374, %v390, 0.0
      %v497 = vsel %vm374, %v393, 0.0
      %v498 = vsel %vm374, %v396, 0.0
      %v499 = vsel %vm374, %v399, 0.0
      %v500 = vsel %vm374, %v402, 0.0
      %v501 = vsel %vm374, %v405, 0.0
      %v502 = vsel %vm374, %v408, 0.0
      %v503 = vsel %vm374, %v411, 0.0
      %v504 = vsel %vm374, %v414, 0.0
      %v505 = vsel %vm374, %v417, 0.0
      %v506 = vsel %vm374, %v420, 0.0
      %v507 = vsel %vm374, %v423, 0.0
      %vm540 = vcmask 1046528
      %v541 = vrot.slane %v474, 1
      %v542 = vrot.slane %v376, 1
      %v543 = vsel %vm540, %v541, %v542
      %v544 = vrot.slane %v491, 1
      %v545 = vsel %vm540, %v542, %v544
      %v546 = vrot.slane %v475, 1
      %v547 = vrot.slane %v379, 1
      %v548 = vsel %vm540, %v546, %v547
      %v549 = vrot.slane %v492, 1
      %v550 = vsel %vm540, %v547, %v549
      %v551 = vrot.slane %v476, 1
      %v552 = vrot.slane %v382, 1
      %v553 = vsel %vm540, %v551, %v552
      %v554 = vrot.slane %v493, 1
      %v555 = vsel %vm540, %v552, %v554
      %v556 = vrot.slane %v477, 1
      %v557 = vrot.slane %v385, 1
      %v558 = vsel %vm540, %v556, %v557
      %v559 = vrot.slane %v494, 1
      %v560 = vsel %vm540, %v557, %v559
      %v561 = vrot.slane %v478, 1
      %v562 = vrot.slane %v388, 1
      %v563 = vsel %vm540, %v561, %v562
      %v564 = vrot.slane %v495, 1
      %v565 = vsel %vm540, %v562, %v564
      %v566 = vrot.slane %v479, 1
      %v567 = vrot.slane %v391, 1
      %v568 = vsel %vm540, %v566, %v567
      %v569 = vrot.slane %v496, 1
      %v570 = vsel %vm540, %v567, %v569
      %v571 = vrot.slane %v480, 1
      %v572 = vrot.slane %v394, 1
      %v573 = vsel %vm540, %v571, %v572
      %v574 = vrot.slane %v497, 1
      %v575 = vsel %vm540, %v572, %v574
      %v576 = vrot.slane %v481, 1
      %v577 = vrot.slane %v397, 1
      %v578 = vsel %vm540, %v576, %v577
      %v579 = vrot.slane %v498, 1
      %v580 = vsel %vm540, %v577, %v579
      %v581 = vrot.slane %v482, 1
      %v582 = vrot.slane %v400, 1
      %v583 = vsel %vm540, %v581, %v582
      %v584 = vrot.slane %v499, 1
      %v585 = vsel %vm540, %v582, %v584
      %v586 = vrot.slane %v483, 1
      %v587 = vrot.slane %v403, 1
      %v588 = vsel %vm540, %v586, %v587
      %v589 = vrot.slane %v500, 1
      %v590 = vsel %vm540, %v587, %v589
      %v591 = vrot.slane %v484, 1
      %v592 = vrot.slane %v406, 1
      %v593 = vsel %vm540, %v591, %v592
      %v594 = vrot.slane %v501, 1
      %v595 = vsel %vm540, %v592, %v594
      %v596 = vrot.slane %v485, 1
      %v597 = vrot.slane %v409, 1
      %v598 = vsel %vm540, %v596, %v597
      %v599 = vrot.slane %v502, 1
      %v600 = vsel %vm540, %v597, %v599
      %v601 = vrot.slane %v486, 1
      %v602 = vrot.slane %v412, 1
      %v603 = vsel %vm540, %v601, %v602
      %v604 = vrot.slane %v503, 1
      %v605 = vsel %vm540, %v602, %v604
      %v606 = vrot.slane %v487, 1
      %v607 = vrot.slane %v415, 1
      %v608 = vsel %vm540, %v606, %v607
      %v609 = vrot.slane %v504, 1
      %v610 = vsel %vm540, %v607, %v609
      %v611 = vrot.slane %v488, 1
      %v612 = vrot.slane %v418, 1
      %v613 = vsel %vm540, %v611, %v612
      %v614 = vrot.slane %v505, 1
      %v615 = vsel %vm540, %v612, %v614
      %v616 = vrot.slane %v489, 1
      %v617 = vrot.slane %v421, 1
      %v618 = vsel %vm540, %v616, %v617
      %v619 = vrot.slane %v506, 1
      %v620 = vsel %vm540, %v617, %v619
      %vm621 = vcmask 1045504
      %v622 = vrot.slane %v474, 2
      %v623 = vrot.slane %v376, 2
      %v624 = vsel %vm621, %v622, %v623
      %v625 = vrot.slane %v491, 2
      %v626 = vsel %vm621, %v623, %v625
      %v627 = vrot.slane %v475, 2
      %v628 = vrot.slane %v379, 2
      %v629 = vsel %vm621, %v627, %v628
      %v630 = vrot.slane %v492, 2
      %v631 = vsel %vm621, %v628, %v630
      %v632 = vrot.slane %v476, 2
      %v633 = vrot.slane %v382, 2
      %v634 = vsel %vm621, %v632, %v633
      %v635 = vrot.slane %v493, 2
      %v636 = vsel %vm621, %v633, %v635
      %v637 = vrot.slane %v477, 2
      %v638 = vrot.slane %v385, 2
      %v639 = vsel %vm621, %v637, %v638
      %v640 = vrot.slane %v494, 2
      %v641 = vsel %vm621, %v638, %v640
      %v642 = vrot.slane %v478, 2
      %v643 = vrot.slane %v388, 2
      %v644 = vsel %vm621, %v642, %v643
      %v645 = vrot.slane %v495, 2
      %v646 = vsel %vm621, %v643, %v645
      %v647 = vrot.slane %v479, 2
      %v648 = vrot.slane %v391, 2
      %v649 = vsel %vm621, %v647, %v648
      %v650 = vrot.slane %v496, 2
      %v651 = vsel %vm621, %v648, %v650
      %v652 = vrot.slane %v480, 2
      %v653 = vrot.slane %v394, 2
      %v654 = vsel %vm621, %v652, %v653
      %v655 = vrot.slane %v497, 2
      %v656 = vsel %vm621, %v653, %v655
      %v657 = vrot.slane %v481, 2
      %v658 = vrot.slane %v397, 2
      %v659 = vsel %vm621, %v657, %v658
      %v660 = vrot.slane %v498, 2
      %v661 = vsel %vm621, %v658, %v660
      %v662 = vrot.slane %v482, 2
      %v663 = vrot.slane %v400, 2
      %v664 = vsel %vm621, %v662, %v663
      %v665 = vrot.slane %v499, 2
      %v666 = vsel %vm621, %v663, %v665
      %v667 = vrot.slane %v483, 2
      %v668 = vrot.slane %v403, 2
      %v669 = vsel %vm621, %v667, %v668
      %v670 = vrot.slane %v500, 2
      %v671 = vsel %vm621, %v668, %v670
      %v672 = vrot.slane %v484, 2
      %v673 = vrot.slane %v406, 2
      %v674 = vsel %vm621, %v672, %v673
      %v675 = vrot.slane %v501, 2
      %v676 = vsel %vm621, %v673, %v675
      %v677 = vrot.slane %v485, 2
      %v678 = vrot.slane %v409, 2
      %v679 = vsel %vm621, %v677, %v678
      %v680 = vrot.slane %v502, 2
      %v681 = vsel %vm621, %v678, %v680
      %v682 = vrot.slane %v486, 2
      %v683 = vrot.slane %v412, 2
      %v684 = vsel %vm621, %v682, %v683
      %v685 = vrot.slane %v503, 2
      %v686 = vsel %vm621, %v683, %v685
      %v687 = vrot.slane %v487, 2
      %v688 = vrot.slane %v415, 2
      %v689 = vsel %vm621, %v687, %v688
      %v690 = vrot.slane %v504, 2
      %v691 = vsel %vm621, %v688, %v690
      %v692 = vrot.slane %v488, 2
      %v693 = vrot.slane %v418, 2
      %v694 = vsel %vm621, %v692, %v693
      %v695 = vrot.slane %v505, 2
      %v696 = vsel %vm621, %v693, %v695
      %v697 = vrot.slane %v489, 2
      %v698 = vrot.slane %v421, 2
      %v699 = vsel %vm621, %v697, %v698
      %v700 = vrot.slane %v506, 2
      %v701 = vsel %vm621, %v698, %v700
      %v704 = vrot.slane %v490, 1
      %v705 = vrot.slane %v424, 1
      %v706 = vsel %vm540, %v704, %v705
      %v707 = vrot.slane %v507, 1
      %v708 = vsel %vm540, %v705, %v707
      %v709 = vrot.slane %v490, 2
      %v710 = vrot.slane %v424, 2
      %v711 = vsel %vm621, %v709, %v710
      %v712 = vrot.slane %v507, 2
      %v713 = vsel %vm621, %v710, %v712
      %714 = vrot.lane.b32.xlu0 %v543, 3
      %v715 = vpop.permute.xlu0 %714
      %716 = vrot.lane.b32.xlu0 %v545, 3
      %v717 = vpop.permute.xlu0 %716
      %718 = vrot.lane.b32.xlu0 %v548, 3
      %v719 = vpop.permute.xlu0 %718
      %720 = vrot.lane.b32.xlu0 %v550, 3
      %v721 = vpop.permute.xlu0 %720
      %722 = vrot.lane.b32.xlu0 %v553, 3
      %v723 = vpop.permute.xlu0 %722
      %724 = vrot.lane.b32.xlu0 %v555, 3
      %v725 = vpop.permute.xlu0 %724
      %726 = vrot.lane.b32.xlu0 %v558, 3
      %v727 = vpop.permute.xlu0 %726
      %728 = vrot.lane.b32.xlu0 %v560, 3
      %v729 = vpop.permute.xlu0 %728
      %730 = vrot.lane.b32.xlu0 %v563, 3
      %v731 = vpop.permute.xlu0 %730
      %732 = vrot.lane.b32.xlu0 %v565, 3
      %v733 = vpop.permute.xlu0 %732
      %734 = vrot.lane.b32.xlu0 %v568, 3
      %v735 = vpop.permute.xlu0 %734
      %736 = vrot.lane.b32.xlu0 %v570, 3
      %v737 = vpop.permute.xlu0 %736
      %738 = vrot.lane.b32.xlu0 %v573, 3
      %v739 = vpop.permute.xlu0 %738
      %740 = vrot.lane.b32.xlu0 %v575, 3
      %v741 = vpop.permute.xlu0 %740
      %742 = vrot.lane.b32.xlu0 %v578, 3
      %v743 = vpop.permute.xlu0 %742
      %744 = vrot.lane.b32.xlu0 %v580, 3
      %v745 = vpop.permute.xlu0 %744
      %746 = vrot.lane.b32.xlu0 %v583, 3
      %v747 = vpop.permute.xlu0 %746
      %748 = vrot.lane.b32.xlu0 %v585, 3
      %v749 = vpop.permute.xlu0 %748
      %750 = vrot.lane.b32.xlu0 %v588, 3
      %v751 = vpop.permute.xlu0 %750
      %752 = vrot.lane.b32.xlu0 %v590, 3
      %v753 = vpop.permute.xlu0 %752
      %754 = vrot.lane.b32.xlu0 %v593, 3
      %v755 = vpop.permute.xlu0 %754
      %756 = vrot.lane.b32.xlu0 %v595, 3
      %v757 = vpop.permute.xlu0 %756
      %758 = vrot.lane.b32.xlu0 %v598, 3
      %v759 = vpop.permute.xlu0 %758
      %760 = vrot.lane.b32.xlu0 %v600, 3
      %v761 = vpop.permute.xlu0 %760
      %762 = vrot.lane.b32.xlu0 %v603, 3
      %v763 = vpop.permute.xlu0 %762
      %764 = vrot.lane.b32.xlu0 %v605, 3
      %v765 = vpop.permute.xlu0 %764
      %766 = vrot.lane.b32.xlu0 %v608, 3
      %v767 = vpop.permute.xlu0 %766
      %768 = vrot.lane.b32.xlu0 %v610, 3
      %v769 = vpop.permute.xlu0 %768
      %770 = vrot.lane.b32.xlu0 %v613, 3
      %v771 = vpop.permute.xlu0 %770
      %772 = vrot.lane.b32.xlu0 %v615, 3
      %v773 = vpop.permute.xlu0 %772
      %774 = vrot.lane.b32.xlu0 %v618, 3
      %v775 = vpop.permute.xlu0 %774
      %776 = vrot.lane.b32.xlu0 %v620, 3
      %v777 = vpop.permute.xlu0 %776
      %810 = vrot.lane.b32.xlu0 %v624, 6
      %v811 = vpop.permute.xlu0 %810
      %812 = vrot.lane.b32.xlu0 %v626, 6
      %v813 = vpop.permute.xlu0 %812
      %814 = vrot.lane.b32.xlu0 %v629, 6
      %v815 = vpop.permute.xlu0 %814
      %816 = vrot.lane.b32.xlu0 %v631, 6
      %v817 = vpop.permute.xlu0 %816
      %818 = vrot.lane.b32.xlu0 %v634, 6
      %v819 = vpop.permute.xlu0 %818
      %820 = vrot.lane.b32.xlu0 %v636, 6
      %v821 = vpop.permute.xlu0 %820
      %822 = vrot.lane.b32.xlu0 %v639, 6
      %v823 = vpop.permute.xlu0 %822
      %824 = vrot.lane.b32.xlu0 %v641, 6
      %v825 = vpop.permute.xlu0 %824
      %826 = vrot.lane.b32.xlu0 %v644, 6
      %v827 = vpop.permute.xlu0 %826
      %828 = vrot.lane.b32.xlu0 %v646, 6
      %v829 = vpop.permute.xlu0 %828
      %830 = vrot.lane.b32.xlu0 %v649, 6
      %v831 = vpop.permute.xlu0 %830
      %832 = vrot.lane.b32.xlu0 %v651, 6
      %v833 = vpop.permute.xlu0 %832
      %834 = vrot.lane.b32.xlu0 %v654, 6
      %v835 = vpop.permute.xlu0 %834
      %836 = vrot.lane.b32.xlu0 %v656, 6
      %v837 = vpop.permute.xlu0 %836
      %838 = vrot.lane.b32.xlu0 %v659, 6
      %v839 = vpop.permute.xlu0 %838
      %840 = vrot.lane.b32.xlu0 %v661, 6
      %v841 = vpop.permute.xlu0 %840
      %842 = vrot.lane.b32.xlu0 %v664, 6
      %v843 = vpop.permute.xlu0 %842
      %844 = vrot.lane.b32.xlu0 %v666, 6
      %v845 = vpop.permute.xlu0 %844
      %846 = vrot.lane.b32.xlu0 %v669, 6
      %v847 = vpop.permute.xlu0 %846
      %848 = vrot.lane.b32.xlu0 %v671, 6
      %v849 = vpop.permute.xlu0 %848
      %850 = vrot.lane.b32.xlu0 %v674, 6
      %v851 = vpop.permute.xlu0 %850
      %852 = vrot.lane.b32.xlu0 %v676, 6
      %v853 = vpop.permute.xlu0 %852
      %854 = vrot.lane.b32.xlu0 %v679, 6
      %v855 = vpop.permute.xlu0 %854
      %856 = vrot.lane.b32.xlu0 %v681, 6
      %v857 = vpop.permute.xlu0 %856
      %858 = vrot.lane.b32.xlu0 %v684, 6
      %v859 = vpop.permute.xlu0 %858
      %860 = vrot.lane.b32.xlu0 %v686, 6
      %v861 = vpop.permute.xlu0 %860
      %862 = vrot.lane.b32.xlu0 %v689, 6
      %v863 = vpop.permute.xlu0 %862
      %864 = vrot.lane.b32.xlu0 %v691, 6
      %v865 = vpop.permute.xlu0 %864
      %866 = vrot.lane.b32.xlu0 %v694, 6
      %v867 = vpop.permute.xlu0 %866
      %868 = vrot.lane.b32.xlu0 %v696, 6
      %v869 = vpop.permute.xlu0 %868
      %870 = vrot.lane.b32.xlu0 %v699, 6
      %v871 = vpop.permute.xlu0 %870
      %872 = vrot.lane.b32.xlu0 %v701, 6
      %v873 = vpop.permute.xlu0 %872
      %906 = vrot.lane.b32.xlu0 %v475, 9
      %v907 = vpop.permute.xlu0 %906
      %908 = vrot.lane.b32.xlu0 %v379, 9
      %v909 = vpop.permute.xlu0 %908
      %910 = vrot.lane.b32.xlu0 %v476, 9
      %v911 = vpop.permute.xlu0 %910
      %912 = vrot.lane.b32.xlu0 %v382, 9
      %v913 = vpop.permute.xlu0 %912
      %914 = vrot.lane.b32.xlu0 %v477, 9
      %v915 = vpop.permute.xlu0 %914
      %916 = vrot.lane.b32.xlu0 %v385, 9
      %v917 = vpop.permute.xlu0 %916
      %918 = vrot.lane.b32.xlu0 %v478, 9
      %v919 = vpop.permute.xlu0 %918
      %920 = vrot.lane.b32.xlu0 %v388, 9
      %v921 = vpop.permute.xlu0 %920
      %922 = vrot.lane.b32.xlu0 %v479, 9
      %v923 = vpop.permute.xlu0 %922
      %924 = vrot.lane.b32.xlu0 %v391, 9
      %v925 = vpop.permute.xlu0 %924
      %926 = vrot.lane.b32.xlu0 %v480, 9
      %v927 = vpop.permute.xlu0 %926
      %928 = vrot.lane.b32.xlu0 %v394, 9
      %v929 = vpop.permute.xlu0 %928
      %930 = vrot.lane.b32.xlu0 %v481, 9
      %v931 = vpop.permute.xlu0 %930
      %932 = vrot.lane.b32.xlu0 %v397, 9
      %v933 = vpop.permute.xlu0 %932
      %934 = vrot.lane.b32.xlu0 %v482, 9
      %v935 = vpop.permute.xlu0 %934
      %936 = vrot.lane.b32.xlu0 %v400, 9
      %v937 = vpop.permute.xlu0 %936
      %938 = vrot.lane.b32.xlu0 %v483, 9
      %v939 = vpop.permute.xlu0 %938
      %940 = vrot.lane.b32.xlu0 %v403, 9
      %v941 = vpop.permute.xlu0 %940
      %942 = vrot.lane.b32.xlu0 %v484, 9
      %v943 = vpop.permute.xlu0 %942
      %944 = vrot.lane.b32.xlu0 %v406, 9
      %v945 = vpop.permute.xlu0 %944
      %946 = vrot.lane.b32.xlu0 %v485, 9
      %v947 = vpop.permute.xlu0 %946
      %948 = vrot.lane.b32.xlu0 %v409, 9
      %v949 = vpop.permute.xlu0 %948
      %950 = vrot.lane.b32.xlu0 %v486, 9
      %v951 = vpop.permute.xlu0 %950
      %952 = vrot.lane.b32.xlu0 %v412, 9
      %v953 = vpop.permute.xlu0 %952
      %954 = vrot.lane.b32.xlu0 %v487, 9
      %v955 = vpop.permute.xlu0 %954
      %956 = vrot.lane.b32.xlu0 %v415, 9
      %v957 = vpop.permute.xlu0 %956
      %958 = vrot.lane.b32.xlu0 %v488, 9
      %v959 = vpop.permute.xlu0 %958
      %960 = vrot.lane.b32.xlu0 %v418, 9
      %v961 = vpop.permute.xlu0 %960
      %962 = vrot.lane.b32.xlu0 %v489, 9
      %v963 = vpop.permute.xlu0 %962
      %964 = vrot.lane.b32.xlu0 %v421, 9
      %v965 = vpop.permute.xlu0 %964
      %966 = vrot.lane.b32.xlu0 %v490, 9
      %v967 = vpop.permute.xlu0 %966
      %968 = vrot.lane.b32.xlu0 %v424, 9
      %v969 = vpop.permute.xlu0 %968
      %1002 = vrot.lane.b32.xlu0 %v548, 12
      %v1003 = vpop.permute.xlu0 %1002
      %1004 = vrot.lane.b32.xlu0 %v550, 12
      %v1005 = vpop.permute.xlu0 %1004
      %1006 = vrot.lane.b32.xlu0 %v553, 12
      %v1007 = vpop.permute.xlu0 %1006
      %1008 = vrot.lane.b32.xlu0 %v555, 12
      %v1009 = vpop.permute.xlu0 %1008
      %1010 = vrot.lane.b32.xlu0 %v558, 12
      %v1011 = vpop.permute.xlu0 %1010
      %1012 = vrot.lane.b32.xlu0 %v560, 12
      %v1013 = vpop.permute.xlu0 %1012
      %1014 = vrot.lane.b32.xlu0 %v563, 12
      %v1015 = vpop.permute.xlu0 %1014
      %1016 = vrot.lane.b32.xlu0 %v565, 12
      %v1017 = vpop.permute.xlu0 %1016
      %1018 = vrot.lane.b32.xlu0 %v568, 12
      %v1019 = vpop.permute.xlu0 %1018
      %1020 = vrot.lane.b32.xlu0 %v570, 12
      %v1021 = vpop.permute.xlu0 %1020
      %1022 = vrot.lane.b32.xlu0 %v573, 12
      %v1023 = vpop.permute.xlu0 %1022
      %1024 = vrot.lane.b32.xlu0 %v575, 12
      %v1025 = vpop.permute.xlu0 %1024
      %1026 = vrot.lane.b32.xlu0 %v578, 12
      %v1027 = vpop.permute.xlu0 %1026
      %1028 = vrot.lane.b32.xlu0 %v580, 12
      %v1029 = vpop.permute.xlu0 %1028
      %1030 = vrot.lane.b32.xlu0 %v583, 12
      %v1031 = vpop.permute.xlu0 %1030
      %1032 = vrot.lane.b32.xlu0 %v585, 12
      %v1033 = vpop.permute.xlu0 %1032
      %1034 = vrot.lane.b32.xlu0 %v588, 12
      %v1035 = vpop.permute.xlu0 %1034
      %1036 = vrot.lane.b32.xlu0 %v590, 12
      %v1037 = vpop.permute.xlu0 %1036
      %1038 = vrot.lane.b32.xlu0 %v593, 12
      %v1039 = vpop.permute.xlu0 %1038
      %1040 = vrot.lane.b32.xlu0 %v595, 12
      %v1041 = vpop.permute.xlu0 %1040
      %1042 = vrot.lane.b32.xlu0 %v598, 12
      %v1043 = vpop.permute.xlu0 %1042
      %1044 = vrot.lane.b32.xlu0 %v600, 12
      %v1045 = vpop.permute.xlu0 %1044
      %1046 = vrot.lane.b32.xlu0 %v603, 12
      %v1047 = vpop.permute.xlu0 %1046
      %1048 = vrot.lane.b32.xlu0 %v605, 12
      %v1049 = vpop.permute.xlu0 %1048
      %1050 = vrot.lane.b32.xlu0 %v608, 12
      %v1051 = vpop.permute.xlu0 %1050
      %1052 = vrot.lane.b32.xlu0 %v610, 12
      %v1053 = vpop.permute.xlu0 %1052
      %1054 = vrot.lane.b32.xlu0 %v613, 12
      %v1055 = vpop.permute.xlu0 %1054
      %1056 = vrot.lane.b32.xlu0 %v615, 12
      %v1057 = vpop.permute.xlu0 %1056
      %1058 = vrot.lane.b32.xlu0 %v618, 12
      %v1059 = vpop.permute.xlu0 %1058
      %1060 = vrot.lane.b32.xlu0 %v620, 12
      %v1061 = vpop.permute.xlu0 %1060
      %1062 = vrot.lane.b32.xlu0 %v706, 12
      %v1063 = vpop.permute.xlu0 %1062
      %1064 = vrot.lane.b32.xlu0 %v708, 12
      %v1065 = vpop.permute.xlu0 %1064
      %1098 = vrot.lane.b32.xlu0 %v629, 15
      %v1099 = vpop.permute.xlu0 %1098
      %1100 = vrot.lane.b32.xlu0 %v631, 15
      %v1101 = vpop.permute.xlu0 %1100
      %1102 = vrot.lane.b32.xlu0 %v634, 15
      %v1103 = vpop.permute.xlu0 %1102
      %1104 = vrot.lane.b32.xlu0 %v636, 15
      %v1105 = vpop.permute.xlu0 %1104
      %1106 = vrot.lane.b32.xlu0 %v639, 15
      %v1107 = vpop.permute.xlu0 %1106
      %1108 = vrot.lane.b32.xlu0 %v641, 15
      %v1109 = vpop.permute.xlu0 %1108
      %1110 = vrot.lane.b32.xlu0 %v644, 15
      %v1111 = vpop.permute.xlu0 %1110
      %1112 = vrot.lane.b32.xlu0 %v646, 15
      %v1113 = vpop.permute.xlu0 %1112
      %1114 = vrot.lane.b32.xlu0 %v649, 15
      %v1115 = vpop.permute.xlu0 %1114
      %1116 = vrot.lane.b32.xlu0 %v651, 15
      %v1117 = vpop.permute.xlu0 %1116
      %1118 = vrot.lane.b32.xlu0 %v654, 15
      %v1119 = vpop.permute.xlu0 %1118
      %1120 = vrot.lane.b32.xlu0 %v656, 15
      %v1121 = vpop.permute.xlu0 %1120
      %1122 = vrot.lane.b32.xlu0 %v659, 15
      %v1123 = vpop.permute.xlu0 %1122
      %1124 = vrot.lane.b32.xlu0 %v661, 15
      %v1125 = vpop.permute.xlu0 %1124
      %1126 = vrot.lane.b32.xlu0 %v664, 15
      %v1127 = vpop.permute.xlu0 %1126
      %1128 = vrot.lane.b32.xlu0 %v666, 15
      %v1129 = vpop.permute.xlu0 %1128
      %1130 = vrot.lane.b32.xlu0 %v669, 15
      %v1131 = vpop.permute.xlu0 %1130
      %1132 = vrot.lane.b32.xlu0 %v671, 15
      %v1133 = vpop.permute.xlu0 %1132
      %1134 = vrot.lane.b32.xlu0 %v674, 15
      %v1135 = vpop.permute.xlu0 %1134
      %1136 = vrot.lane.b32.xlu0 %v676, 15
      %v1137 = vpop.permute.xlu0 %1136
      %1138 = vrot.lane.b32.xlu0 %v679, 15
      %v1139 = vpop.permute.xlu0 %1138
      %1140 = vrot.lane.b32.xlu0 %v681, 15
      %v1141 = vpop.permute.xlu0 %1140
      %1142 = vrot.lane.b32.xlu0 %v684, 15
      %v1143 = vpop.permute.xlu0 %1142
      %1144 = vrot.lane.b32.xlu0 %v686, 15
      %v1145 = vpop.permute.xlu0 %1144
      %1146 = vrot.lane.b32.xlu0 %v689, 15
      %v1147 = vpop.permute.xlu0 %1146
      %1148 = vrot.lane.b32.xlu0 %v691, 15
      %v1149 = vpop.permute.xlu0 %1148
      %1150 = vrot.lane.b32.xlu0 %v694, 15
      %v1151 = vpop.permute.xlu0 %1150
      %1152 = vrot.lane.b32.xlu0 %v696, 15
      %v1153 = vpop.permute.xlu0 %1152
      %1154 = vrot.lane.b32.xlu0 %v699, 15
      %v1155 = vpop.permute.xlu0 %1154
      %1156 = vrot.lane.b32.xlu0 %v701, 15
      %v1157 = vpop.permute.xlu0 %1156
      %1158 = vrot.lane.b32.xlu0 %v711, 15
      %v1159 = vpop.permute.xlu0 %1158
      %1160 = vrot.lane.b32.xlu0 %v713, 15
      %v1161 = vpop.permute.xlu0 %1160
      %1194 = vrot.lane.b32.xlu0 %v476, 18
      %v1195 = vpop.permute.xlu0 %1194
      %1196 = vrot.lane.b32.xlu0 %v382, 18
      %v1197 = vpop.permute.xlu0 %1196
      %1198 = vrot.lane.b32.xlu0 %v477, 18
      %v1199 = vpop.permute.xlu0 %1198
      %1200 = vrot.lane.b32.xlu0 %v385, 18
      %v1201 = vpop.permute.xlu0 %1200
      %1202 = vrot.lane.b32.xlu0 %v478, 18
      %v1203 = vpop.permute.xlu0 %1202
      %1204 = vrot.lane.b32.xlu0 %v388, 18
      %v1205 = vpop.permute.xlu0 %1204
      %1206 = vrot.lane.b32.xlu0 %v479, 18
      %v1207 = vpop.permute.xlu0 %1206
      %1208 = vrot.lane.b32.xlu0 %v391, 18
      %v1209 = vpop.permute.xlu0 %1208
      %1210 = vrot.lane.b32.xlu0 %v480, 18
      %v1211 = vpop.permute.xlu0 %1210
      %1212 = vrot.lane.b32.xlu0 %v394, 18
      %v1213 = vpop.permute.xlu0 %1212
      %1214 = vrot.lane.b32.xlu0 %v481, 18
      %v1215 = vpop.permute.xlu0 %1214
      %1216 = vrot.lane.b32.xlu0 %v397, 18
      %v1217 = vpop.permute.xlu0 %1216
      %1218 = vrot.lane.b32.xlu0 %v482, 18
      %v1219 = vpop.permute.xlu0 %1218
      %1220 = vrot.lane.b32.xlu0 %v400, 18
      %v1221 = vpop.permute.xlu0 %1220
      %1222 = vrot.lane.b32.xlu0 %v483, 18
      %v1223 = vpop.permute.xlu0 %1222
      %1224 = vrot.lane.b32.xlu0 %v403, 18
      %v1225 = vpop.permute.xlu0 %1224
      %1226 = vrot.lane.b32.xlu0 %v484, 18
      %v1227 = vpop.permute.xlu0 %1226
      %1228 = vrot.lane.b32.xlu0 %v406, 18
      %v1229 = vpop.permute.xlu0 %1228
      %1230 = vrot.lane.b32.xlu0 %v485, 18
      %v1231 = vpop.permute.xlu0 %1230
      %1232 = vrot.lane.b32.xlu0 %v409, 18
      %v1233 = vpop.permute.xlu0 %1232
      %1234 = vrot.lane.b32.xlu0 %v486, 18
      %v1235 = vpop.permute.xlu0 %1234
      %1236 = vrot.lane.b32.xlu0 %v412, 18
      %v1237 = vpop.permute.xlu0 %1236
      %1238 = vrot.lane.b32.xlu0 %v487, 18
      %v1239 = vpop.permute.xlu0 %1238
      %1240 = vrot.lane.b32.xlu0 %v415, 18
      %v1241 = vpop.permute.xlu0 %1240
      %1242 = vrot.lane.b32.xlu0 %v488, 18
      %v1243 = vpop.permute.xlu0 %1242
      %1244 = vrot.lane.b32.xlu0 %v418, 18
      %v1245 = vpop.permute.xlu0 %1244
      %1246 = vrot.lane.b32.xlu0 %v489, 18
      %v1247 = vpop.permute.xlu0 %1246
      %1248 = vrot.lane.b32.xlu0 %v421, 18
      %v1249 = vpop.permute.xlu0 %1248
      %1250 = vrot.lane.b32.xlu0 %v490, 18
      %v1251 = vpop.permute.xlu0 %1250
      %1252 = vrot.lane.b32.xlu0 %v424, 18
      %v1253 = vpop.permute.xlu0 %1252
      %1254 = vrot.lane.b32.xlu0 %v474, 18
      %v1255 = vpop.permute.xlu0 %1254
      %1256 = vrot.lane.b32.xlu0 %v376, 18
      %v1257 = vpop.permute.xlu0 %1256
      %1290 = vrot.lane.b32.xlu0 %v553, 21
      %v1291 = vpop.permute.xlu0 %1290
      %1292 = vrot.lane.b32.xlu0 %v555, 21
      %v1293 = vpop.permute.xlu0 %1292
      %1294 = vrot.lane.b32.xlu0 %v558, 21
      %v1295 = vpop.permute.xlu0 %1294
      %1296 = vrot.lane.b32.xlu0 %v560, 21
      %v1297 = vpop.permute.xlu0 %1296
      %1298 = vrot.lane.b32.xlu0 %v563, 21
      %v1299 = vpop.permute.xlu0 %1298
      %1300 = vrot.lane.b32.xlu0 %v565, 21
      %v1301 = vpop.permute.xlu0 %1300
      %1302 = vrot.lane.b32.xlu0 %v568, 21
      %v1303 = vpop.permute.xlu0 %1302
      %1304 = vrot.lane.b32.xlu0 %v570, 21
      %v1305 = vpop.permute.xlu0 %1304
      %1306 = vrot.lane.b32.xlu0 %v573, 21
      %v1307 = vpop.permute.xlu0 %1306
      %1308 = vrot.lane.b32.xlu0 %v575, 21
      %v1309 = vpop.permute.xlu0 %1308
      %1310 = vrot.lane.b32.xlu0 %v578, 21
      %v1311 = vpop.permute.xlu0 %1310
      %1312 = vrot.lane.b32.xlu0 %v580, 21
      %v1313 = vpop.permute.xlu0 %1312
      %1314 = vrot.lane.b32.xlu0 %v583, 21
      %v1315 = vpop.permute.xlu0 %1314
      %1316 = vrot.lane.b32.xlu0 %v585, 21
      %v1317 = vpop.permute.xlu0 %1316
      %1318 = vrot.lane.b32.xlu0 %v588, 21
      %v1319 = vpop.permute.xlu0 %1318
      %1320 = vrot.lane.b32.xlu0 %v590, 21
      %v1321 = vpop.permute.xlu0 %1320
      %1322 = vrot.lane.b32.xlu0 %v593, 21
      %v1323 = vpop.permute.xlu0 %1322
      %1324 = vrot.lane.b32.xlu0 %v595, 21
      %v1325 = vpop.permute.xlu0 %1324
      %1326 = vrot.lane.b32.xlu0 %v598, 21
      %v1327 = vpop.permute.xlu0 %1326
      %1328 = vrot.lane.b32.xlu0 %v600, 21
      %v1329 = vpop.permute.xlu0 %1328
      %1330 = vrot.lane.b32.xlu0 %v603, 21
      %v1331 = vpop.permute.xlu0 %1330
      %1332 = vrot.lane.b32.xlu0 %v605, 21
      %v1333 = vpop.permute.xlu0 %1332
      %1334 = vrot.lane.b32.xlu0 %v608, 21
      %v1335 = vpop.permute.xlu0 %1334
      %1336 = vrot.lane.b32.xlu0 %v610, 21
      %v1337 = vpop.permute.xlu0 %1336
      %1338 = vrot.lane.b32.xlu0 %v613, 21
      %v1339 = vpop.permute.xlu0 %1338
      %1340 = vrot.lane.b32.xlu0 %v615, 21
      %v1341 = vpop.permute.xlu0 %1340
      %1342 = vrot.lane.b32.xlu0 %v618, 21
      %v1343 = vpop.permute.xlu0 %1342
      %1344 = vrot.lane.b32.xlu0 %v620, 21
      %v1345 = vpop.permute.xlu0 %1344
      %1346 = vrot.lane.b32.xlu0 %v706, 21
      %v1347 = vpop.permute.xlu0 %1346
      %1348 = vrot.lane.b32.xlu0 %v708, 21
      %v1349 = vpop.permute.xlu0 %1348
      %1350 = vrot.lane.b32.xlu0 %v543, 21
      %v1351 = vpop.permute.xlu0 %1350
      %1352 = vrot.lane.b32.xlu0 %v545, 21
      %v1353 = vpop.permute.xlu0 %1352
      %1386 = vrot.lane.b32.xlu0 %v634, 24
      %v1387 = vpop.permute.xlu0 %1386
      %1388 = vrot.lane.b32.xlu0 %v636, 24
      %v1389 = vpop.permute.xlu0 %1388
      %1390 = vrot.lane.b32.xlu0 %v639, 24
      %v1391 = vpop.permute.xlu0 %1390
      %1392 = vrot.lane.b32.xlu0 %v641, 24
      %v1393 = vpop.permute.xlu0 %1392
      %1394 = vrot.lane.b32.xlu0 %v644, 24
      %v1395 = vpop.permute.xlu0 %1394
      %1396 = vrot.lane.b32.xlu0 %v646, 24
      %v1397 = vpop.permute.xlu0 %1396
      %1398 = vrot.lane.b32.xlu0 %v649, 24
      %v1399 = vpop.permute.xlu0 %1398
      %1400 = vrot.lane.b32.xlu0 %v651, 24
      %v1401 = vpop.permute.xlu0 %1400
      %1402 = vrot.lane.b32.xlu0 %v654, 24
      %v1403 = vpop.permute.xlu0 %1402
      %1404 = vrot.lane.b32.xlu0 %v656, 24
      %v1405 = vpop.permute.xlu0 %1404
      %1406 = vrot.lane.b32.xlu0 %v659, 24
      %v1407 = vpop.permute.xlu0 %1406
      %1408 = vrot.lane.b32.xlu0 %v661, 24
      %v1409 = vpop.permute.xlu0 %1408
      %1410 = vrot.lane.b32.xlu0 %v664, 24
      %v1411 = vpop.permute.xlu0 %1410
      %1412 = vrot.lane.b32.xlu0 %v666, 24
      %v1413 = vpop.permute.xlu0 %1412
      %1414 = vrot.lane.b32.xlu0 %v669, 24
      %v1415 = vpop.permute.xlu0 %1414
      %1416 = vrot.lane.b32.xlu0 %v671, 24
      %v1417 = vpop.permute.xlu0 %1416
      %1418 = vrot.lane.b32.xlu0 %v674, 24
      %v1419 = vpop.permute.xlu0 %1418
      %1420 = vrot.lane.b32.xlu0 %v676, 24
      %v1421 = vpop.permute.xlu0 %1420
      %1422 = vrot.lane.b32.xlu0 %v679, 24
      %v1423 = vpop.permute.xlu0 %1422
      %1424 = vrot.lane.b32.xlu0 %v681, 24
      %v1425 = vpop.permute.xlu0 %1424
      %1426 = vrot.lane.b32.xlu0 %v684, 24
      %v1427 = vpop.permute.xlu0 %1426
      %1428 = vrot.lane.b32.xlu0 %v686, 24
      %v1429 = vpop.permute.xlu0 %1428
      %1430 = vrot.lane.b32.xlu0 %v689, 24
      %v1431 = vpop.permute.xlu0 %1430
      %1432 = vrot.lane.b32.xlu0 %v691, 24
      %v1433 = vpop.permute.xlu0 %1432
      %1434 = vrot.lane.b32.xlu0 %v694, 24
      %v1435 = vpop.permute.xlu0 %1434
      %1436 = vrot.lane.b32.xlu0 %v696, 24
      %v1437 = vpop.permute.xlu0 %1436
      %1438 = vrot.lane.b32.xlu0 %v699, 24
      %v1439 = vpop.permute.xlu0 %1438
      %1440 = vrot.lane.b32.xlu0 %v701, 24
      %v1441 = vpop.permute.xlu0 %1440
      %1442 = vrot.lane.b32.xlu0 %v711, 24
      %v1443 = vpop.permute.xlu0 %1442
      %1444 = vrot.lane.b32.xlu0 %v713, 24
      %v1445 = vpop.permute.xlu0 %1444
      %1446 = vrot.lane.b32.xlu0 %v624, 24
      %v1447 = vpop.permute.xlu0 %1446
      %1448 = vrot.lane.b32.xlu0 %v626, 24
      %v1449 = vpop.permute.xlu0 %1448
      %vm1482 = vcmask 23552
      %v1483 = vsel %vm1482, %v474, %v715
      %v1484 = vsel %vm1482, %v376, %v717
      %v1485 = vsel %vm1482, %v475, %v719
      %v1486 = vsel %vm1482, %v379, %v721
      %v1487 = vsel %vm1482, %v476, %v723
      %v1488 = vsel %vm1482, %v382, %v725
      %v1489 = vsel %vm1482, %v477, %v727
      %v1490 = vsel %vm1482, %v385, %v729
      %v1491 = vsel %vm1482, %v478, %v731
      %v1492 = vsel %vm1482, %v388, %v733
      %v1493 = vsel %vm1482, %v479, %v735
      %v1494 = vsel %vm1482, %v391, %v737
      %v1495 = vsel %vm1482, %v480, %v739
      %v1496 = vsel %vm1482, %v394, %v741
      %v1497 = vsel %vm1482, %v481, %v743
      %v1498 = vsel %vm1482, %v397, %v745
      %v1499 = vsel %vm1482, %v482, %v747
      %v1500 = vsel %vm1482, %v400, %v749
      %v1501 = vsel %vm1482, %v483, %v751
      %v1502 = vsel %vm1482, %v403, %v753
      %v1503 = vsel %vm1482, %v484, %v755
      %v1504 = vsel %vm1482, %v406, %v757
      %v1505 = vsel %vm1482, %v485, %v759
      %v1506 = vsel %vm1482, %v409, %v761
      %v1507 = vsel %vm1482, %v486, %v763
      %v1508 = vsel %vm1482, %v412, %v765
      %v1509 = vsel %vm1482, %v487, %v767
      %v1510 = vsel %vm1482, %v415, %v769
      %v1511 = vsel %vm1482, %v488, %v771
      %v1512 = vsel %vm1482, %v418, %v773
      %v1513 = vsel %vm1482, %v489, %v775
      %v1514 = vsel %vm1482, %v421, %v777
      %vm1515 = vcmask 48128
      %v1516 = vsel %vm1515, %v1483, %v811
      %v1517 = vsel %vm1515, %v1484, %v813
      %v1518 = vsel %vm1515, %v1485, %v815
      %v1519 = vsel %vm1515, %v1486, %v817
      %v1520 = vsel %vm1515, %v1487, %v819
      %v1521 = vsel %vm1515, %v1488, %v821
      %v1522 = vsel %vm1515, %v1489, %v823
      %v1523 = vsel %vm1515, %v1490, %v825
      %v1524 = vsel %vm1515, %v1491, %v827
      %v1525 = vsel %vm1515, %v1492, %v829
      %v1526 = vsel %vm1515, %v1493, %v831
      %v1527 = vsel %vm1515, %v1494, %v833
      %v1528 = vsel %vm1515, %v1495, %v835
      %v1529 = vsel %vm1515, %v1496, %v837
      %v1530 = vsel %vm1515, %v1497, %v839
      %v1531 = vsel %vm1515, %v1498, %v841
      %v1532 = vsel %vm1515, %v1499, %v843
      %v1533 = vsel %vm1515, %v1500, %v845
      %v1534 = vsel %vm1515, %v1501, %v847
      %v1535 = vsel %vm1515, %v1502, %v849
      %v1536 = vsel %vm1515, %v1503, %v851
      %v1537 = vsel %vm1515, %v1504, %v853
      %v1538 = vsel %vm1515, %v1505, %v855
      %v1539 = vsel %vm1515, %v1506, %v857
      %v1540 = vsel %vm1515, %v1507, %v859
      %v1541 = vsel %vm1515, %v1508, %v861
      %v1542 = vsel %vm1515, %v1509, %v863
      %v1543 = vsel %vm1515, %v1510, %v865
      %v1544 = vsel %vm1515, %v1511, %v867
      %v1545 = vsel %vm1515, %v1512, %v869
      %v1546 = vsel %vm1515, %v1513, %v871
      %v1547 = vsel %vm1515, %v1514, %v873
      %vm1548 = vcmask 72704
      %v1549 = vsel %vm1548, %v1516, %v907
      %v1550 = vsel %vm1548, %v1517, %v909
      %v1551 = vsel %vm1548, %v1518, %v911
      %v1552 = vsel %vm1548, %v1519, %v913
      %v1553 = vsel %vm1548, %v1520, %v915
      %v1554 = vsel %vm1548, %v1521, %v917
      %v1555 = vsel %vm1548, %v1522, %v919
      %v1556 = vsel %vm1548, %v1523, %v921
      %v1557 = vsel %vm1548, %v1524, %v923
      %v1558 = vsel %vm1548, %v1525, %v925
      %v1559 = vsel %vm1548, %v1526, %v927
      %v1560 = vsel %vm1548, %v1527, %v929
      %v1561 = vsel %vm1548, %v1528, %v931
      %v1562 = vsel %vm1548, %v1529, %v933
      %v1563 = vsel %vm1548, %v1530, %v935
      %v1564 = vsel %vm1548, %v1531, %v937
      %v1565 = vsel %vm1548, %v1532, %v939
      %v1566 = vsel %vm1548, %v1533, %v941
      %v1567 = vsel %vm1548, %v1534, %v943
      %v1568 = vsel %vm1548, %v1535, %v945
      %v1569 = vsel %vm1548, %v1536, %v947
      %v1570 = vsel %vm1548, %v1537, %v949
      %v1571 = vsel %vm1548, %v1538, %v951
      %v1572 = vsel %vm1548, %v1539, %v953
      %v1573 = vsel %vm1548, %v1540, %v955
      %v1574 = vsel %vm1548, %v1541, %v957
      %v1575 = vsel %vm1548, %v1542, %v959
      %v1576 = vsel %vm1548, %v1543, %v961
      %v1577 = vsel %vm1548, %v1544, %v963
      %v1578 = vsel %vm1548, %v1545, %v965
      %v1579 = vsel %vm1548, %v1546, %v967
      %v1580 = vsel %vm1548, %v1547, %v969
      %vm1581 = vcmask 97280
      %v1582 = vsel %vm1581, %v1549, %v1003
      %v1583 = vsel %vm1581, %v1550, %v1005
      %v1584 = vsel %vm1581, %v1551, %v1007
      %v1585 = vsel %vm1581, %v1552, %v1009
      %v1586 = vsel %vm1581, %v1553, %v1011
      %v1587 = vsel %vm1581, %v1554, %v1013
      %v1588 = vsel %vm1581, %v1555, %v1015
      %v1589 = vsel %vm1581, %v1556, %v1017
      %v1590 = vsel %vm1581, %v1557, %v1019
      %v1591 = vsel %vm1581, %v1558, %v1021
      %v1592 = vsel %vm1581, %v1559, %v1023
      %v1593 = vsel %vm1581, %v1560, %v1025
      %v1594 = vsel %vm1581, %v1561, %v1027
      %v1595 = vsel %vm1581, %v1562, %v1029
      %v1596 = vsel %vm1581, %v1563, %v1031
      %v1597 = vsel %vm1581, %v1564, %v1033
      %v1598 = vsel %vm1581, %v1565, %v1035
      %v1599 = vsel %vm1581, %v1566, %v1037
      %v1600 = vsel %vm1581, %v1567, %v1039
      %v1601 = vsel %vm1581, %v1568, %v1041
      %v1602 = vsel %vm1581, %v1569, %v1043
      %v1603 = vsel %vm1581, %v1570, %v1045
      %v1604 = vsel %vm1581, %v1571, %v1047
      %v1605 = vsel %vm1581, %v1572, %v1049
      %v1606 = vsel %vm1581, %v1573, %v1051
      %v1607 = vsel %vm1581, %v1574, %v1053
      %v1608 = vsel %vm1581, %v1575, %v1055
      %v1609 = vsel %vm1581, %v1576, %v1057
      %v1610 = vsel %vm1581, %v1577, %v1059
      %v1611 = vsel %vm1581, %v1578, %v1061
      %v1612 = vsel %vm1581, %v1579, %v1063
      %v1613 = vsel %vm1581, %v1580, %v1065
      %vm1614 = vcmask 121856
      %v1615 = vsel %vm1614, %v1582, %v1099
      %v1616 = vsel %vm1614, %v1583, %v1101
      %v1617 = vsel %vm1614, %v1584, %v1103
      %v1618 = vsel %vm1614, %v1585, %v1105
      %v1619 = vsel %vm1614, %v1586, %v1107
      %v1620 = vsel %vm1614, %v1587, %v1109
      %v1621 = vsel %vm1614, %v1588, %v1111
      %v1622 = vsel %vm1614, %v1589, %v1113
      %v1623 = vsel %vm1614, %v1590, %v1115
      %v1624 = vsel %vm1614, %v1591, %v1117
      %v1625 = vsel %vm1614, %v1592, %v1119
      %v1626 = vsel %vm1614, %v1593, %v1121
      %v1627 = vsel %vm1614, %v1594, %v1123
      %v1628 = vsel %vm1614, %v1595, %v1125
      %v1629 = vsel %vm1614, %v1596, %v1127
      %v1630 = vsel %vm1614, %v1597, %v1129
      %v1631 = vsel %vm1614, %v1598, %v1131
      %v1632 = vsel %vm1614, %v1599, %v1133
      %v1633 = vsel %vm1614, %v1600, %v1135
      %v1634 = vsel %vm1614, %v1601, %v1137
      %v1635 = vsel %vm1614, %v1602, %v1139
      %v1636 = vsel %vm1614, %v1603, %v1141
      %v1637 = vsel %vm1614, %v1604, %v1143
      %v1638 = vsel %vm1614, %v1605, %v1145
      %v1639 = vsel %vm1614, %v1606, %v1147
      %v1640 = vsel %vm1614, %v1607, %v1149
      %v1641 = vsel %vm1614, %v1608, %v1151
      %v1642 = vsel %vm1614, %v1609, %v1153
      %v1643 = vsel %vm1614, %v1610, %v1155
      %v1644 = vsel %vm1614, %v1611, %v1157
      %v1645 = vsel %vm1614, %v1612, %v1159
      %v1646 = vsel %vm1614, %v1613, %v1161
      %vm1647 = vcmask 146432
      %v1648 = vsel %vm1647, %v1615, %v1195
      %v1649 = vsel %vm1647, %v1616, %v1197
      %v1650 = vsel %vm1647, %v1617, %v1199
      %v1651 = vsel %vm1647, %v1618, %v1201
      %v1652 = vsel %vm1647, %v1619, %v1203
      %v1653 = vsel %vm1647, %v1620, %v1205
      %v1654 = vsel %vm1647, %v1621, %v1207
      %v1655 = vsel %vm1647, %v1622, %v1209
      %v1656 = vsel %vm1647, %v1623, %v1211
      %v1657 = vsel %vm1647, %v1624, %v1213
      %v1658 = vsel %vm1647, %v1625, %v1215
      %v1659 = vsel %vm1647, %v1626, %v1217
      %v1660 = vsel %vm1647, %v1627, %v1219
      %v1661 = vsel %vm1647, %v1628, %v1221
      %v1662 = vsel %vm1647, %v1629, %v1223
      %v1663 = vsel %vm1647, %v1630, %v1225
      %v1664 = vsel %vm1647, %v1631, %v1227
      %v1665 = vsel %vm1647, %v1632, %v1229
      %v1666 = vsel %vm1647, %v1633, %v1231
      %v1667 = vsel %vm1647, %v1634, %v1233
      %v1668 = vsel %vm1647, %v1635, %v1235
      %v1669 = vsel %vm1647, %v1636, %v1237
      %v1670 = vsel %vm1647, %v1637, %v1239
      %v1671 = vsel %vm1647, %v1638, %v1241
      %v1672 = vsel %vm1647, %v1639, %v1243
      %v1673 = vsel %vm1647, %v1640, %v1245
      %v1674 = vsel %vm1647, %v1641, %v1247
      %v1675 = vsel %vm1647, %v1642, %v1249
      %v1676 = vsel %vm1647, %v1643, %v1251
      %v1677 = vsel %vm1647, %v1644, %v1253
      %v1678 = vsel %vm1647, %v1645, %v1255
      %v1679 = vsel %vm1647, %v1646, %v1257
      %vm1680 = vcmask 171008
      %v1681 = vsel %vm1680, %v1648, %v1291
      %v1682 = vsel %vm1680, %v1649, %v1293
      %v1683 = vsel %vm1680, %v1650, %v1295
      %v1684 = vsel %vm1680, %v1651, %v1297
      %v1685 = vsel %vm1680, %v1652, %v1299
      %v1686 = vsel %vm1680, %v1653, %v1301
      %v1687 = vsel %vm1680, %v1654, %v1303
      %v1688 = vsel %vm1680, %v1655, %v1305
      %v1689 = vsel %vm1680, %v1656, %v1307
      %v1690 = vsel %vm1680, %v1657, %v1309
      %v1691 = vsel %vm1680, %v1658, %v1311
      %v1692 = vsel %vm1680, %v1659, %v1313
      %v1693 = vsel %vm1680, %v1660, %v1315
      %v1694 = vsel %vm1680, %v1661, %v1317
      %v1695 = vsel %vm1680, %v1662, %v1319
      %v1696 = vsel %vm1680, %v1663, %v1321
      %v1697 = vsel %vm1680, %v1664, %v1323
      %v1698 = vsel %vm1680, %v1665, %v1325
      %v1699 = vsel %vm1680, %v1666, %v1327
      %v1700 = vsel %vm1680, %v1667, %v1329
      %v1701 = vsel %vm1680, %v1668, %v1331
      %v1702 = vsel %vm1680, %v1669, %v1333
      %v1703 = vsel %vm1680, %v1670, %v1335
      %v1704 = vsel %vm1680, %v1671, %v1337
      %v1705 = vsel %vm1680, %v1672, %v1339
      %v1706 = vsel %vm1680, %v1673, %v1341
      %v1707 = vsel %vm1680, %v1674, %v1343
      %v1708 = vsel %vm1680, %v1675, %v1345
      %v1709 = vsel %vm1680, %v1676, %v1347
      %v1710 = vsel %vm1680, %v1677, %v1349
      %v1711 = vsel %vm1680, %v1678, %v1351
      %v1712 = vsel %vm1680, %v1679, %v1353
      %vm1713 = vcmask 195584
      %v1714 = vsel %vm1713, %v1681, %v1387
      %v1715 = vsel %vm1713, %v1682, %v1389
      %v1716 = vsel %vm1713, %v1683, %v1391
      %v1717 = vsel %vm1713, %v1684, %v1393
      %v1718 = vsel %vm1713, %v1685, %v1395
      %v1719 = vsel %vm1713, %v1686, %v1397
      %v1720 = vsel %vm1713, %v1687, %v1399
      %v1721 = vsel %vm1713, %v1688, %v1401
      %v1722 = vsel %vm1713, %v1689, %v1403
      %v1723 = vsel %vm1713, %v1690, %v1405
      %v1724 = vsel %vm1713, %v1691, %v1407
      %v1725 = vsel %vm1713, %v1692, %v1409
      %v1726 = vsel %vm1713, %v1693, %v1411
      %v1727 = vsel %vm1713, %v1694, %v1413
      %v1728 = vsel %vm1713, %v1695, %v1415
      %v1729 = vsel %vm1713, %v1696, %v1417
      %v1730 = vsel %vm1713, %v1697, %v1419
      %v1731 = vsel %vm1713, %v1698, %v1421
      %v1732 = vsel %vm1713, %v1699, %v1423
      %v1733 = vsel %vm1713, %v1700, %v1425
      %v1734 = vsel %vm1713, %v1701, %v1427
      %v1735 = vsel %vm1713, %v1702, %v1429
      %v1736 = vsel %vm1713, %v1703, %v1431
      %v1737 = vsel %vm1713, %v1704, %v1433
      %v1738 = vsel %vm1713, %v1705, %v1435
      %v1739 = vsel %vm1713, %v1706, %v1437
      %v1740 = vsel %vm1713, %v1707, %v1439
      %v1741 = vsel %vm1713, %v1708, %v1441
      %v1742 = vsel %vm1713, %v1709, %v1443
      %v1743 = vsel %vm1713, %v1710, %v1445
      %v1744 = vsel %vm1713, %v1711, %v1447
      %v1745 = vsel %vm1713, %v1712, %v1449
      %v1746 = vpack.c.bf16 %v1715, %v1714
      %v1747 = vpack.c.bf16 %v1717, %v1716
      %v1748 = vpack.c.bf16 %v1719, %v1718
      %v1749 = vpack.c.bf16 %v1721, %v1720
      %v1750 = vpack.c.bf16 %v1723, %v1722
      %v1751 = vpack.c.bf16 %v1725, %v1724
      %v1752 = vpack.c.bf16 %v1727, %v1726
      %v1753 = vpack.c.bf16 %v1729, %v1728
      %v1754 = vpack.c.bf16 %v1731, %v1730
      %v1755 = vpack.c.bf16 %v1733, %v1732
      %v1756 = vpack.c.bf16 %v1735, %v1734
      %v1757 = vpack.c.bf16 %v1737, %v1736
      %v1758 = vpack.c.bf16 %v1739, %v1738
      %v1759 = vpack.c.bf16 %v1741, %v1740
      %v1760 = vpack.c.bf16 %v1743, %v1742
      %v1761 = vpack.c.bf16 %v1745, %v1744
      %v1762 = vld [vmem:[%s1] sm:$0xf]
      %v1763 = vld [vmem:[%s1 + $0x4] sm:$0xf]
      %v1764 = vld [vmem:[%s1 + $0x8] sm:$0xf]
      %v1765 = vld [vmem:[%s1 + $0xc] sm:$0x3]
      %v1770 = vunpack.c.l.b16 %v1762
      %v1771 = vunpack.c.l.b16 %v1763
      %v1772 = vunpack.c.l.b16 %v1764
      %v1773 = vunpack.c.l.b16 %v1765
      %v1774 = vpack.c.b16 %v1771, %v1770
      %v1775 = vpack.c.b16 %v1773, %v1772
      %vm1777 = vcmask 220160
      %v1779 = vsel %vm1777, %v1746, 0
      %v1782 = vsel %vm1777, %v1747, 0
      %v1785 = vsel %vm1777, %v1748, 0
      %v1788 = vsel %vm1777, %v1749, 0
      %v1791 = vsel %vm1777, %v1750, 0
      %v1794 = vsel %vm1777, %v1751, 0
      %v1797 = vsel %vm1777, %v1752, 0
      %v1800 = vsel %vm1777, %v1753, 0
      %v1803 = vsel %vm1777, %v1754, 0
      %v1806 = vsel %vm1777, %v1755, 0
      %v1809 = vsel %vm1777, %v1756, 0
      %v1812 = vsel %vm1777, %v1757, 0
      %v1815 = vsel %vm1777, %v1758, 0
      %v1818 = vsel %vm1777, %v1759, 0
      %v1821 = vsel %vm1777, %v1760, 0
      %v1824 = vsel %vm1777, %v1761, 0
      %vm1826 = vcmask 1044480
      %v1827 = vsel %vm1826, 4294967295, 65535
      %v1828 = vsel %vm621, %v1827, 0
      %v1830 = vand.u32 %v1775, %v1828
      %1832 = vmatprep.subr.bf16.mxu0 0
      %1833 = vmatpush1.bf16.msra.mxu0 %v1774
      %1834 = vmatprep.subr.bf16.mxu0 0
      %1835 = vmatpush1.bf16.msra.mxu0 %v1830
      %1836 = vmatprep.subr.bf16.mxu0 0
      %1837 = vmatpush1.bf16.msra.mxu0 0
      %1838 = vmatprep.subr.bf16.mxu0 0
      %1839 = vmatpush1.bf16.msra.mxu0 0
      %1840 = vmatprep.subr.bf16.mxu0 0
      %1841 = vmatpush1.bf16.msra.mxu0 0
      %1842 = vmatprep.subr.bf16.mxu0 0
      %1843 = vmatpush1.bf16.msra.mxu0 0
      %1844 = vmatprep.subr.bf16.mxu0 0
      %1845 = vmatpush1.bf16.msra.mxu0 0
      %1846 = vmatprep.subr.bf16.mxu0 0
      %1847 = vmatpush1.bf16.msra.mxu0 0
      %1848 = vmatprep.subr.bf16.mxu0 0
      %1849 = vmatpush1.bf16.msra.mxu0 0
      %1850 = vmatprep.subr.bf16.mxu0 0
      %1851 = vmatpush1.bf16.msra.mxu0 0
      %1852 = vmatprep.subr.bf16.mxu0 0
      %1853 = vmatpush1.bf16.msra.mxu0 0
      %1854 = vmatprep.subr.bf16.mxu0 0
      %1855 = vmatpush1.bf16.msra.mxu0 0
      %1856 = vmatprep.subr.bf16.mxu0 0
      %1857 = vmatpush1.bf16.msra.mxu0 0
      %1858 = vmatprep.subr.bf16.mxu0 0
      %1859 = vmatpush1.bf16.msra.mxu0 0
      %1860 = vmatprep.subr.bf16.mxu0 0
      %1861 = vmatpush1.bf16.msra.mxu0 0
      %1862 = vmatprep.subr.bf16.mxu0 0
      %1863 = vmatpush1.bf16.msra.mxu0 0
      %1864 = vmatprep.mubr.bf16.mxu0 0
      %1865 = vmatmul.mubr.bf16.gmra.mrb[0].mxu0 %v1779
      %v1866 = vpop.f32.mrb[0].mxu0
      %v1867 = vadd.f32 0.0, %v1866
      %v1868 = vpop.f32.mrb[0].mxu0
      %v1869 = vpop.f32.mrb[0].mxu0
      %v1870 = vadd.f32 0.0, %v1869
      %v1871 = vpop.f32.mrb[0].mxu0
      %1872 = vmatprep.mubr.bf16.mxu0 0
      %1873 = vmatmul.mubr.bf16.gmra.mrb[0].mxu0 %v1782
      %v1874 = vpop.f32.mrb[0].mxu0
      %v1875 = vadd.f32 0.0, %v1874
      %v1876 = vpop.f32.mrb[0].mxu0
      %v1877 = vpop.f32.mrb[0].mxu0
      %v1878 = vadd.f32 0.0, %v1877
      %v1879 = vpop.f32.mrb[0].mxu0
      %1880 = vmatprep.mubr.bf16.mxu0 0
      %1881 = vmatmul.mubr.bf16.gmra.mrb[0].mxu0 %v1785
      %v1882 = vpop.f32.mrb[0].mxu0
      %v1883 = vadd.f32 0.0, %v1882
      %v1884 = vpop.f32.mrb[0].mxu0
      %v1885 = vpop.f32.mrb[0].mxu0
      %v1886 = vadd.f32 0.0, %v1885
      %v1887 = vpop.f32.mrb[0].mxu0
      %1888 = vmatprep.mubr.bf16.mxu0 0
      %1889 = vmatmul.mubr.bf16.gmra.mrb[0].mxu0 %v1788
      %v1890 = vpop.f32.mrb[0].mxu0
      %v1891 = vadd.f32 0.0, %v1890
      %v1892 = vpop.f32.mrb[0].mxu0
      %v1893 = vpop.f32.mrb[0].mxu0
      %v1894 = vadd.f32 0.0, %v1893
      %v1895 = vpop.f32.mrb[0].mxu0
      %1896 = vmatprep.mubr.bf16.mxu0 0
      %1897 = vmatmul.mubr.bf16.gmra.mrb[0].mxu0 %v1791
      %v1898 = vpop.f32.mrb[0].mxu0
      %v1899 = vadd.f32 0.0, %v1898
      %v1900 = vpop.f32.mrb[0].mxu0
      %v1901 = vpop.f32.mrb[0].mxu0
      %v1902 = vadd.f32 0.0, %v1901
      %v1903 = vpop.f32.mrb[0].mxu0
      %1904 = vmatprep.mubr.bf16.mxu0 0
      %1905 = vmatmul.mubr.bf16.gmra.mrb[0].mxu0 %v1794
      %v1906 = vpop.f32.mrb[0].mxu0
      %v1907 = vadd.f32 0.0, %v1906
      %v1908 = vpop.f32.mrb[0].mxu0
      %v1909 = vpop.f32.mrb[0].mxu0
      %v1910 = vadd.f32 0.0, %v1909
      %v1911 = vpop.f32.mrb[0].mxu0
      %1912 = vmatprep.mubr.bf16.mxu0 0
      %1913 = vmatmul.mubr.bf16.gmra.mrb[0].mxu0 %v1797
      %v1914 = vpop.f32.mrb[0].mxu0
      %v1915 = vadd.f32 0.0, %v1914
      %v1916 = vpop.f32.mrb[0].mxu0
      %v1917 = vpop.f32.mrb[0].mxu0
      %v1918 = vadd.f32 0.0, %v1917
      %v1919 = vpop.f32.mrb[0].mxu0
      %1920 = vmatprep.mubr.bf16.mxu0 0
      %1921 = vmatmul.mubr.bf16.gmra.mrb[0].mxu0 %v1800
      %v1922 = vpop.f32.mrb[0].mxu0
      %v1923 = vadd.f32 0.0, %v1922
      %v1924 = vpop.f32.mrb[0].mxu0
      %v1925 = vpop.f32.mrb[0].mxu0
      %v1926 = vadd.f32 0.0, %v1925
      %v1927 = vpop.f32.mrb[0].mxu0
      %1928 = vmatprep.mubr.bf16.mxu0 0
      %1929 = vmatmul.mubr.bf16.gmra.mrb[0].mxu0 %v1803
      %v1930 = vpop.f32.mrb[0].mxu0
      %v1931 = vadd.f32 0.0, %v1930
      %v1932 = vpop.f32.mrb[0].mxu0
      %v1933 = vpop.f32.mrb[0].mxu0
      %v1934 = vadd.f32 0.0, %v1933
      %v1935 = vpop.f32.mrb[0].mxu0
      %1936 = vmatprep.mubr.bf16.mxu0 0
      %1937 = vmatmul.mubr.bf16.gmra.mrb[0].mxu0 %v1806
      %v1938 = vpop.f32.mrb[0].mxu0
      %v1939 = vadd.f32 0.0, %v1938
      %v1940 = vpop.f32.mrb[0].mxu0
      %v1941 = vpop.f32.mrb[0].mxu0
      %v1942 = vadd.f32 0.0, %v1941
      %v1943 = vpop.f32.mrb[0].mxu0
      %1944 = vmatprep.mubr.bf16.mxu0 0
      %1945 = vmatmul.mubr.bf16.gmra.mrb[0].mxu0 %v1809
      %v1946 = vpop.f32.mrb[0].mxu0
      %v1947 = vadd.f32 0.0, %v1946
      %v1948 = vpop.f32.mrb[0].mxu0
      %v1949 = vpop.f32.mrb[0].mxu0
      %v1950 = vadd.f32 0.0, %v1949
      %v1951 = vpop.f32.mrb[0].mxu0
      %1952 = vmatprep.mubr.bf16.mxu0 0
      %1953 = vmatmul.mubr.bf16.gmra.mrb[0].mxu0 %v1812
      %v1954 = vpop.f32.mrb[0].mxu0
      %v1955 = vadd.f32 0.0, %v1954
      %v1956 = vpop.f32.mrb[0].mxu0
      %v1957 = vpop.f32.mrb[0].mxu0
      %v1958 = vadd.f32 0.0, %v1957
      %v1959 = vpop.f32.mrb[0].mxu0
      %1960 = vmatprep.mubr.bf16.mxu0 0
      %1961 = vmatmul.mubr.bf16.gmra.mrb[0].mxu0 %v1815
      %v1962 = vpop.f32.mrb[0].mxu0
      %v1963 = vadd.f32 0.0, %v1962
      %v1964 = vpop.f32.mrb[0].mxu0
      %v1965 = vpop.f32.mrb[0].mxu0
      %v1966 = vadd.f32 0.0, %v1965
      %v1967 = vpop.f32.mrb[0].mxu0
      %1968 = vmatprep.mubr.bf16.mxu0 0
      %1969 = vmatmul.mubr.bf16.gmra.mrb[0].mxu0 %v1818
      %v1970 = vpop.f32.mrb[0].mxu0
      %v1971 = vadd.f32 0.0, %v1970
      %v1972 = vpop.f32.mrb[0].mxu0
      %v1973 = vpop.f32.mrb[0].mxu0
      %v1974 = vadd.f32 0.0, %v1973
      %v1975 = vpop.f32.mrb[0].mxu0
      %1976 = vmatprep.mubr.bf16.mxu0 0
      %1977 = vmatmul.mubr.bf16.gmra.mrb[0].mxu0 %v1821
      %v1978 = vpop.f32.mrb[0].mxu0
      %v1979 = vadd.f32 0.0, %v1978
      %v1980 = vpop.f32.mrb[0].mxu0
      %v1981 = vpop.f32.mrb[0].mxu0
      %v1982 = vadd.f32 0.0, %v1981
      %v1983 = vpop.f32.mrb[0].mxu0
      %1984 = vmatprep.mubr.bf16.mxu0 0
      %1985 = vmatmul.mubr.bf16.gmra.mrb[0].mxu0 %v1824
      %v1986 = vpop.f32.mrb[0].mxu0
      %v1987 = vadd.f32 0.0, %v1986
      %v1988 = vpop.f32.mrb[0].mxu0
      %v1989 = vpop.f32.mrb[0].mxu0
      %v1990 = vadd.f32 0.0, %v1989
      %v1991 = vpop.f32.mrb[0].mxu0
      %1992 = vdwg.mxu0
      %v1993 = vmax.f32 %v1867, 0.0
      %v1994 = vmax.f32 %v1870, 0.0
      %v1995 = vmax.f32 %v1875, 0.0
      %v1996 = vmax.f32 %v1878, 0.0
      %v1997 = vmax.f32 %v1883, 0.0
      %v1998 = vmax.f32 %v1886, 0.0
      %v1999 = vmax.f32 %v1891, 0.0
      %v2000 = vmax.f32 %v1894, 0.0
      %v2001 = vmax.f32 %v1899, 0.0
      %v2002 = vmax.f32 %v1902, 0.0
      %v2003 = vmax.f32 %v1907, 0.0
      %v2004 = vmax.f32 %v1910, 0.0
      %v2005 = vmax.f32 %v1915, 0.0
      %v2006 = vmax.f32 %v1918, 0.0
      %v2007 = vmax.f32 %v1923, 0.0
      %v2008 = vmax.f32 %v1926, 0.0
      %v2009 = vmax.f32 %v1931, 0.0
      %v2010 = vmax.f32 %v1934, 0.0
      %v2011 = vmax.f32 %v1939, 0.0
      %v2012 = vmax.f32 %v1942, 0.0
      %v2013 = vmax.f32 %v1947, 0.0
      %v2014 = vmax.f32 %v1950, 0.0
      %v2015 = vmax.f32 %v1955, 0.0
      %v2016 = vmax.f32 %v1958, 0.0
      %v2017 = vmax.f32 %v1963, 0.0
      %v2018 = vmax.f32 %v1966, 0.0
      %v2019 = vmax.f32 %v1971, 0.0
      %v2020 = vmax.f32 %v1974, 0.0
      %v2021 = vmax.f32 %v1979, 0.0
      %v2022 = vmax.f32 %v1982, 0.0
      %v2023 = vmax.f32 %v1987, 0.0
      %v2024 = vmax.f32 %v1990, 0.0
      %v2025 = vpack.c.bf16 %v1994, %v1993
      %v2026 = vpack.c.bf16 %v1996, %v1995
      %v2027 = vpack.c.bf16 %v1998, %v1997
      %v2028 = vpack.c.bf16 %v2000, %v1999
      %v2029 = vpack.c.bf16 %v2002, %v2001
      %v2030 = vpack.c.bf16 %v2004, %v2003
      %v2031 = vpack.c.bf16 %v2006, %v2005
      %v2032 = vpack.c.bf16 %v2008, %v2007
      %v2033 = vpack.c.bf16 %v2010, %v2009
      %v2034 = vpack.c.bf16 %v2012, %v2011
      %v2035 = vpack.c.bf16 %v2014, %v2013
      %v2036 = vpack.c.bf16 %v2016, %v2015
      %v2037 = vpack.c.bf16 %v2018, %v2017
      %v2038 = vpack.c.bf16 %v2020, %v2019
      %v2039 = vpack.c.bf16 %v2022, %v2021
      %v2040 = vpack.c.bf16 %v2024, %v2023
      %v2041 = vld [vmem:[%s2] sm:$0xf]
      %v2042 = vld [vmem:[%s2 + $0x4] sm:$0xf]
      %v2045 = vunpack.c.l.b16 %v2041
      %v2046 = vunpack.c.l.b16 %v2042
      %v2047 = vpack.c.b16 %v2046, %v2045
      %vm2049 = vcmask 130048
      %v2051 = vsel %vm2049, %v2025, 0
      %v2054 = vsel %vm2049, %v2026, 0
      %v2057 = vsel %vm2049, %v2027, 0
      %v2060 = vsel %vm2049, %v2028, 0
      %v2063 = vsel %vm2049, %v2029, 0
      %v2066 = vsel %vm2049, %v2030, 0
      %v2069 = vsel %vm2049, %v2031, 0
      %v2072 = vsel %vm2049, %v2032, 0
      %v2075 = vsel %vm2049, %v2033, 0
      %v2078 = vsel %vm2049, %v2034, 0
      %v2081 = vsel %vm2049, %v2035, 0
      %v2084 = vsel %vm2049, %v2036, 0
      %v2087 = vsel %vm2049, %v2037, 0
      %v2090 = vsel %vm2049, %v2038, 0
      %v2093 = vsel %vm2049, %v2039, 0
      %v2096 = vsel %vm2049, %v2040, 0
      %2098 = vmatprep.subr.bf16.mxu0 0
      %2099 = vmatpush1.bf16.msra.mxu0 %v2047
      %2100 = vmatprep.subr.bf16.mxu0 0
      %2101 = vmatpush1.bf16.msra.mxu0 0
      %2102 = vmatprep.subr.bf16.mxu0 0
      %2103 = vmatpush1.bf16.msra.mxu0 0
      %2104 = vmatprep.subr.bf16.mxu0 0
      %2105 = vmatpush1.bf16.msra.mxu0 0
      %2106 = vmatprep.subr.bf16.mxu0 0
      %2107 = vmatpush1.bf16.msra.mxu0 0
      %2108 = vmatprep.subr.bf16.mxu0 0
      %2109 = vmatpush1.bf16.msra.mxu0 0
      %2110 = vmatprep.subr.bf16.mxu0 0
      %2111 = vmatpush1.bf16.msra.mxu0 0
      %2112 = vmatprep.subr.bf16.mxu0 0
      %2113 = vmatpush1.bf16.msra.mxu0 0
      %2114 = vmatprep.subr.bf16.mxu0 0
      %2115 = vmatpush1.bf16.msra.mxu0 0
      %2116 = vmatprep.subr.bf16.mxu0 0
      %2117 = vmatpush1.bf16.msra.mxu0 0
      %2118 = vmatprep.subr.bf16.mxu0 0
      %2119 = vmatpush1.bf16.msra.mxu0 0
      %2120 = vmatprep.subr.bf16.mxu0 0
      %2121 = vmatpush1.bf16.msra.mxu0 0
      %2122 = vmatprep.subr.bf16.mxu0 0
      %2123 = vmatpush1.bf16.msra.mxu0 0
      %2124 = vmatprep.subr.bf16.mxu0 0
      %2125 = vmatpush1.bf16.msra.mxu0 0
      %2126 = vmatprep.subr.bf16.mxu0 0
      %2127 = vmatpush1.bf16.msra.mxu0 0
      %2128 = vmatprep.subr.bf16.mxu0 0
      %2129 = vmatpush1.bf16.msra.mxu0 0
      %2130 = vmatprep.mubr.bf16.mxu0 0
      %2131 = vmatmul.mubr.bf16.gmra.mrb[0].mxu0 %v2051
      %v2132 = vpop.f32.mrb[0].mxu0
      %v2133 = vadd.f32 0.0, %v2132
      %v2134 = vpop.f32.mrb[0].mxu0
      %v2135 = vpop.f32.mrb[0].mxu0
      %v2136 = vadd.f32 0.0, %v2135
      %v2137 = vpop.f32.mrb[0].mxu0
      %2138 = vmatprep.mubr.bf16.mxu0 0
      %2139 = vmatmul.mubr.bf16.gmra.mrb[0].mxu0 %v2054
      %v2140 = vpop.f32.mrb[0].mxu0
      %v2141 = vadd.f32 0.0, %v2140
      %v2142 = vpop.f32.mrb[0].mxu0
      %v2143 = vpop.f32.mrb[0].mxu0
      %v2144 = vadd.f32 0.0, %v2143
      %v2145 = vpop.f32.mrb[0].mxu0
      %2146 = vmatprep.mubr.bf16.mxu0 0
      %2147 = vmatmul.mubr.bf16.gmra.mrb[0].mxu0 %v2057
      %v2148 = vpop.f32.mrb[0].mxu0
      %v2149 = vadd.f32 0.0, %v2148
      %v2150 = vpop.f32.mrb[0].mxu0
      %v2151 = vpop.f32.mrb[0].mxu0
      %v2152 = vadd.f32 0.0, %v2151
      %v2153 = vpop.f32.mrb[0].mxu0
      %2154 = vmatprep.mubr.bf16.mxu0 0
      %2155 = vmatmul.mubr.bf16.gmra.mrb[0].mxu0 %v2060
      %v2156 = vpop.f32.mrb[0].mxu0
      %v2157 = vadd.f32 0.0, %v2156
      %v2158 = vpop.f32.mrb[0].mxu0
      %v2159 = vpop.f32.mrb[0].mxu0
      %v2160 = vadd.f32 0.0, %v2159
      %v2161 = vpop.f32.mrb[0].mxu0
      %2162 = vmatprep.mubr.bf16.mxu0 0
      %2163 = vmatmul.mubr.bf16.gmra.mrb[0].mxu0 %v2063
      %v2164 = vpop.f32.mrb[0].mxu0
      %v2165 = vadd.f32 0.0, %v2164
      %v2166 = vpop.f32.mrb[0].mxu0
      %v2167 = vpop.f32.mrb[0].mxu0
      %v2168 = vadd.f32 0.0, %v2167
      %v2169 = vpop.f32.mrb[0].mxu0
      %2170 = vmatprep.mubr.bf16.mxu0 0
      %2171 = vmatmul.mubr.bf16.gmra.mrb[0].mxu0 %v2066
      %v2172 = vpop.f32.mrb[0].mxu0
      %v2173 = vadd.f32 0.0, %v2172
      %v2174 = vpop.f32.mrb[0].mxu0
      %v2175 = vpop.f32.mrb[0].mxu0
      %v2176 = vadd.f32 0.0, %v2175
      %v2177 = vpop.f32.mrb[0].mxu0
      %2178 = vmatprep.mubr.bf16.mxu0 0
      %2179 = vmatmul.mubr.bf16.gmra.mrb[0].mxu0 %v2069
      %v2180 = vpop.f32.mrb[0].mxu0
      %v2181 = vadd.f32 0.0, %v2180
      %v2182 = vpop.f32.mrb[0].mxu0
      %v2183 = vpop.f32.mrb[0].mxu0
      %v2184 = vadd.f32 0.0, %v2183
      %v2185 = vpop.f32.mrb[0].mxu0
      %2186 = vmatprep.mubr.bf16.mxu0 0
      %2187 = vmatmul.mubr.bf16.gmra.mrb[0].mxu0 %v2072
      %v2188 = vpop.f32.mrb[0].mxu0
      %v2189 = vadd.f32 0.0, %v2188
      %v2190 = vpop.f32.mrb[0].mxu0
      %v2191 = vpop.f32.mrb[0].mxu0
      %v2192 = vadd.f32 0.0, %v2191
      %v2193 = vpop.f32.mrb[0].mxu0
      %2194 = vmatprep.mubr.bf16.mxu0 0
      %2195 = vmatmul.mubr.bf16.gmra.mrb[0].mxu0 %v2075
      %v2196 = vpop.f32.mrb[0].mxu0
      %v2197 = vadd.f32 0.0, %v2196
      %v2198 = vpop.f32.mrb[0].mxu0
      %v2199 = vpop.f32.mrb[0].mxu0
      %v2200 = vadd.f32 0.0, %v2199
      %v2201 = vpop.f32.mrb[0].mxu0
      %2202 = vmatprep.mubr.bf16.mxu0 0
      %2203 = vmatmul.mubr.bf16.gmra.mrb[0].mxu0 %v2078
      %v2204 = vpop.f32.mrb[0].mxu0
      %v2205 = vadd.f32 0.0, %v2204
      %v2206 = vpop.f32.mrb[0].mxu0
      %v2207 = vpop.f32.mrb[0].mxu0
      %v2208 = vadd.f32 0.0, %v2207
      %v2209 = vpop.f32.mrb[0].mxu0
      %2210 = vmatprep.mubr.bf16.mxu0 0
      %2211 = vmatmul.mubr.bf16.gmra.mrb[0].mxu0 %v2081
      %v2212 = vpop.f32.mrb[0].mxu0
      %v2213 = vadd.f32 0.0, %v2212
      %v2214 = vpop.f32.mrb[0].mxu0
      %v2215 = vpop.f32.mrb[0].mxu0
      %v2216 = vadd.f32 0.0, %v2215
      %v2217 = vpop.f32.mrb[0].mxu0
      %2218 = vmatprep.mubr.bf16.mxu0 0
      %2219 = vmatmul.mubr.bf16.gmra.mrb[0].mxu0 %v2084
      %v2220 = vpop.f32.mrb[0].mxu0
      %v2221 = vadd.f32 0.0, %v2220
      %v2222 = vpop.f32.mrb[0].mxu0
      %v2223 = vpop.f32.mrb[0].mxu0
      %v2224 = vadd.f32 0.0, %v2223
      %v2225 = vpop.f32.mrb[0].mxu0
      %2226 = vmatprep.mubr.bf16.mxu0 0
      %2227 = vmatmul.mubr.bf16.gmra.mrb[0].mxu0 %v2087
      %v2228 = vpop.f32.mrb[0].mxu0
      %v2229 = vadd.f32 0.0, %v2228
      %v2230 = vpop.f32.mrb[0].mxu0
      %v2231 = vpop.f32.mrb[0].mxu0
      %v2232 = vadd.f32 0.0, %v2231
      %v2233 = vpop.f32.mrb[0].mxu0
      %2234 = vmatprep.mubr.bf16.mxu0 0
      %2235 = vmatmul.mubr.bf16.gmra.mrb[0].mxu0 %v2090
      %v2236 = vpop.f32.mrb[0].mxu0
      %v2237 = vadd.f32 0.0, %v2236
      %v2238 = vpop.f32.mrb[0].mxu0
      %v2239 = vpop.f32.mrb[0].mxu0
      %v2240 = vadd.f32 0.0, %v2239
      %v2241 = vpop.f32.mrb[0].mxu0
      %2242 = vmatprep.mubr.bf16.mxu0 0
      %2243 = vmatmul.mubr.bf16.gmra.mrb[0].mxu0 %v2093
      %v2244 = vpop.f32.mrb[0].mxu0
      %v2245 = vadd.f32 0.0, %v2244
      %v2246 = vpop.f32.mrb[0].mxu0
      %v2247 = vpop.f32.mrb[0].mxu0
      %v2248 = vadd.f32 0.0, %v2247
      %v2249 = vpop.f32.mrb[0].mxu0
      %2250 = vmatprep.mubr.bf16.mxu0 0
      %2251 = vmatmul.mubr.bf16.gmra.mrb[0].mxu0 %v2096
      %v2252 = vpop.f32.mrb[0].mxu0
      %v2253 = vadd.f32 0.0, %v2252
      %v2254 = vpop.f32.mrb[0].mxu0
      %v2255 = vpop.f32.mrb[0].mxu0
      %v2256 = vadd.f32 0.0, %v2255
      %v2257 = vpop.f32.mrb[0].mxu0
      %2258 = vdwg.mxu0
      %v2259 = vmax.f32 %v2133, 0.0
      %v2260 = vmax.f32 %v2136, 0.0
      %v2261 = vmax.f32 %v2141, 0.0
      %v2262 = vmax.f32 %v2144, 0.0
      %v2263 = vmax.f32 %v2149, 0.0
      %v2264 = vmax.f32 %v2152, 0.0
      %v2265 = vmax.f32 %v2157, 0.0
      %v2266 = vmax.f32 %v2160, 0.0
      %v2267 = vmax.f32 %v2165, 0.0
      %v2268 = vmax.f32 %v2168, 0.0
      %v2269 = vmax.f32 %v2173, 0.0
      %v2270 = vmax.f32 %v2176, 0.0
      %v2271 = vmax.f32 %v2181, 0.0
      %v2272 = vmax.f32 %v2184, 0.0
      %v2273 = vmax.f32 %v2189, 0.0
      %v2274 = vmax.f32 %v2192, 0.0
      %v2275 = vmax.f32 %v2197, 0.0
      %v2276 = vmax.f32 %v2200, 0.0
      %v2277 = vmax.f32 %v2205, 0.0
      %v2278 = vmax.f32 %v2208, 0.0
      %v2279 = vmax.f32 %v2213, 0.0
      %v2280 = vmax.f32 %v2216, 0.0
      %v2281 = vmax.f32 %v2221, 0.0
      %v2282 = vmax.f32 %v2224, 0.0
      %v2283 = vmax.f32 %v2229, 0.0
      %v2284 = vmax.f32 %v2232, 0.0
      %v2285 = vmax.f32 %v2237, 0.0
      %v2286 = vmax.f32 %v2240, 0.0
      %v2287 = vmax.f32 %v2245, 0.0
      %v2288 = vmax.f32 %v2248, 0.0
      %v2289 = vmax.f32 %v2253, 0.0
      %v2290 = vmax.f32 %v2256, 0.0
      %v2323 = vrot.slane %v2259, 7
      %v2324 = vrot.slane %v2260, 7
      %v2325 = vsel %vm374, %v2323, %v2324
      %v2326 = vrot.slane %v2261, 7
      %v2327 = vrot.slane %v2262, 7
      %v2328 = vsel %vm374, %v2326, %v2327
      %v2329 = vrot.slane %v2263, 7
      %v2330 = vrot.slane %v2264, 7
      %v2331 = vsel %vm374, %v2329, %v2330
      %v2332 = vrot.slane %v2265, 7
      %v2333 = vrot.slane %v2266, 7
      %v2334 = vsel %vm374, %v2332, %v2333
      %v2335 = vrot.slane %v2267, 7
      %v2336 = vrot.slane %v2268, 7
      %v2337 = vsel %vm374, %v2335, %v2336
      %v2338 = vrot.slane %v2269, 7
      %v2339 = vrot.slane %v2270, 7
      %v2340 = vsel %vm374, %v2338, %v2339
      %v2341 = vrot.slane %v2271, 7
      %v2342 = vrot.slane %v2272, 7
      %v2343 = vsel %vm374, %v2341, %v2342
      %v2344 = vrot.slane %v2273, 7
      %v2345 = vrot.slane %v2274, 7
      %v2346 = vsel %vm374, %v2344, %v2345
      %v2347 = vrot.slane %v2275, 7
      %v2348 = vrot.slane %v2276, 7
      %v2349 = vsel %vm374, %v2347, %v2348
      %v2350 = vrot.slane %v2277, 7
      %v2351 = vrot.slane %v2278, 7
      %v2352 = vsel %vm374, %v2350, %v2351
      %v2353 = vrot.slane %v2279, 7
      %v2354 = vrot.slane %v2280, 7
      %v2355 = vsel %vm374, %v2353, %v2354
      %v2356 = vrot.slane %v2281, 7
      %v2357 = vrot.slane %v2282, 7
      %v2358 = vsel %vm374, %v2356, %v2357
      %v2359 = vrot.slane %v2283, 7
      %v2360 = vrot.slane %v2284, 7
      %v2361 = vsel %vm374, %v2359, %v2360
      %v2362 = vrot.slane %v2285, 7
      %v2363 = vrot.slane %v2286, 7
      %v2364 = vsel %vm374, %v2362, %v2363
      %v2365 = vrot.slane %v2287, 7
      %v2366 = vrot.slane %v2288, 7
      %v2367 = vsel %vm374, %v2365, %v2366
      %v2368 = vrot.slane %v2289, 7
      %v2369 = vrot.slane %v2290, 7
      %v2370 = vsel %vm374, %v2368, %v2369
      %v2418 = vsel %vm374, 0.0, %v2323
      %v2419 = vsel %vm374, 0.0, %v2326
      %v2420 = vsel %vm374, 0.0, %v2329
      %v2421 = vsel %vm374, 0.0, %v2332
      %v2422 = vsel %vm374, 0.0, %v2335
      %v2423 = vsel %vm374, 0.0, %v2338
      %v2424 = vsel %vm374, 0.0, %v2341
      %v2425 = vsel %vm374, 0.0, %v2344
      %v2426 = vsel %vm374, 0.0, %v2347
      %v2427 = vsel %vm374, 0.0, %v2350
      %v2428 = vsel %vm374, 0.0, %v2353
      %v2429 = vsel %vm374, 0.0, %v2356
      %v2430 = vsel %vm374, 0.0, %v2359
      %v2431 = vsel %vm374, 0.0, %v2362
      %v2432 = vsel %vm374, 0.0, %v2365
      %v2433 = vsel %vm374, 0.0, %v2368
      %v2434 = vsel %vm374, %v2324, 0.0
      %v2435 = vsel %vm374, %v2327, 0.0
      %v2436 = vsel %vm374, %v2330, 0.0
      %v2437 = vsel %vm374, %v2333, 0.0
      %v2438 = vsel %vm374, %v2336, 0.0
      %v2439 = vsel %vm374, %v2339, 0.0
      %v2440 = vsel %vm374, %v2342, 0.0
      %v2441 = vsel %vm374, %v2345, 0.0
      %v2442 = vsel %vm374, %v2348, 0.0
      %v2443 = vsel %vm374, %v2351, 0.0
      %v2444 = vsel %vm374, %v2354, 0.0
      %v2445 = vsel %vm374, %v2357, 0.0
      %v2446 = vsel %vm374, %v2360, 0.0
      %v2447 = vsel %vm374, %v2363, 0.0
      %v2448 = vsel %vm374, %v2366, 0.0
      %v2449 = vsel %vm374, %v2369, 0.0
      %v2480 = vrot.slane %v2418, 1
      %v2481 = vrot.slane %v2325, 1
      %v2482 = vsel %vm540, %v2480, %v2481
      %v2483 = vrot.slane %v2434, 1
      %v2484 = vsel %vm540, %v2481, %v2483
      %v2485 = vrot.slane %v2419, 1
      %v2486 = vrot.slane %v2328, 1
      %v2487 = vsel %vm540, %v2485, %v2486
      %v2488 = vrot.slane %v2435, 1
      %v2489 = vsel %vm540, %v2486, %v2488
      %v2490 = vrot.slane %v2420, 1
      %v2491 = vrot.slane %v2331, 1
      %v2492 = vsel %vm540, %v2490, %v2491
      %v2493 = vrot.slane %v2436, 1
      %v2494 = vsel %vm540, %v2491, %v2493
      %v2495 = vrot.slane %v2421, 1
      %v2496 = vrot.slane %v2334, 1
      %v2497 = vsel %vm540, %v2495, %v2496
      %v2498 = vrot.slane %v2437, 1
      %v2499 = vsel %vm540, %v2496, %v2498
      %v2500 = vrot.slane %v2422, 1
      %v2501 = vrot.slane %v2337, 1
      %v2502 = vsel %vm540, %v2500, %v2501
      %v2503 = vrot.slane %v2438, 1
      %v2504 = vsel %vm540, %v2501, %v2503
      %v2505 = vrot.slane %v2423, 1
      %v2506 = vrot.slane %v2340, 1
      %v2507 = vsel %vm540, %v2505, %v2506
      %v2508 = vrot.slane %v2439, 1
      %v2509 = vsel %vm540, %v2506, %v2508
      %v2510 = vrot.slane %v2424, 1
      %v2511 = vrot.slane %v2343, 1
      %v2512 = vsel %vm540, %v2510, %v2511
      %v2513 = vrot.slane %v2440, 1
      %v2514 = vsel %vm540, %v2511, %v2513
      %v2515 = vrot.slane %v2425, 1
      %v2516 = vrot.slane %v2346, 1
      %v2517 = vsel %vm540, %v2515, %v2516
      %v2518 = vrot.slane %v2441, 1
      %v2519 = vsel %vm540, %v2516, %v2518
      %v2520 = vrot.slane %v2426, 1
      %v2521 = vrot.slane %v2349, 1
      %v2522 = vsel %vm540, %v2520, %v2521
      %v2523 = vrot.slane %v2442, 1
      %v2524 = vsel %vm540, %v2521, %v2523
      %v2525 = vrot.slane %v2427, 1
      %v2526 = vrot.slane %v2352, 1
      %v2527 = vsel %vm540, %v2525, %v2526
      %v2528 = vrot.slane %v2443, 1
      %v2529 = vsel %vm540, %v2526, %v2528
      %v2530 = vrot.slane %v2428, 1
      %v2531 = vrot.slane %v2355, 1
      %v2532 = vsel %vm540, %v2530, %v2531
      %v2533 = vrot.slane %v2444, 1
      %v2534 = vsel %vm540, %v2531, %v2533
      %v2535 = vrot.slane %v2429, 1
      %v2536 = vrot.slane %v2358, 1
      %v2537 = vsel %vm540, %v2535, %v2536
      %v2538 = vrot.slane %v2445, 1
      %v2539 = vsel %vm540, %v2536, %v2538
      %v2540 = vrot.slane %v2430, 1
      %v2541 = vrot.slane %v2361, 1
      %v2542 = vsel %vm540, %v2540, %v2541
      %v2543 = vrot.slane %v2446, 1
      %v2544 = vsel %vm540, %v2541, %v2543
      %v2545 = vrot.slane %v2431, 1
      %v2546 = vrot.slane %v2364, 1
      %v2547 = vsel %vm540, %v2545, %v2546
      %v2548 = vrot.slane %v2447, 1
      %v2549 = vsel %vm540, %v2546, %v2548
      %v2550 = vrot.slane %v2432, 1
      %v2551 = vrot.slane %v2367, 1
      %v2552 = vsel %vm540, %v2550, %v2551
      %v2553 = vrot.slane %v2448, 1
      %v2554 = vsel %vm540, %v2551, %v2553
      %v2555 = vrot.slane %v2418, 2
      %v2556 = vrot.slane %v2325, 2
      %v2557 = vsel %vm621, %v2555, %v2556
      %v2558 = vrot.slane %v2434, 2
      %v2559 = vsel %vm621, %v2556, %v2558
      %v2560 = vrot.slane %v2419, 2
      %v2561 = vrot.slane %v2328, 2
      %v2562 = vsel %vm621, %v2560, %v2561
      %v2563 = vrot.slane %v2435, 2
      %v2564 = vsel %vm621, %v2561, %v2563
      %v2565 = vrot.slane %v2420, 2
      %v2566 = vrot.slane %v2331, 2
      %v2567 = vsel %vm621, %v2565, %v2566
      %v2568 = vrot.slane %v2436, 2
      %v2569 = vsel %vm621, %v2566, %v2568
      %v2570 = vrot.slane %v2421, 2
      %v2571 = vrot.slane %v2334, 2
      %v2572 = vsel %vm621, %v2570, %v2571
      %v2573 = vrot.slane %v2437, 2
      %v2574 = vsel %vm621, %v2571, %v2573
      %v2575 = vrot.slane %v2422, 2
      %v2576 = vrot.slane %v2337, 2
      %v2577 = vsel %vm621, %v2575, %v2576
      %v2578 = vrot.slane %v2438, 2
      %v2579 = vsel %vm621, %v2576, %v2578
      %v2580 = vrot.slane %v2423, 2
      %v2581 = vrot.slane %v2340, 2
      %v2582 = vsel %vm621, %v2580, %v2581
      %v2583 = vrot.slane %v2439, 2
      %v2584 = vsel %vm621, %v2581, %v2583
      %v2585 = vrot.slane %v2424, 2
      %v2586 = vrot.slane %v2343, 2
      %v2587 = vsel %vm621, %v2585, %v2586
      %v2588 = vrot.slane %v2440, 2
      %v2589 = vsel %vm621, %v2586, %v2588
      %v2590 = vrot.slane %v2425, 2
      %v2591 = vrot.slane %v2346, 2
      %v2592 = vsel %vm621, %v2590, %v2591
      %v2593 = vrot.slane %v2441, 2
      %v2594 = vsel %vm621, %v2591, %v2593
      %v2595 = vrot.slane %v2426, 2
      %v2596 = vrot.slane %v2349, 2
      %v2597 = vsel %vm621, %v2595, %v2596
      %v2598 = vrot.slane %v2442, 2
      %v2599 = vsel %vm621, %v2596, %v2598
      %v2600 = vrot.slane %v2427, 2
      %v2601 = vrot.slane %v2352, 2
      %v2602 = vsel %vm621, %v2600, %v2601
      %v2603 = vrot.slane %v2443, 2
      %v2604 = vsel %vm621, %v2601, %v2603
      %v2605 = vrot.slane %v2428, 2
      %v2606 = vrot.slane %v2355, 2
      %v2607 = vsel %vm621, %v2605, %v2606
      %v2608 = vrot.slane %v2444, 2
      %v2609 = vsel %vm621, %v2606, %v2608
      %v2610 = vrot.slane %v2429, 2
      %v2611 = vrot.slane %v2358, 2
      %v2612 = vsel %vm621, %v2610, %v2611
      %v2613 = vrot.slane %v2445, 2
      %v2614 = vsel %vm621, %v2611, %v2613
      %v2615 = vrot.slane %v2430, 2
      %v2616 = vrot.slane %v2361, 2
      %v2617 = vsel %vm621, %v2615, %v2616
      %v2618 = vrot.slane %v2446, 2
      %v2619 = vsel %vm621, %v2616, %v2618
      %v2620 = vrot.slane %v2431, 2
      %v2621 = vrot.slane %v2364, 2
      %v2622 = vsel %vm621, %v2620, %v2621
      %v2623 = vrot.slane %v2447, 2
      %v2624 = vsel %vm621, %v2621, %v2623
      %v2625 = vrot.slane %v2432, 2
      %v2626 = vrot.slane %v2367, 2
      %v2627 = vsel %vm621, %v2625, %v2626
      %v2628 = vrot.slane %v2448, 2
      %v2629 = vsel %vm621, %v2626, %v2628
      %v2632 = vrot.slane %v2433, 1
      %v2633 = vrot.slane %v2370, 1
      %v2634 = vsel %vm540, %v2632, %v2633
      %v2635 = vrot.slane %v2449, 1
      %v2636 = vsel %vm540, %v2633, %v2635
      %v2637 = vrot.slane %v2433, 2
      %v2638 = vrot.slane %v2370, 2
      %v2639 = vsel %vm621, %v2637, %v2638
      %v2640 = vrot.slane %v2449, 2
      %v2641 = vsel %vm621, %v2638, %v2640
      %2642 = vrot.lane.b32.xlu0 %v543, 8
      %v2643 = vpop.permute.xlu0 %2642
      %2644 = vrot.lane.b32.xlu0 %v545, 8
      %v2645 = vpop.permute.xlu0 %2644
      %2646 = vrot.lane.b32.xlu0 %v2482, 8
      %v2647 = vpop.permute.xlu0 %2646
      %2648 = vrot.lane.b32.xlu0 %v2484, 8
      %v2649 = vpop.permute.xlu0 %2648
      %2650 = vrot.lane.b32.xlu0 %v2487, 8
      %v2651 = vpop.permute.xlu0 %2650
      %2652 = vrot.lane.b32.xlu0 %v2489, 8
      %v2653 = vpop.permute.xlu0 %2652
      %2654 = vrot.lane.b32.xlu0 %v2492, 8
      %v2655 = vpop.permute.xlu0 %2654
      %2656 = vrot.lane.b32.xlu0 %v2494, 8
      %v2657 = vpop.permute.xlu0 %2656
      %2658 = vrot.lane.b32.xlu0 %v2497, 8
      %v2659 = vpop.permute.xlu0 %2658
      %2660 = vrot.lane.b32.xlu0 %v2499, 8
      %v2661 = vpop.permute.xlu0 %2660
      %2662 = vrot.lane.b32.xlu0 %v2502, 8
      %v2663 = vpop.permute.xlu0 %2662
      %2664 = vrot.lane.b32.xlu0 %v2504, 8
      %v2665 = vpop.permute.xlu0 %2664
      %2666 = vrot.lane.b32.xlu0 %v2507, 8
      %v2667 = vpop.permute.xlu0 %2666
      %2668 = vrot.lane.b32.xlu0 %v2509, 8
      %v2669 = vpop.permute.xlu0 %2668
      %2670 = vrot.lane.b32.xlu0 %v2512, 8
      %v2671 = vpop.permute.xlu0 %2670
      %2672 = vrot.lane.b32.xlu0 %v2514, 8
      %v2673 = vpop.permute.xlu0 %2672
      %2674 = vrot.lane.b32.xlu0 %v2517, 8
      %v2675 = vpop.permute.xlu0 %2674
      %2676 = vrot.lane.b32.xlu0 %v2519, 8
      %v2677 = vpop.permute.xlu0 %2676
      %2678 = vrot.lane.b32.xlu0 %v2522, 8
      %v2679 = vpop.permute.xlu0 %2678
      %2680 = vrot.lane.b32.xlu0 %v2524, 8
      %v2681 = vpop.permute.xlu0 %2680
      %2682 = vrot.lane.b32.xlu0 %v2527, 8
      %v2683 = vpop.permute.xlu0 %2682
      %2684 = vrot.lane.b32.xlu0 %v2529, 8
      %v2685 = vpop.permute.xlu0 %2684
      %2686 = vrot.lane.b32.xlu0 %v2532, 8
      %v2687 = vpop.permute.xlu0 %2686
      %2688 = vrot.lane.b32.xlu0 %v2534, 8
      %v2689 = vpop.permute.xlu0 %2688
      %2690 = vrot.lane.b32.xlu0 %v2537, 8
      %v2691 = vpop.permute.xlu0 %2690
      %2692 = vrot.lane.b32.xlu0 %v2539, 8
      %v2693 = vpop.permute.xlu0 %2692
      %2694 = vrot.lane.b32.xlu0 %v2542, 8
      %v2695 = vpop.permute.xlu0 %2694
      %2696 = vrot.lane.b32.xlu0 %v2544, 8
      %v2697 = vpop.permute.xlu0 %2696
      %2698 = vrot.lane.b32.xlu0 %v2547, 8
      %v2699 = vpop.permute.xlu0 %2698
      %2700 = vrot.lane.b32.xlu0 %v2549, 8
      %v2701 = vpop.permute.xlu0 %2700
      %2702 = vrot.lane.b32.xlu0 %v2552, 8
      %v2703 = vpop.permute.xlu0 %2702
      %2704 = vrot.lane.b32.xlu0 %v2554, 8
      %v2705 = vpop.permute.xlu0 %2704
      %2738 = vrot.lane.b32.xlu0 %v624, 16
      %v2739 = vpop.permute.xlu0 %2738
      %2740 = vrot.lane.b32.xlu0 %v626, 16
      %v2741 = vpop.permute.xlu0 %2740
      %2742 = vrot.lane.b32.xlu0 %v2557, 16
      %v2743 = vpop.permute.xlu0 %2742
      %2744 = vrot.lane.b32.xlu0 %v2559, 16
      %v2745 = vpop.permute.xlu0 %2744
      %2746 = vrot.lane.b32.xlu0 %v2562, 16
      %v2747 = vpop.permute.xlu0 %2746
      %2748 = vrot.lane.b32.xlu0 %v2564, 16
      %v2749 = vpop.permute.xlu0 %2748
      %2750 = vrot.lane.b32.xlu0 %v2567, 16
      %v2751 = vpop.permute.xlu0 %2750
      %2752 = vrot.lane.b32.xlu0 %v2569, 16
      %v2753 = vpop.permute.xlu0 %2752
      %2754 = vrot.lane.b32.xlu0 %v2572, 16
      %v2755 = vpop.permute.xlu0 %2754
      %2756 = vrot.lane.b32.xlu0 %v2574, 16
      %v2757 = vpop.permute.xlu0 %2756
      %2758 = vrot.lane.b32.xlu0 %v2577, 16
      %v2759 = vpop.permute.xlu0 %2758
      %2760 = vrot.lane.b32.xlu0 %v2579, 16
      %v2761 = vpop.permute.xlu0 %2760
      %2762 = vrot.lane.b32.xlu0 %v2582, 16
      %v2763 = vpop.permute.xlu0 %2762
      %2764 = vrot.lane.b32.xlu0 %v2584, 16
      %v2765 = vpop.permute.xlu0 %2764
      %2766 = vrot.lane.b32.xlu0 %v2587, 16
      %v2767 = vpop.permute.xlu0 %2766
      %2768 = vrot.lane.b32.xlu0 %v2589, 16
      %v2769 = vpop.permute.xlu0 %2768
      %2770 = vrot.lane.b32.xlu0 %v2592, 16
      %v2771 = vpop.permute.xlu0 %2770
      %2772 = vrot.lane.b32.xlu0 %v2594, 16
      %v2773 = vpop.permute.xlu0 %2772
      %2774 = vrot.lane.b32.xlu0 %v2597, 16
      %v2775 = vpop.permute.xlu0 %2774
      %2776 = vrot.lane.b32.xlu0 %v2599, 16
      %v2777 = vpop.permute.xlu0 %2776
      %2778 = vrot.lane.b32.xlu0 %v2602, 16
      %v2779 = vpop.permute.xlu0 %2778
      %2780 = vrot.lane.b32.xlu0 %v2604, 16
      %v2781 = vpop.permute.xlu0 %2780
      %2782 = vrot.lane.b32.xlu0 %v2607, 16
      %v2783 = vpop.permute.xlu0 %2782
      %2784 = vrot.lane.b32.xlu0 %v2609, 16
      %v2785 = vpop.permute.xlu0 %2784
      %2786 = vrot.lane.b32.xlu0 %v2612, 16
      %v2787 = vpop.permute.xlu0 %2786
      %2788 = vrot.lane.b32.xlu0 %v2614, 16
      %v2789 = vpop.permute.xlu0 %2788
      %2790 = vrot.lane.b32.xlu0 %v2617, 16
      %v2791 = vpop.permute.xlu0 %2790
      %2792 = vrot.lane.b32.xlu0 %v2619, 16
      %v2793 = vpop.permute.xlu0 %2792
      %2794 = vrot.lane.b32.xlu0 %v2622, 16
      %v2795 = vpop.permute.xlu0 %2794
      %2796 = vrot.lane.b32.xlu0 %v2624, 16
      %v2797 = vpop.permute.xlu0 %2796
      %2798 = vrot.lane.b32.xlu0 %v2627, 16
      %v2799 = vpop.permute.xlu0 %2798
      %2800 = vrot.lane.b32.xlu0 %v2629, 16
      %v2801 = vpop.permute.xlu0 %2800
      %2834 = vrot.lane.b32.xlu0 %v2418, 24
      %v2835 = vpop.permute.xlu0 %2834
      %2836 = vrot.lane.b32.xlu0 %v2325, 24
      %v2837 = vpop.permute.xlu0 %2836
      %2838 = vrot.lane.b32.xlu0 %v2419, 24
      %v2839 = vpop.permute.xlu0 %2838
      %2840 = vrot.lane.b32.xlu0 %v2328, 24
      %v2841 = vpop.permute.xlu0 %2840
      %2842 = vrot.lane.b32.xlu0 %v2420, 24
      %v2843 = vpop.permute.xlu0 %2842
      %2844 = vrot.lane.b32.xlu0 %v2331, 24
      %v2845 = vpop.permute.xlu0 %2844
      %2846 = vrot.lane.b32.xlu0 %v2421, 24
      %v2847 = vpop.permute.xlu0 %2846
      %2848 = vrot.lane.b32.xlu0 %v2334, 24
      %v2849 = vpop.permute.xlu0 %2848
      %2850 = vrot.lane.b32.xlu0 %v2422, 24
      %v2851 = vpop.permute.xlu0 %2850
      %2852 = vrot.lane.b32.xlu0 %v2337, 24
      %v2853 = vpop.permute.xlu0 %2852
      %2854 = vrot.lane.b32.xlu0 %v2423, 24
      %v2855 = vpop.permute.xlu0 %2854
      %2856 = vrot.lane.b32.xlu0 %v2340, 24
      %v2857 = vpop.permute.xlu0 %2856
      %2858 = vrot.lane.b32.xlu0 %v2424, 24
      %v2859 = vpop.permute.xlu0 %2858
      %2860 = vrot.lane.b32.xlu0 %v2343, 24
      %v2861 = vpop.permute.xlu0 %2860
      %2862 = vrot.lane.b32.xlu0 %v2425, 24
      %v2863 = vpop.permute.xlu0 %2862
      %2864 = vrot.lane.b32.xlu0 %v2346, 24
      %v2865 = vpop.permute.xlu0 %2864
      %2866 = vrot.lane.b32.xlu0 %v2426, 24
      %v2867 = vpop.permute.xlu0 %2866
      %2868 = vrot.lane.b32.xlu0 %v2349, 24
      %v2869 = vpop.permute.xlu0 %2868
      %2870 = vrot.lane.b32.xlu0 %v2427, 24
      %v2871 = vpop.permute.xlu0 %2870
      %2872 = vrot.lane.b32.xlu0 %v2352, 24
      %v2873 = vpop.permute.xlu0 %2872
      %2874 = vrot.lane.b32.xlu0 %v2428, 24
      %v2875 = vpop.permute.xlu0 %2874
      %2876 = vrot.lane.b32.xlu0 %v2355, 24
      %v2877 = vpop.permute.xlu0 %2876
      %2878 = vrot.lane.b32.xlu0 %v2429, 24
      %v2879 = vpop.permute.xlu0 %2878
      %2880 = vrot.lane.b32.xlu0 %v2358, 24
      %v2881 = vpop.permute.xlu0 %2880
      %2882 = vrot.lane.b32.xlu0 %v2430, 24
      %v2883 = vpop.permute.xlu0 %2882
      %2884 = vrot.lane.b32.xlu0 %v2361, 24
      %v2885 = vpop.permute.xlu0 %2884
      %2886 = vrot.lane.b32.xlu0 %v2431, 24
      %v2887 = vpop.permute.xlu0 %2886
      %2888 = vrot.lane.b32.xlu0 %v2364, 24
      %v2889 = vpop.permute.xlu0 %2888
      %2890 = vrot.lane.b32.xlu0 %v2432, 24
      %v2891 = vpop.permute.xlu0 %2890
      %2892 = vrot.lane.b32.xlu0 %v2367, 24
      %v2893 = vpop.permute.xlu0 %2892
      %2894 = vrot.lane.b32.xlu0 %v2433, 24
      %v2895 = vpop.permute.xlu0 %2894
      %2896 = vrot.lane.b32.xlu0 %v2370, 24
      %v2897 = vpop.permute.xlu0 %2896
      %2930 = vrot.lane.b32.xlu0 %v2482, 32
      %v2931 = vpop.permute.xlu0 %2930
      %2932 = vrot.lane.b32.xlu0 %v2484, 32
      %v2933 = vpop.permute.xlu0 %2932
      %2934 = vrot.lane.b32.xlu0 %v2487, 32
      %v2935 = vpop.permute.xlu0 %2934
      %2936 = vrot.lane.b32.xlu0 %v2489, 32
      %v2937 = vpop.permute.xlu0 %2936
      %2938 = vrot.lane.b32.xlu0 %v2492, 32
      %v2939 = vpop.permute.xlu0 %2938
      %2940 = vrot.lane.b32.xlu0 %v2494, 32
      %v2941 = vpop.permute.xlu0 %2940
      %2942 = vrot.lane.b32.xlu0 %v2497, 32
      %v2943 = vpop.permute.xlu0 %2942
      %2944 = vrot.lane.b32.xlu0 %v2499, 32
      %v2945 = vpop.permute.xlu0 %2944
      %2946 = vrot.lane.b32.xlu0 %v2502, 32
      %v2947 = vpop.permute.xlu0 %2946
      %2948 = vrot.lane.b32.xlu0 %v2504, 32
      %v2949 = vpop.permute.xlu0 %2948
      %2950 = vrot.lane.b32.xlu0 %v2507, 32
      %v2951 = vpop.permute.xlu0 %2950
      %2952 = vrot.lane.b32.xlu0 %v2509, 32
      %v2953 = vpop.permute.xlu0 %2952
      %2954 = vrot.lane.b32.xlu0 %v2512, 32
      %v2955 = vpop.permute.xlu0 %2954
      %2956 = vrot.lane.b32.xlu0 %v2514, 32
      %v2957 = vpop.permute.xlu0 %2956
      %2958 = vrot.lane.b32.xlu0 %v2517, 32
      %v2959 = vpop.permute.xlu0 %2958
      %2960 = vrot.lane.b32.xlu0 %v2519, 32
      %v2961 = vpop.permute.xlu0 %2960
      %2962 = vrot.lane.b32.xlu0 %v2522, 32
      %v2963 = vpop.permute.xlu0 %2962
      %2964 = vrot.lane.b32.xlu0 %v2524, 32
      %v2965 = vpop.permute.xlu0 %2964
      %2966 = vrot.lane.b32.xlu0 %v2527, 32
      %v2967 = vpop.permute.xlu0 %2966
      %2968 = vrot.lane.b32.xlu0 %v2529, 32
      %v2969 = vpop.permute.xlu0 %2968
      %2970 = vrot.lane.b32.xlu0 %v2532, 32
      %v2971 = vpop.permute.xlu0 %2970
      %2972 = vrot.lane.b32.xlu0 %v2534, 32
      %v2973 = vpop.permute.xlu0 %2972
      %2974 = vrot.lane.b32.xlu0 %v2537, 32
      %v2975 = vpop.permute.xlu0 %2974
      %2976 = vrot.lane.b32.xlu0 %v2539, 32
      %v2977 = vpop.permute.xlu0 %2976
      %2978 = vrot.lane.b32.xlu0 %v2542, 32
      %v2979 = vpop.permute.xlu0 %2978
      %2980 = vrot.lane.b32.xlu0 %v2544, 32
      %v2981 = vpop.permute.xlu0 %2980
      %2982 = vrot.lane.b32.xlu0 %v2547, 32
      %v2983 = vpop.permute.xlu0 %2982
      %2984 = vrot.lane.b32.xlu0 %v2549, 32
      %v2985 = vpop.permute.xlu0 %2984
      %2986 = vrot.lane.b32.xlu0 %v2552, 32
      %v2987 = vpop.permute.xlu0 %2986
      %2988 = vrot.lane.b32.xlu0 %v2554, 32
      %v2989 = vpop.permute.xlu0 %2988
      %2990 = vrot.lane.b32.xlu0 %v2634, 32
      %v2991 = vpop.permute.xlu0 %2990
      %2992 = vrot.lane.b32.xlu0 %v2636, 32
      %v2993 = vpop.permute.xlu0 %2992
      %3026 = vrot.lane.b32.xlu0 %v2557, 40
      %v3027 = vpop.permute.xlu0 %3026
      %3028 = vrot.lane.b32.xlu0 %v2559, 40
      %v3029 = vpop.permute.xlu0 %3028
      %3030 = vrot.lane.b32.xlu0 %v2562, 40
      %v3031 = vpop.permute.xlu0 %3030
      %3032 = vrot.lane.b32.xlu0 %v2564, 40
      %v3033 = vpop.permute.xlu0 %3032
      %3034 = vrot.lane.b32.xlu0 %v2567, 40
      %v3035 = vpop.permute.xlu0 %3034
      %3036 = vrot.lane.b32.xlu0 %v2569, 40
      %v3037 = vpop.permute.xlu0 %3036
      %3038 = vrot.lane.b32.xlu0 %v2572, 40
      %v3039 = vpop.permute.xlu0 %3038
      %3040 = vrot.lane.b32.xlu0 %v2574, 40
      %v3041 = vpop.permute.xlu0 %3040
      %3042 = vrot.lane.b32.xlu0 %v2577, 40
      %v3043 = vpop.permute.xlu0 %3042
      %3044 = vrot.lane.b32.xlu0 %v2579, 40
      %v3045 = vpop.permute.xlu0 %3044
      %3046 = vrot.lane.b32.xlu0 %v2582, 40
      %v3047 = vpop.permute.xlu0 %3046
      %3048 = vrot.lane.b32.xlu0 %v2584, 40
      %v3049 = vpop.permute.xlu0 %3048
      %3050 = vrot.lane.b32.xlu0 %v2587, 40
      %v3051 = vpop.permute.xlu0 %3050
      %3052 = vrot.lane.b32.xlu0 %v2589, 40
      %v3053 = vpop.permute.xlu0 %3052
      %3054 = vrot.lane.b32.xlu0 %v2592, 40
      %v3055 = vpop.permute.xlu0 %3054
      %3056 = vrot.lane.b32.xlu0 %v2594, 40
      %v3057 = vpop.permute.xlu0 %3056
      %3058 = vrot.lane.b32.xlu0 %v2597, 40
      %v3059 = vpop.permute.xlu0 %3058
      %3060 = vrot.lane.b32.xlu0 %v2599, 40
      %v3061 = vpop.permute.xlu0 %3060
      %3062 = vrot.lane.b32.xlu0 %v2602, 40
      %v3063 = vpop.permute.xlu0 %3062
      %3064 = vrot.lane.b32.xlu0 %v2604, 40
      %v3065 = vpop.permute.xlu0 %3064
      %3066 = vrot.lane.b32.xlu0 %v2607, 40
      %v3067 = vpop.permute.xlu0 %3066
      %3068 = vrot.lane.b32.xlu0 %v2609, 40
      %v3069 = vpop.permute.xlu0 %3068
      %3070 = vrot.lane.b32.xlu0 %v2612, 40
      %v3071 = vpop.permute.xlu0 %3070
      %3072 = vrot.lane.b32.xlu0 %v2614, 40
      %v3073 = vpop.permute.xlu0 %3072
      %3074 = vrot.lane.b32.xlu0 %v2617, 40
      %v3075 = vpop.permute.xlu0 %3074
      %3076 = vrot.lane.b32.xlu0 %v2619, 40
      %v3077 = vpop.permute.xlu0 %3076
      %3078 = vrot.lane.b32.xlu0 %v2622, 40
      %v3079 = vpop.permute.xlu0 %3078
      %3080 = vrot.lane.b32.xlu0 %v2624, 40
      %v3081 = vpop.permute.xlu0 %3080
      %3082 = vrot.lane.b32.xlu0 %v2627, 40
      %v3083 = vpop.permute.xlu0 %3082
      %3084 = vrot.lane.b32.xlu0 %v2629, 40
      %v3085 = vpop.permute.xlu0 %3084
      %3086 = vrot.lane.b32.xlu0 %v2639, 40
      %v3087 = vpop.permute.xlu0 %3086
      %3088 = vrot.lane.b32.xlu0 %v2641, 40
      %v3089 = vpop.permute.xlu0 %3088
      %3122 = vrot.lane.b32.xlu0 %v2419, 48
      %v3123 = vpop.permute.xlu0 %3122
      %3124 = vrot.lane.b32.xlu0 %v2328, 48
      %v3125 = vpop.permute.xlu0 %3124
      %3126 = vrot.lane.b32.xlu0 %v2420, 48
      %v3127 = vpop.permute.xlu0 %3126
      %3128 = vrot.lane.b32.xlu0 %v2331, 48
      %v3129 = vpop.permute.xlu0 %3128
      %3130 = vrot.lane.b32.xlu0 %v2421, 48
      %v3131 = vpop.permute.xlu0 %3130
      %3132 = vrot.lane.b32.xlu0 %v2334, 48
      %v3133 = vpop.permute.xlu0 %3132
      %3134 = vrot.lane.b32.xlu0 %v2422, 48
      %v3135 = vpop.permute.xlu0 %3134
      %3136 = vrot.lane.b32.xlu0 %v2337, 48
      %v3137 = vpop.permute.xlu0 %3136
      %3138 = vrot.lane.b32.xlu0 %v2423, 48
      %v3139 = vpop.permute.xlu0 %3138
      %3140 = vrot.lane.b32.xlu0 %v2340, 48
      %v3141 = vpop.permute.xlu0 %3140
      %3142 = vrot.lane.b32.xlu0 %v2424, 48
      %v3143 = vpop.permute.xlu0 %3142
      %3144 = vrot.lane.b32.xlu0 %v2343, 48
      %v3145 = vpop.permute.xlu0 %3144
      %3146 = vrot.lane.b32.xlu0 %v2425, 48
      %v3147 = vpop.permute.xlu0 %3146
      %3148 = vrot.lane.b32.xlu0 %v2346, 48
      %v3149 = vpop.permute.xlu0 %3148
      %3150 = vrot.lane.b32.xlu0 %v2426, 48
      %v3151 = vpop.permute.xlu0 %3150
      %3152 = vrot.lane.b32.xlu0 %v2349, 48
      %v3153 = vpop.permute.xlu0 %3152
      %3154 = vrot.lane.b32.xlu0 %v2427, 48
      %v3155 = vpop.permute.xlu0 %3154
      %3156 = vrot.lane.b32.xlu0 %v2352, 48
      %v3157 = vpop.permute.xlu0 %3156
      %3158 = vrot.lane.b32.xlu0 %v2428, 48
      %v3159 = vpop.permute.xlu0 %3158
      %3160 = vrot.lane.b32.xlu0 %v2355, 48
      %v3161 = vpop.permute.xlu0 %3160
      %3162 = vrot.lane.b32.xlu0 %v2429, 48
      %v3163 = vpop.permute.xlu0 %3162
      %3164 = vrot.lane.b32.xlu0 %v2358, 48
      %v3165 = vpop.permute.xlu0 %3164
      %3166 = vrot.lane.b32.xlu0 %v2430, 48
      %v3167 = vpop.permute.xlu0 %3166
      %3168 = vrot.lane.b32.xlu0 %v2361, 48
      %v3169 = vpop.permute.xlu0 %3168
      %3170 = vrot.lane.b32.xlu0 %v2431, 48
      %v3171 = vpop.permute.xlu0 %3170
      %3172 = vrot.lane.b32.xlu0 %v2364, 48
      %v3173 = vpop.permute.xlu0 %3172
      %3174 = vrot.lane.b32.xlu0 %v2432, 48
      %v3175 = vpop.permute.xlu0 %3174
      %3176 = vrot.lane.b32.xlu0 %v2367, 48
      %v3177 = vpop.permute.xlu0 %3176
      %3178 = vrot.lane.b32.xlu0 %v2433, 48
      %v3179 = vpop.permute.xlu0 %3178
      %3180 = vrot.lane.b32.xlu0 %v2370, 48
      %v3181 = vpop.permute.xlu0 %3180
      %3182 = vrot.lane.b32.xlu0 %v474, 48
      %v3183 = vpop.permute.xlu0 %3182
      %3184 = vrot.lane.b32.xlu0 %v376, 48
      %v3185 = vpop.permute.xlu0 %3184
      %3218 = vrot.lane.b32.xlu0 %v2487, 56
      %v3219 = vpop.permute.xlu0 %3218
      %3220 = vrot.lane.b32.xlu0 %v2489, 56
      %v3221 = vpop.permute.xlu0 %3220
      %3222 = vrot.lane.b32.xlu0 %v2492, 56
      %v3223 = vpop.permute.xlu0 %3222
      %3224 = vrot.lane.b32.xlu0 %v2494, 56
      %v3225 = vpop.permute.xlu0 %3224
      %3226 = vrot.lane.b32.xlu0 %v2497, 56
      %v3227 = vpop.permute.xlu0 %3226
      %3228 = vrot.lane.b32.xlu0 %v2499, 56
      %v3229 = vpop.permute.xlu0 %3228
      %3230 = vrot.lane.b32.xlu0 %v2502, 56
      %v3231 = vpop.permute.xlu0 %3230
      %3232 = vrot.lane.b32.xlu0 %v2504, 56
      %v3233 = vpop.permute.xlu0 %3232
      %3234 = vrot.lane.b32.xlu0 %v2507, 56
      %v3235 = vpop.permute.xlu0 %3234
      %3236 = vrot.lane.b32.xlu0 %v2509, 56
      %v3237 = vpop.permute.xlu0 %3236
      %3238 = vrot.lane.b32.xlu0 %v2512, 56
      %v3239 = vpop.permute.xlu0 %3238
      %3240 = vrot.lane.b32.xlu0 %v2514, 56
      %v3241 = vpop.permute.xlu0 %3240
      %3242 = vrot.lane.b32.xlu0 %v2517, 56
      %v3243 = vpop.permute.xlu0 %3242
      %3244 = vrot.lane.b32.xlu0 %v2519, 56
      %v3245 = vpop.permute.xlu0 %3244
      %3246 = vrot.lane.b32.xlu0 %v2522, 56
      %v3247 = vpop.permute.xlu0 %3246
      %3248 = vrot.lane.b32.xlu0 %v2524, 56
      %v3249 = vpop.permute.xlu0 %3248
      %3250 = vrot.lane.b32.xlu0 %v2527, 56
      %v3251 = vpop.permute.xlu0 %3250
      %3252 = vrot.lane.b32.xlu0 %v2529, 56
      %v3253 = vpop.permute.xlu0 %3252
      %3254 = vrot.lane.b32.xlu0 %v2532, 56
      %v3255 = vpop.permute.xlu0 %3254
      %3256 = vrot.lane.b32.xlu0 %v2534, 56
      %v3257 = vpop.permute.xlu0 %3256
      %3258 = vrot.lane.b32.xlu0 %v2537, 56
      %v3259 = vpop.permute.xlu0 %3258
      %3260 = vrot.lane.b32.xlu0 %v2539, 56
      %v3261 = vpop.permute.xlu0 %3260
      %3262 = vrot.lane.b32.xlu0 %v2542, 56
      %v3263 = vpop.permute.xlu0 %3262
      %3264 = vrot.lane.b32.xlu0 %v2544, 56
      %v3265 = vpop.permute.xlu0 %3264
      %3266 = vrot.lane.b32.xlu0 %v2547, 56
      %v3267 = vpop.permute.xlu0 %3266
      %3268 = vrot.lane.b32.xlu0 %v2549, 56
      %v3269 = vpop.permute.xlu0 %3268
      %3270 = vrot.lane.b32.xlu0 %v2552, 56
      %v3271 = vpop.permute.xlu0 %3270
      %3272 = vrot.lane.b32.xlu0 %v2554, 56
      %v3273 = vpop.permute.xlu0 %3272
      %3274 = vrot.lane.b32.xlu0 %v2634, 56
      %v3275 = vpop.permute.xlu0 %3274
      %3276 = vrot.lane.b32.xlu0 %v2636, 56
      %v3277 = vpop.permute.xlu0 %3276
      %3278 = vrot.lane.b32.xlu0 %v543, 56
      %v3279 = vpop.permute.xlu0 %3278
      %3280 = vrot.lane.b32.xlu0 %v545, 56
      %v3281 = vpop.permute.xlu0 %3280
      %3314 = vrot.lane.b32.xlu0 %v2562, 64
      %v3315 = vpop.permute.xlu0 %3314
      %3316 = vrot.lane.b32.xlu0 %v2564, 64
      %v3317 = vpop.permute.xlu0 %3316
      %3318 = vrot.lane.b32.xlu0 %v2567, 64
      %v3319 = vpop.permute.xlu0 %3318
      %3320 = vrot.lane.b32.xlu0 %v2569, 64
      %v3321 = vpop.permute.xlu0 %3320
      %3322 = vrot.lane.b32.xlu0 %v2572, 64
      %v3323 = vpop.permute.xlu0 %3322
      %3324 = vrot.lane.b32.xlu0 %v2574, 64
      %v3325 = vpop.permute.xlu0 %3324
      %3326 = vrot.lane.b32.xlu0 %v2577, 64
      %v3327 = vpop.permute.xlu0 %3326
      %3328 = vrot.lane.b32.xlu0 %v2579, 64
      %v3329 = vpop.permute.xlu0 %3328
      %3330 = vrot.lane.b32.xlu0 %v2582, 64
      %v3331 = vpop.permute.xlu0 %3330
      %3332 = vrot.lane.b32.xlu0 %v2584, 64
      %v3333 = vpop.permute.xlu0 %3332
      %3334 = vrot.lane.b32.xlu0 %v2587, 64
      %v3335 = vpop.permute.xlu0 %3334
      %3336 = vrot.lane.b32.xlu0 %v2589, 64
      %v3337 = vpop.permute.xlu0 %3336
      %3338 = vrot.lane.b32.xlu0 %v2592, 64
      %v3339 = vpop.permute.xlu0 %3338
      %3340 = vrot.lane.b32.xlu0 %v2594, 64
      %v3341 = vpop.permute.xlu0 %3340
      %3342 = vrot.lane.b32.xlu0 %v2597, 64
      %v3343 = vpop.permute.xlu0 %3342
      %3344 = vrot.lane.b32.xlu0 %v2599, 64
      %v3345 = vpop.permute.xlu0 %3344
      %3346 = vrot.lane.b32.xlu0 %v2602, 64
      %v3347 = vpop.permute.xlu0 %3346
      %3348 = vrot.lane.b32.xlu0 %v2604, 64
      %v3349 = vpop.permute.xlu0 %3348
      %3350 = vrot.lane.b32.xlu0 %v2607, 64
      %v3351 = vpop.permute.xlu0 %3350
      %3352 = vrot.lane.b32.xlu0 %v2609, 64
      %v3353 = vpop.permute.xlu0 %3352
      %3354 = vrot.lane.b32.xlu0 %v2612, 64
      %v3355 = vpop.permute.xlu0 %3354
      %3356 = vrot.lane.b32.xlu0 %v2614, 64
      %v3357 = vpop.permute.xlu0 %3356
      %3358 = vrot.lane.b32.xlu0 %v2617, 64
      %v3359 = vpop.permute.xlu0 %3358
      %3360 = vrot.lane.b32.xlu0 %v2619, 64
      %v3361 = vpop.permute.xlu0 %3360
      %3362 = vrot.lane.b32.xlu0 %v2622, 64
      %v3363 = vpop.permute.xlu0 %3362
      %3364 = vrot.lane.b32.xlu0 %v2624, 64
      %v3365 = vpop.permute.xlu0 %3364
      %3366 = vrot.lane.b32.xlu0 %v2627, 64
      %v3367 = vpop.permute.xlu0 %3366
      %3368 = vrot.lane.b32.xlu0 %v2629, 64
      %v3369 = vpop.permute.xlu0 %3368
      %3370 = vrot.lane.b32.xlu0 %v2639, 64
      %v3371 = vpop.permute.xlu0 %3370
      %3372 = vrot.lane.b32.xlu0 %v2641, 64
      %v3373 = vpop.permute.xlu0 %3372
      %3374 = vrot.lane.b32.xlu0 %v624, 64
      %v3375 = vpop.permute.xlu0 %3374
      %3376 = vrot.lane.b32.xlu0 %v626, 64
      %v3377 = vpop.permute.xlu0 %3376
      %vm3410 = vcmask 64512
      %v3411 = vsel %vm3410, %v474, %v2643
      %v3412 = vsel %vm3410, %v376, %v2645
      %v3413 = vsel %vm3410, %v2418, %v2647
      %v3414 = vsel %vm3410, %v2325, %v2649
      %v3415 = vsel %vm3410, %v2419, %v2651
      %v3416 = vsel %vm3410, %v2328, %v2653
      %v3417 = vsel %vm3410, %v2420, %v2655
      %v3418 = vsel %vm3410, %v2331, %v2657
      %v3419 = vsel %vm3410, %v2421, %v2659
      %v3420 = vsel %vm3410, %v2334, %v2661
      %v3421 = vsel %vm3410, %v2422, %v2663
      %v3422 = vsel %vm3410, %v2337, %v2665
      %v3423 = vsel %vm3410, %v2423, %v2667
      %v3424 = vsel %vm3410, %v2340, %v2669
      %v3425 = vsel %vm3410, %v2424, %v2671
      %v3426 = vsel %vm3410, %v2343, %v2673
      %v3427 = vsel %vm3410, %v2425, %v2675
      %v3428 = vsel %vm3410, %v2346, %v2677
      %v3429 = vsel %vm3410, %v2426, %v2679
      %v3430 = vsel %vm3410, %v2349, %v2681
      %v3431 = vsel %vm3410, %v2427, %v2683
      %v3432 = vsel %vm3410, %v2352, %v2685
      %v3433 = vsel %vm3410, %v2428, %v2687
      %v3434 = vsel %vm3410, %v2355, %v2689
      %v3435 = vsel %vm3410, %v2429, %v2691
      %v3436 = vsel %vm3410, %v2358, %v2693
      %v3437 = vsel %vm3410, %v2430, %v2695
      %v3438 = vsel %vm3410, %v2361, %v2697
      %v3439 = vsel %vm3410, %v2431, %v2699
      %v3440 = vsel %vm3410, %v2364, %v2701
      %v3441 = vsel %vm3410, %v2432, %v2703
      %v3442 = vsel %vm3410, %v2367, %v2705
      %v3443 = vsel %vm2049, %v3411, %v2739
      %v3444 = vsel %vm2049, %v3412, %v2741
      %v3445 = vsel %vm2049, %v3413, %v2743
      %v3446 = vsel %vm2049, %v3414, %v2745
      %v3447 = vsel %vm2049, %v3415, %v2747
      %v3448 = vsel %vm2049, %v3416, %v2749
      %v3449 = vsel %vm2049, %v3417, %v2751
      %v3450 = vsel %vm2049, %v3418, %v2753
      %v3451 = vsel %vm2049, %v3419, %v2755
      %v3452 = vsel %vm2049, %v3420, %v2757
      %v3453 = vsel %vm2049, %v3421, %v2759
      %v3454 = vsel %vm2049, %v3422, %v2761
      %v3455 = vsel %vm2049, %v3423, %v2763
      %v3456 = vsel %vm2049, %v3424, %v2765
      %v3457 = vsel %vm2049, %v3425, %v2767
      %v3458 = vsel %vm2049, %v3426, %v2769
      %v3459 = vsel %vm2049, %v3427, %v2771
      %v3460 = vsel %vm2049, %v3428, %v2773
      %v3461 = vsel %vm2049, %v3429, %v2775
      %v3462 = vsel %vm2049, %v3430, %v2777
      %v3463 = vsel %vm2049, %v3431, %v2779
      %v3464 = vsel %vm2049, %v3432, %v2781
      %v3465 = vsel %vm2049, %v3433, %v2783
      %v3466 = vsel %vm2049, %v3434, %v2785
      %v3467 = vsel %vm2049, %v3435, %v2787
      %v3468 = vsel %vm2049, %v3436, %v2789
      %v3469 = vsel %vm2049, %v3437, %v2791
      %v3470 = vsel %vm2049, %v3438, %v2793
      %v3471 = vsel %vm2049, %v3439, %v2795
      %v3472 = vsel %vm2049, %v3440, %v2797
      %v3473 = vsel %vm2049, %v3441, %v2799
      %v3474 = vsel %vm2049, %v3442, %v2801
      %v3475 = vsel %vm1713, %v3443, %v2835
      %v3476 = vsel %vm1713, %v3444, %v2837
      %v3477 = vsel %vm1713, %v3445, %v2839
      %v3478 = vsel %vm1713, %v3446, %v2841
      %v3479 = vsel %vm1713, %v3447, %v2843
      %v3480 = vsel %vm1713, %v3448, %v2845
      %v3481 = vsel %vm1713, %v3449, %v2847
      %v3482 = vsel %vm1713, %v3450, %v2849
      %v3483 = vsel %vm1713, %v3451, %v2851
      %v3484 = vsel %vm1713, %v3452, %v2853
      %v3485 = vsel %vm1713, %v3453, %v2855
      %v3486 = vsel %vm1713, %v3454, %v2857
      %v3487 = vsel %vm1713, %v3455, %v2859
      %v3488 = vsel %vm1713, %v3456, %v2861
      %v3489 = vsel %vm1713, %v3457, %v2863
      %v3490 = vsel %vm1713, %v3458, %v2865
      %v3491 = vsel %vm1713, %v3459, %v2867
      %v3492 = vsel %vm1713, %v3460, %v2869
      %v3493 = vsel %vm1713, %v3461, %v2871
      %v3494 = vsel %vm1713, %v3462, %v2873
      %v3495 = vsel %vm1713, %v3463, %v2875
      %v3496 = vsel %vm1713, %v3464, %v2877
      %v3497 = vsel %vm1713, %v3465, %v2879
      %v3498 = vsel %vm1713, %v3466, %v2881
      %v3499 = vsel %vm1713, %v3467, %v2883
      %v3500 = vsel %vm1713, %v3468, %v2885
      %v3501 = vsel %vm1713, %v3469, %v2887
      %v3502 = vsel %vm1713, %v3470, %v2889
      %v3503 = vsel %vm1713, %v3471, %v2891
      %v3504 = vsel %vm1713, %v3472, %v2893
      %v3505 = vsel %vm1713, %v3473, %v2895
      %v3506 = vsel %vm1713, %v3474, %v2897
      %vm3507 = vcmask 261120
      %v3508 = vsel %vm3507, %v3475, %v2931
      %v3509 = vsel %vm3507, %v3476, %v2933
      %v3510 = vsel %vm3507, %v3477, %v2935
      %v3511 = vsel %vm3507, %v3478, %v2937
      %v3512 = vsel %vm3507, %v3479, %v2939
      %v3513 = vsel %vm3507, %v3480, %v2941
      %v3514 = vsel %vm3507, %v3481, %v2943
      %v3515 = vsel %vm3507, %v3482, %v2945
      %v3516 = vsel %vm3507, %v3483, %v2947
      %v3517 = vsel %vm3507, %v3484, %v2949
      %v3518 = vsel %vm3507, %v3485, %v2951
      %v3519 = vsel %vm3507, %v3486, %v2953
      %v3520 = vsel %vm3507, %v3487, %v2955
      %v3521 = vsel %vm3507, %v3488, %v2957
      %v3522 = vsel %vm3507, %v3489, %v2959
      %v3523 = vsel %vm3507, %v3490, %v2961
      %v3524 = vsel %vm3507, %v3491, %v2963
      %v3525 = vsel %vm3507, %v3492, %v2965
      %v3526 = vsel %vm3507, %v3493, %v2967
      %v3527 = vsel %vm3507, %v3494, %v2969
      %v3528 = vsel %vm3507, %v3495, %v2971
      %v3529 = vsel %vm3507, %v3496, %v2973
      %v3530 = vsel %vm3507, %v3497, %v2975
      %v3531 = vsel %vm3507, %v3498, %v2977
      %v3532 = vsel %vm3507, %v3499, %v2979
      %v3533 = vsel %vm3507, %v3500, %v2981
      %v3534 = vsel %vm3507, %v3501, %v2983
      %v3535 = vsel %vm3507, %v3502, %v2985
      %v3536 = vsel %vm3507, %v3503, %v2987
      %v3537 = vsel %vm3507, %v3504, %v2989
      %v3538 = vsel %vm3507, %v3505, %v2991
      %v3539 = vsel %vm3507, %v3506, %v2993
      %vm3540 = vcmask 326656
      %v3541 = vsel %vm3540, %v3508, %v3027
      %v3542 = vsel %vm3540, %v3509, %v3029
      %v3543 = vsel %vm3540, %v3510, %v3031
      %v3544 = vsel %vm3540, %v3511, %v3033
      %v3545 = vsel %vm3540, %v3512, %v3035
      %v3546 = vsel %vm3540, %v3513, %v3037
      %v3547 = vsel %vm3540, %v3514, %v3039
      %v3548 = vsel %vm3540, %v3515, %v3041
      %v3549 = vsel %vm3540, %v3516, %v3043
      %v3550 = vsel %vm3540, %v3517, %v3045
      %v3551 = vsel %vm3540, %v3518, %v3047
      %v3552 = vsel %vm3540, %v3519, %v3049
      %v3553 = vsel %vm3540, %v3520, %v3051
      %v3554 = vsel %vm3540, %v3521, %v3053
      %v3555 = vsel %vm3540, %v3522, %v3055
      %v3556 = vsel %vm3540, %v3523, %v3057
      %v3557 = vsel %vm3540, %v3524, %v3059
      %v3558 = vsel %vm3540, %v3525, %v3061
      %v3559 = vsel %vm3540, %v3526, %v3063
      %v3560 = vsel %vm3540, %v3527, %v3065
      %v3561 = vsel %vm3540, %v3528, %v3067
      %v3562 = vsel %vm3540, %v3529, %v3069
      %v3563 = vsel %vm3540, %v3530, %v3071
      %v3564 = vsel %vm3540, %v3531, %v3073
      %v3565 = vsel %vm3540, %v3532, %v3075
      %v3566 = vsel %vm3540, %v3533, %v3077
      %v3567 = vsel %vm3540, %v3534, %v3079
      %v3568 = vsel %vm3540, %v3535, %v3081
      %v3569 = vsel %vm3540, %v3536, %v3083
      %v3570 = vsel %vm3540, %v3537, %v3085
      %v3571 = vsel %vm3540, %v3538, %v3087
      %v3572 = vsel %vm3540, %v3539, %v3089
      %vm3573 = vcmask 392192
      %v3574 = vsel %vm3573, %v3541, %v3123
      %v3575 = vsel %vm3573, %v3542, %v3125
      %v3576 = vsel %vm3573, %v3543, %v3127
      %v3577 = vsel %vm3573, %v3544, %v3129
      %v3578 = vsel %vm3573, %v3545, %v3131
      %v3579 = vsel %vm3573, %v3546, %v3133
      %v3580 = vsel %vm3573, %v3547, %v3135
      %v3581 = vsel %vm3573, %v3548, %v3137
      %v3582 = vsel %vm3573, %v3549, %v3139
      %v3583 = vsel %vm3573, %v3550, %v3141
      %v3584 = vsel %vm3573, %v3551, %v3143
      %v3585 = vsel %vm3573, %v3552, %v3145
      %v3586 = vsel %vm3573, %v3553, %v3147
      %v3587 = vsel %vm3573, %v3554, %v3149
      %v3588 = vsel %vm3573, %v3555, %v3151
      %v3589 = vsel %vm3573, %v3556, %v3153
      %v3590 = vsel %vm3573, %v3557, %v3155
      %v3591 = vsel %vm3573, %v3558, %v3157
      %v3592 = vsel %vm3573, %v3559, %v3159
      %v3593 = vsel %vm3573, %v3560, %v3161
      %v3594 = vsel %vm3573, %v3561, %v3163
      %v3595 = vsel %vm3573, %v3562, %v3165
      %v3596 = vsel %vm3573, %v3563, %v3167
      %v3597 = vsel %vm3573, %v3564, %v3169
      %v3598 = vsel %vm3573, %v3565, %v3171
      %v3599 = vsel %vm3573, %v3566, %v3173
      %v3600 = vsel %vm3573, %v3567, %v3175
      %v3601 = vsel %vm3573, %v3568, %v3177
      %v3602 = vsel %vm3573, %v3569, %v3179
      %v3603 = vsel %vm3573, %v3570, %v3181
      %v3604 = vsel %vm3573, %v3571, %v3183
      %v3605 = vsel %vm3573, %v3572, %v3185
      %vm3606 = vcmask 457728
      %v3607 = vsel %vm3606, %v3574, %v3219
      %v3608 = vsel %vm3606, %v3575, %v3221
      %v3609 = vsel %vm3606, %v3576, %v3223
      %v3610 = vsel %vm3606, %v3577, %v3225
      %v3611 = vsel %vm3606, %v3578, %v3227
      %v3612 = vsel %vm3606, %v3579, %v3229
      %v3613 = vsel %vm3606, %v3580, %v3231
      %v3614 = vsel %vm3606, %v3581, %v3233
      %v3615 = vsel %vm3606, %v3582, %v3235
      %v3616 = vsel %vm3606, %v3583, %v3237
      %v3617 = vsel %vm3606, %v3584, %v3239
      %v3618 = vsel %vm3606, %v3585, %v3241
      %v3619 = vsel %vm3606, %v3586, %v3243
      %v3620 = vsel %vm3606, %v3587, %v3245
      %v3621 = vsel %vm3606, %v3588, %v3247
      %v3622 = vsel %vm3606, %v3589, %v3249
      %v3623 = vsel %vm3606, %v3590, %v3251
      %v3624 = vsel %vm3606, %v3591, %v3253
      %v3625 = vsel %vm3606, %v3592, %v3255
      %v3626 = vsel %vm3606, %v3593, %v3257
      %v3627 = vsel %vm3606, %v3594, %v3259
      %v3628 = vsel %vm3606, %v3595, %v3261
      %v3629 = vsel %vm3606, %v3596, %v3263
      %v3630 = vsel %vm3606, %v3597, %v3265
      %v3631 = vsel %vm3606, %v3598, %v3267
      %v3632 = vsel %vm3606, %v3599, %v3269
      %v3633 = vsel %vm3606, %v3600, %v3271
      %v3634 = vsel %vm3606, %v3601, %v3273
      %v3635 = vsel %vm3606, %v3602, %v3275
      %v3636 = vsel %vm3606, %v3603, %v3277
      %v3637 = vsel %vm3606, %v3604, %v3279
      %v3638 = vsel %vm3606, %v3605, %v3281
      %vm3639 = vcmask 523264
      %v3640 = vsel %vm3639, %v3607, %v3315
      %v3641 = vsel %vm3639, %v3608, %v3317
      %v3642 = vsel %vm3639, %v3609, %v3319
      %v3643 = vsel %vm3639, %v3610, %v3321
      %v3644 = vsel %vm3639, %v3611, %v3323
      %v3645 = vsel %vm3639, %v3612, %v3325
      %v3646 = vsel %vm3639, %v3613, %v3327
      %v3647 = vsel %vm3639, %v3614, %v3329
      %v3648 = vsel %vm3639, %v3615, %v3331
      %v3649 = vsel %vm3639, %v3616, %v3333
      %v3650 = vsel %vm3639, %v3617, %v3335
      %v3651 = vsel %vm3639, %v3618, %v3337
      %v3652 = vsel %vm3639, %v3619, %v3339
      %v3653 = vsel %vm3639, %v3620, %v3341
      %v3654 = vsel %vm3639, %v3621, %v3343
      %v3655 = vsel %vm3639, %v3622, %v3345
      %v3656 = vsel %vm3639, %v3623, %v3347
      %v3657 = vsel %vm3639, %v3624, %v3349
      %v3658 = vsel %vm3639, %v3625, %v3351
      %v3659 = vsel %vm3639, %v3626, %v3353
      %v3660 = vsel %vm3639, %v3627, %v3355
      %v3661 = vsel %vm3639, %v3628, %v3357
      %v3662 = vsel %vm3639, %v3629, %v3359
      %v3663 = vsel %vm3639, %v3630, %v3361
      %v3664 = vsel %vm3639, %v3631, %v3363
      %v3665 = vsel %vm3639, %v3632, %v3365
      %v3666 = vsel %vm3639, %v3633, %v3367
      %v3667 = vsel %vm3639, %v3634, %v3369
      %v3668 = vsel %vm3639, %v3635, %v3371
      %v3669 = vsel %vm3639, %v3636, %v3373
      %v3670 = vsel %vm3639, %v3637, %v3375
      %v3671 = vsel %vm3639, %v3638, %v3377
      %v3672 = vpack.c.bf16 %v3641, %v3640
      %v3673 = vpack.c.bf16 %v3643, %v3642
      %v3674 = vpack.c.bf16 %v3645, %v3644
      %v3675 = vpack.c.bf16 %v3647, %v3646
      %v3676 = vpack.c.bf16 %v3649, %v3648
      %v3677 = vpack.c.bf16 %v3651, %v3650
      %v3678 = vpack.c.bf16 %v3653, %v3652
      %v3679 = vpack.c.bf16 %v3655, %v3654
      %v3680 = vpack.c.bf16 %v3657, %v3656
      %v3681 = vpack.c.bf16 %v3659, %v3658
      %v3682 = vpack.c.bf16 %v3661, %v3660
      %v3683 = vpack.c.bf16 %v3663, %v3662
      %v3684 = vpack.c.bf16 %v3665, %v3664
      %v3685 = vpack.c.bf16 %v3667, %v3666
      %v3686 = vpack.c.bf16 %v3669, %v3668
      %v3687 = vpack.c.bf16 %v3671, %v3670
      %v3688 = vld [vmem:[%s3] sm:$0xf]
      %v3689 = vld [vmem:[%s3 + $0x4] sm:$0xf]
      %v3690 = vld [vmem:[%s3 + $0x8] sm:$0xf]
      %v3691 = vld [vmem:[%s3 + $0xc] sm:$0xf]
      %v3692 = vld [vmem:[%s3 + $0x10] sm:$0xf]
      %v3693 = vld [vmem:[%s3 + $0x14] sm:$0xf]
      %v3694 = vld [vmem:[%s3 + $0x18] sm:$0xf]
      %v3695 = vld [vmem:[%s3 + $0x1c] sm:$0xf]
      %v3696 = vld [vmem:[%s3 + $0x20] sm:$0xf]
      %v3706 = vunpack.c.l.b16 %v3688
      %v3707 = vunpack.c.l.b16 %v3689
      %v3708 = vunpack.c.l.b16 %v3690
      %v3709 = vunpack.c.l.b16 %v3691
      %v3710 = vunpack.c.l.b16 %v3692
      %v3711 = vunpack.c.l.b16 %v3693
      %v3712 = vunpack.c.l.b16 %v3694
      %v3713 = vunpack.c.l.b16 %v3695
      %v3714 = vunpack.c.l.b16 %v3696
      %v3715 = vpack.c.b16 %v3707, %v3706
      %v3716 = vpack.c.b16 %v3709, %v3708
      %v3717 = vpack.c.b16 %v3711, %v3710
      %v3718 = vpack.c.b16 %v3713, %v3712
      %v3719 = vpack.c.b16 %v3714, %v3714
      %vm3724 = vcmask 588800
      %v3726 = vsel %vm3724, %v3672, 0
      %v3729 = vsel %vm3724, %v3673, 0
      %v3732 = vsel %vm3724, %v3674, 0
      %v3735 = vsel %vm3724, %v3675, 0
      %v3738 = vsel %vm3724, %v3676, 0
      %v3741 = vsel %vm3724, %v3677, 0
      %v3744 = vsel %vm3724, %v3678, 0
      %v3747 = vsel %vm3724, %v3679, 0
      %v3750 = vsel %vm3724, %v3680, 0
      %v3753 = vsel %vm3724, %v3681, 0
      %v3756 = vsel %vm3724, %v3682, 0
      %v3759 = vsel %vm3724, %v3683, 0
      %v3762 = vsel %vm3724, %v3684, 0
      %v3765 = vsel %vm3724, %v3685, 0
      %v3768 = vsel %vm3724, %v3686, 0
      %v3771 = vsel %vm3724, %v3687, 0
      %vm3773 = vcmask 1043456
      %v3775 = vsel %vm3773, %v3719, 0
      %3777 = vmatprep.subr.bf16.mxu0 0
      %3778 = vmatpush1.bf16.msra.mxu0 %v3715
      %3779 = vmatprep.subr.bf16.mxu0 0
      %3780 = vmatpush1.bf16.msra.mxu0 %v3716
      %3781 = vmatprep.subr.bf16.mxu0 0
      %3782 = vmatpush1.bf16.msra.mxu0 %v3717
      %3783 = vmatprep.subr.bf16.mxu0 0
      %3784 = vmatpush1.bf16.msra.mxu0 %v3718
      %3785 = vmatprep.subr.bf16.mxu0 0
      %3786 = vmatpush1.bf16.msra.mxu0 %v3775
      %3787 = vmatprep.subr.bf16.mxu0 0
      %3788 = vmatpush1.bf16.msra.mxu0 0
      %3789 = vmatprep.subr.bf16.mxu0 0
      %3790 = vmatpush1.bf16.msra.mxu0 0
      %3791 = vmatprep.subr.bf16.mxu0 0
      %3792 = vmatpush1.bf16.msra.mxu0 0
      %3793 = vmatprep.subr.bf16.mxu0 0
      %3794 = vmatpush1.bf16.msra.mxu0 0
      %3795 = vmatprep.subr.bf16.mxu0 0
      %3796 = vmatpush1.bf16.msra.mxu0 0
      %3797 = vmatprep.subr.bf16.mxu0 0
      %3798 = vmatpush1.bf16.msra.mxu0 0
      %3799 = vmatprep.subr.bf16.mxu0 0
      %3800 = vmatpush1.bf16.msra.mxu0 0
      %3801 = vmatprep.subr.bf16.mxu0 0
      %3802 = vmatpush1.bf16.msra.mxu0 0
      %3803 = vmatprep.subr.bf16.mxu0 0
      %3804 = vmatpush1.bf16.msra.mxu0 0
      %3805 = vmatprep.subr.bf16.mxu0 0
      %3806 = vmatpush1.bf16.msra.mxu0 0
      %3807 = vmatprep.subr.bf16.mxu0 0
      %3808 = vmatpush1.bf16.msra.mxu0 0
      %3809 = vmatprep.mubr.bf16.mxu0 0
      %3810 = vmatmul.mubr.bf16.gmra.mrb[0].mxu0 %v3726
      %v3811 = vpop.f32.mrb[0].mxu0
      %v3812 = vadd.f32 0.0, %v3811
      %v3813 = vpop.f32.mrb[0].mxu0
      %v3814 = vpop.f32.mrb[0].mxu0
      %v3815 = vadd.f32 0.0, %v3814
      %v3816 = vpop.f32.mrb[0].mxu0
      %3817 = vmatprep.mubr.bf16.mxu0 0
      %3818 = vmatmul.mubr.bf16.gmra.mrb[0].mxu0 %v3729
      %v3819 = vpop.f32.mrb[0].mxu0
      %v3820 = vadd.f32 0.0, %v3819
      %v3821 = vpop.f32.mrb[0].mxu0
      %v3822 = vpop.f32.mrb[0].mxu0
      %v3823 = vadd.f32 0.0, %v3822
      %v3824 = vpop.f32.mrb[0].mxu0
      %3825 = vmatprep.mubr.bf16.mxu0 0
      %3826 = vmatmul.mubr.bf16.gmra.mrb[0].mxu0 %v3732
      %v3827 = vpop.f32.mrb[0].mxu0
      %v3828 = vadd.f32 0.0, %v3827
      %v3829 = vpop.f32.mrb[0].mxu0
      %v3830 = vpop.f32.mrb[0].mxu0
      %v3831 = vadd.f32 0.0, %v3830
      %v3832 = vpop.f32.mrb[0].mxu0
      %3833 = vmatprep.mubr.bf16.mxu0 0
      %3834 = vmatmul.mubr.bf16.gmra.mrb[0].mxu0 %v3735
      %v3835 = vpop.f32.mrb[0].mxu0
      %v3836 = vadd.f32 0.0, %v3835
      %v3837 = vpop.f32.mrb[0].mxu0
      %v3838 = vpop.f32.mrb[0].mxu0
      %v3839 = vadd.f32 0.0, %v3838
      %v3840 = vpop.f32.mrb[0].mxu0
      %3841 = vmatprep.mubr.bf16.mxu0 0
      %3842 = vmatmul.mubr.bf16.gmra.mrb[0].mxu0 %v3738
      %v3843 = vpop.f32.mrb[0].mxu0
      %v3844 = vadd.f32 0.0, %v3843
      %v3845 = vpop.f32.mrb[0].mxu0
      %v3846 = vpop.f32.mrb[0].mxu0
      %v3847 = vadd.f32 0.0, %v3846
      %v3848 = vpop.f32.mrb[0].mxu0
      %3849 = vmatprep.mubr.bf16.mxu0 0
      %3850 = vmatmul.mubr.bf16.gmra.mrb[0].mxu0 %v3741
      %v3851 = vpop.f32.mrb[0].mxu0
      %v3852 = vadd.f32 0.0, %v3851
      %v3853 = vpop.f32.mrb[0].mxu0
      %v3854 = vpop.f32.mrb[0].mxu0
      %v3855 = vadd.f32 0.0, %v3854
      %v3856 = vpop.f32.mrb[0].mxu0
      %3857 = vmatprep.mubr.bf16.mxu0 0
      %3858 = vmatmul.mubr.bf16.gmra.mrb[0].mxu0 %v3744
      %v3859 = vpop.f32.mrb[0].mxu0
      %v3860 = vadd.f32 0.0, %v3859
      %v3861 = vpop.f32.mrb[0].mxu0
      %v3862 = vpop.f32.mrb[0].mxu0
      %v3863 = vadd.f32 0.0, %v3862
      %v3864 = vpop.f32.mrb[0].mxu0
      %3865 = vmatprep.mubr.bf16.mxu0 0
      %3866 = vmatmul.mubr.bf16.gmra.mrb[0].mxu0 %v3747
      %v3867 = vpop.f32.mrb[0].mxu0
      %v3868 = vadd.f32 0.0, %v3867
      %v3869 = vpop.f32.mrb[0].mxu0
      %v3870 = vpop.f32.mrb[0].mxu0
      %v3871 = vadd.f32 0.0, %v3870
      %v3872 = vpop.f32.mrb[0].mxu0
      %3873 = vmatprep.mubr.bf16.mxu0 0
      %3874 = vmatmul.mubr.bf16.gmra.mrb[0].mxu0 %v3750
      %v3875 = vpop.f32.mrb[0].mxu0
      %v3876 = vadd.f32 0.0, %v3875
      %v3877 = vpop.f32.mrb[0].mxu0
      %v3878 = vpop.f32.mrb[0].mxu0
      %v3879 = vadd.f32 0.0, %v3878
      %v3880 = vpop.f32.mrb[0].mxu0
      %3881 = vmatprep.mubr.bf16.mxu0 0
      %3882 = vmatmul.mubr.bf16.gmra.mrb[0].mxu0 %v3753
      %v3883 = vpop.f32.mrb[0].mxu0
      %v3884 = vadd.f32 0.0, %v3883
      %v3885 = vpop.f32.mrb[0].mxu0
      %v3886 = vpop.f32.mrb[0].mxu0
      %v3887 = vadd.f32 0.0, %v3886
      %v3888 = vpop.f32.mrb[0].mxu0
      %3889 = vmatprep.mubr.bf16.mxu0 0
      %3890 = vmatmul.mubr.bf16.gmra.mrb[0].mxu0 %v3756
      %v3891 = vpop.f32.mrb[0].mxu0
      %v3892 = vadd.f32 0.0, %v3891
      %v3893 = vpop.f32.mrb[0].mxu0
      %v3894 = vpop.f32.mrb[0].mxu0
      %v3895 = vadd.f32 0.0, %v3894
      %v3896 = vpop.f32.mrb[0].mxu0
      %3897 = vmatprep.mubr.bf16.mxu0 0
      %3898 = vmatmul.mubr.bf16.gmra.mrb[0].mxu0 %v3759
      %v3899 = vpop.f32.mrb[0].mxu0
      %v3900 = vadd.f32 0.0, %v3899
      %v3901 = vpop.f32.mrb[0].mxu0
      %v3902 = vpop.f32.mrb[0].mxu0
      %v3903 = vadd.f32 0.0, %v3902
      %v3904 = vpop.f32.mrb[0].mxu0
      %3905 = vmatprep.mubr.bf16.mxu0 0
      %3906 = vmatmul.mubr.bf16.gmra.mrb[0].mxu0 %v3762
      %v3907 = vpop.f32.mrb[0].mxu0
      %v3908 = vadd.f32 0.0, %v3907
      %v3909 = vpop.f32.mrb[0].mxu0
      %v3910 = vpop.f32.mrb[0].mxu0
      %v3911 = vadd.f32 0.0, %v3910
      %v3912 = vpop.f32.mrb[0].mxu0
      %3913 = vmatprep.mubr.bf16.mxu0 0
      %3914 = vmatmul.mubr.bf16.gmra.mrb[0].mxu0 %v3765
      %v3915 = vpop.f32.mrb[0].mxu0
      %v3916 = vadd.f32 0.0, %v3915
      %v3917 = vpop.f32.mrb[0].mxu0
      %v3918 = vpop.f32.mrb[0].mxu0
      %v3919 = vadd.f32 0.0, %v3918
      %v3920 = vpop.f32.mrb[0].mxu0
      %3921 = vmatprep.mubr.bf16.mxu0 0
      %3922 = vmatmul.mubr.bf16.gmra.mrb[0].mxu0 %v3768
      %v3923 = vpop.f32.mrb[0].mxu0
      %v3924 = vadd.f32 0.0, %v3923
      %v3925 = vpop.f32.mrb[0].mxu0
      %v3926 = vpop.f32.mrb[0].mxu0
      %v3927 = vadd.f32 0.0, %v3926
      %v3928 = vpop.f32.mrb[0].mxu0
      %3929 = vmatprep.mubr.bf16.mxu0 0
      %3930 = vmatmul.mubr.bf16.gmra.mrb[0].mxu0 %v3771
      %v3931 = vpop.f32.mrb[0].mxu0
      %v3932 = vadd.f32 0.0, %v3931
      %v3933 = vpop.f32.mrb[0].mxu0
      %v3934 = vpop.f32.mrb[0].mxu0
      %v3935 = vadd.f32 0.0, %v3934
      %v3936 = vpop.f32.mrb[0].mxu0
      %3937 = vdwg.mxu0
      %v3938 = vmax.f32 %v3812, 0.0
      %v3939 = vmax.f32 %v3815, 0.0
      %v3940 = vmax.f32 %v3820, 0.0
      %v3941 = vmax.f32 %v3823, 0.0
      %v3942 = vmax.f32 %v3828, 0.0
      %v3943 = vmax.f32 %v3831, 0.0
      %v3944 = vmax.f32 %v3836, 0.0
      %v3945 = vmax.f32 %v3839, 0.0
      %v3946 = vmax.f32 %v3844, 0.0
      %v3947 = vmax.f32 %v3847, 0.0
      %v3948 = vmax.f32 %v3852, 0.0
      %v3949 = vmax.f32 %v3855, 0.0
      %v3950 = vmax.f32 %v3860, 0.0
      %v3951 = vmax.f32 %v3863, 0.0
      %v3952 = vmax.f32 %v3868, 0.0
      %v3953 = vmax.f32 %v3871, 0.0
      %v3954 = vmax.f32 %v3876, 0.0
      %v3955 = vmax.f32 %v3879, 0.0
      %v3956 = vmax.f32 %v3884, 0.0
      %v3957 = vmax.f32 %v3887, 0.0
      %v3958 = vmax.f32 %v3892, 0.0
      %v3959 = vmax.f32 %v3895, 0.0
      %v3960 = vmax.f32 %v3900, 0.0
      %v3961 = vmax.f32 %v3903, 0.0
      %v3962 = vmax.f32 %v3908, 0.0
      %v3963 = vmax.f32 %v3911, 0.0
      %v3964 = vmax.f32 %v3916, 0.0
      %v3965 = vmax.f32 %v3919, 0.0
      %v3966 = vmax.f32 %v3924, 0.0
      %v3967 = vmax.f32 %v3927, 0.0
      %v3968 = vmax.f32 %v3932, 0.0
      %v3969 = vmax.f32 %v3935, 0.0
      %v3970 = vpack.c.bf16 %v3939, %v3938
      %v3971 = vpack.c.bf16 %v3941, %v3940
      %v3972 = vpack.c.bf16 %v3943, %v3942
      %v3973 = vpack.c.bf16 %v3945, %v3944
      %v3974 = vpack.c.bf16 %v3947, %v3946
      %v3975 = vpack.c.bf16 %v3949, %v3948
      %v3976 = vpack.c.bf16 %v3951, %v3950
      %v3977 = vpack.c.bf16 %v3953, %v3952
      %v3978 = vpack.c.bf16 %v3955, %v3954
      %v3979 = vpack.c.bf16 %v3957, %v3956
      %v3980 = vpack.c.bf16 %v3959, %v3958
      %v3981 = vpack.c.bf16 %v3961, %v3960
      %v3982 = vpack.c.bf16 %v3963, %v3962
      %v3983 = vpack.c.bf16 %v3965, %v3964
      %v3984 = vpack.c.bf16 %v3967, %v3966
      %v3985 = vpack.c.bf16 %v3969, %v3968
      %v3986 = vld [vmem:[%s4] sm:$0xf]
      %v3988 = vsel %vm3410, %v3970, 0
      %v3991 = vsel %vm3410, %v3971, 0
      %v3994 = vsel %vm3410, %v3972, 0
      %v3997 = vsel %vm3410, %v3973, 0
      %v4000 = vsel %vm3410, %v3974, 0
      %v4003 = vsel %vm3410, %v3975, 0
      %v4006 = vsel %vm3410, %v3976, 0
      %v4009 = vsel %vm3410, %v3977, 0
      %v4012 = vsel %vm3410, %v3978, 0
      %v4015 = vsel %vm3410, %v3979, 0
      %v4018 = vsel %vm3410, %v3980, 0
      %v4021 = vsel %vm3410, %v3981, 0
      %v4024 = vsel %vm3410, %v3982, 0
      %v4027 = vsel %vm3410, %v3983, 0
      %v4030 = vsel %vm3410, %v3984, 0
      %v4033 = vsel %vm3410, %v3985, 0
      %v4036 = vsel %vm3773, %v3986, 0
      %4038 = vmatprep.subr.bf16.mxu0 0
      %4039 = vmatpush1.bf16.msra.mxu0 %v4036
      %4040 = vmatprep.subr.bf16.mxu0 0
      %4041 = vmatpush1.bf16.msra.mxu0 0
      %4042 = vmatprep.subr.bf16.mxu0 0
      %4043 = vmatpush1.bf16.msra.mxu0 0
      %4044 = vmatprep.subr.bf16.mxu0 0
      %4045 = vmatpush1.bf16.msra.mxu0 0
      %4046 = vmatprep.subr.bf16.mxu0 0
      %4047 = vmatpush1.bf16.msra.mxu0 0
      %4048 = vmatprep.subr.bf16.mxu0 0
      %4049 = vmatpush1.bf16.msra.mxu0 0
      %4050 = vmatprep.subr.bf16.mxu0 0
      %4051 = vmatpush1.bf16.msra.mxu0 0
      %4052 = vmatprep.subr.bf16.mxu0 0
      %4053 = vmatpush1.bf16.msra.mxu0 0
      %4054 = vmatprep.subr.bf16.mxu0 0
      %4055 = vmatpush1.bf16.msra.mxu0 0
      %4056 = vmatprep.subr.bf16.mxu0 0
      %4057 = vmatpush1.bf16.msra.mxu0 0
      %4058 = vmatprep.subr.bf16.mxu0 0
      %4059 = vmatpush1.bf16.msra.mxu0 0
      %4060 = vmatprep.subr.bf16.mxu0 0
      %4061 = vmatpush1.bf16.msra.mxu0 0
      %4062 = vmatprep.subr.bf16.mxu0 0
      %4063 = vmatpush1.bf16.msra.mxu0 0
      %4064 = vmatprep.subr.bf16.mxu0 0
      %4065 = vmatpush1.bf16.msra.mxu0 0
      %4066 = vmatprep.subr.bf16.mxu0 0
      %4067 = vmatpush1.bf16.msra.mxu0 0
      %4068 = vmatprep.subr.bf16.mxu0 0
      %4069 = vmatpush1.bf16.msra.mxu0 0
      %4070 = vmatprep.mubr.bf16.mxu0 0
      %4071 = vmatmul.mubr.bf16.gmra.mrb[0].mxu0 %v3988
      %v4072 = vpop.f32.mrb[0].mxu0
      %v4073 = vadd.f32 %v1993, %v4072
      %v4074 = vpop.f32.mrb[0].mxu0
      %v4075 = vpop.f32.mrb[0].mxu0
      %v4076 = vadd.f32 %v1994, %v4075
      %v4077 = vpop.f32.mrb[0].mxu0
      %4078 = vmatprep.mubr.bf16.mxu0 0
      %4079 = vmatmul.mubr.bf16.gmra.mrb[0].mxu0 %v3991
      %v4080 = vpop.f32.mrb[0].mxu0
      %v4081 = vadd.f32 %v1995, %v4080
      %v4082 = vpop.f32.mrb[0].mxu0
      %v4083 = vpop.f32.mrb[0].mxu0
      %v4084 = vadd.f32 %v1996, %v4083
      %v4085 = vpop.f32.mrb[0].mxu0
      %4086 = vmatprep.mubr.bf16.mxu0 0
      %4087 = vmatmul.mubr.bf16.gmra.mrb[0].mxu0 %v3994
      %v4088 = vpop.f32.mrb[0].mxu0
      %v4089 = vadd.f32 %v1997, %v4088
      %v4090 = vpop.f32.mrb[0].mxu0
      %v4091 = vpop.f32.mrb[0].mxu0
      %v4092 = vadd.f32 %v1998, %v4091
      %v4093 = vpop.f32.mrb[0].mxu0
      %4094 = vmatprep.mubr.bf16.mxu0 0
      %4095 = vmatmul.mubr.bf16.gmra.mrb[0].mxu0 %v3997
      %v4096 = vpop.f32.mrb[0].mxu0
      %v4097 = vadd.f32 %v1999, %v4096
      %v4098 = vpop.f32.mrb[0].mxu0
      %v4099 = vpop.f32.mrb[0].mxu0
      %v4100 = vadd.f32 %v2000, %v4099
      %v4101 = vpop.f32.mrb[0].mxu0
      %4102 = vmatprep.mubr.bf16.mxu0 0
      %4103 = vmatmul.mubr.bf16.gmra.mrb[0].mxu0 %v4000
      %v4104 = vpop.f32.mrb[0].mxu0
      %v4105 = vadd.f32 %v2001, %v4104
      %v4106 = vpop.f32.mrb[0].mxu0
      %v4107 = vpop.f32.mrb[0].mxu0
      %v4108 = vadd.f32 %v2002, %v4107
      %v4109 = vpop.f32.mrb[0].mxu0
      %4110 = vmatprep.mubr.bf16.mxu0 0
      %4111 = vmatmul.mubr.bf16.gmra.mrb[0].mxu0 %v4003
      %v4112 = vpop.f32.mrb[0].mxu0
      %v4113 = vadd.f32 %v2003, %v4112
      %v4114 = vpop.f32.mrb[0].mxu0
      %v4115 = vpop.f32.mrb[0].mxu0
      %v4116 = vadd.f32 %v2004, %v4115
      %v4117 = vpop.f32.mrb[0].mxu0
      %4118 = vmatprep.mubr.bf16.mxu0 0
      %4119 = vmatmul.mubr.bf16.gmra.mrb[0].mxu0 %v4006
      %v4120 = vpop.f32.mrb[0].mxu0
      %v4121 = vadd.f32 %v2005, %v4120
      %v4122 = vpop.f32.mrb[0].mxu0
      %v4123 = vpop.f32.mrb[0].mxu0
      %v4124 = vadd.f32 %v2006, %v4123
      %v4125 = vpop.f32.mrb[0].mxu0
      %4126 = vmatprep.mubr.bf16.mxu0 0
      %4127 = vmatmul.mubr.bf16.gmra.mrb[0].mxu0 %v4009
      %v4128 = vpop.f32.mrb[0].mxu0
      %v4129 = vadd.f32 %v2007, %v4128
      %v4130 = vpop.f32.mrb[0].mxu0
      %v4131 = vpop.f32.mrb[0].mxu0
      %v4132 = vadd.f32 %v2008, %v4131
      %v4133 = vpop.f32.mrb[0].mxu0
      %4134 = vmatprep.mubr.bf16.mxu0 0
      %4135 = vmatmul.mubr.bf16.gmra.mrb[0].mxu0 %v4012
      %v4136 = vpop.f32.mrb[0].mxu0
      %v4137 = vadd.f32 %v2009, %v4136
      %v4138 = vpop.f32.mrb[0].mxu0
      %v4139 = vpop.f32.mrb[0].mxu0
      %v4140 = vadd.f32 %v2010, %v4139
      %v4141 = vpop.f32.mrb[0].mxu0
      %4142 = vmatprep.mubr.bf16.mxu0 0
      %4143 = vmatmul.mubr.bf16.gmra.mrb[0].mxu0 %v4015
      %v4144 = vpop.f32.mrb[0].mxu0
      %v4145 = vadd.f32 %v2011, %v4144
      %v4146 = vpop.f32.mrb[0].mxu0
      %v4147 = vpop.f32.mrb[0].mxu0
      %v4148 = vadd.f32 %v2012, %v4147
      %v4149 = vpop.f32.mrb[0].mxu0
      %4150 = vmatprep.mubr.bf16.mxu0 0
      %4151 = vmatmul.mubr.bf16.gmra.mrb[0].mxu0 %v4018
      %v4152 = vpop.f32.mrb[0].mxu0
      %v4153 = vadd.f32 %v2013, %v4152
      %v4154 = vpop.f32.mrb[0].mxu0
      %v4155 = vpop.f32.mrb[0].mxu0
      %v4156 = vadd.f32 %v2014, %v4155
      %v4157 = vpop.f32.mrb[0].mxu0
      %4158 = vmatprep.mubr.bf16.mxu0 0
      %4159 = vmatmul.mubr.bf16.gmra.mrb[0].mxu0 %v4021
      %v4160 = vpop.f32.mrb[0].mxu0
      %v4161 = vadd.f32 %v2015, %v4160
      %v4162 = vpop.f32.mrb[0].mxu0
      %v4163 = vpop.f32.mrb[0].mxu0
      %v4164 = vadd.f32 %v2016, %v4163
      %v4165 = vpop.f32.mrb[0].mxu0
      %4166 = vmatprep.mubr.bf16.mxu0 0
      %4167 = vmatmul.mubr.bf16.gmra.mrb[0].mxu0 %v4024
      %v4168 = vpop.f32.mrb[0].mxu0
      %v4169 = vadd.f32 %v2017, %v4168
      %v4170 = vpop.f32.mrb[0].mxu0
      %v4171 = vpop.f32.mrb[0].mxu0
      %v4172 = vadd.f32 %v2018, %v4171
      %v4173 = vpop.f32.mrb[0].mxu0
      %4174 = vmatprep.mubr.bf16.mxu0 0
      %4175 = vmatmul.mubr.bf16.gmra.mrb[0].mxu0 %v4027
      %v4176 = vpop.f32.mrb[0].mxu0
      %v4177 = vadd.f32 %v2019, %v4176
      %v4178 = vpop.f32.mrb[0].mxu0
      %v4179 = vpop.f32.mrb[0].mxu0
      %v4180 = vadd.f32 %v2020, %v4179
      %v4181 = vpop.f32.mrb[0].mxu0
      %4182 = vmatprep.mubr.bf16.mxu0 0
      %4183 = vmatmul.mubr.bf16.gmra.mrb[0].mxu0 %v4030
      %v4184 = vpop.f32.mrb[0].mxu0
      %v4185 = vadd.f32 %v2021, %v4184
      %v4186 = vpop.f32.mrb[0].mxu0
      %v4187 = vpop.f32.mrb[0].mxu0
      %v4188 = vadd.f32 %v2022, %v4187
      %v4189 = vpop.f32.mrb[0].mxu0
      %4190 = vmatprep.mubr.bf16.mxu0 0
      %4191 = vmatmul.mubr.bf16.gmra.mrb[0].mxu0 %v4033
      %v4192 = vpop.f32.mrb[0].mxu0
      %v4193 = vadd.f32 %v2023, %v4192
      %v4194 = vpop.f32.mrb[0].mxu0
      %v4195 = vpop.f32.mrb[0].mxu0
      %v4196 = vadd.f32 %v2024, %v4195
      %v4197 = vpop.f32.mrb[0].mxu0
      %4198 = vdwg.mxu0
      %v4199 = vmax.f32 %v4073, 0.0
      %v4200 = vmax.f32 %v4076, 0.0
      %v4201 = vmax.f32 %v4081, 0.0
      %v4202 = vmax.f32 %v4084, 0.0
      %v4203 = vmax.f32 %v4089, 0.0
      %v4204 = vmax.f32 %v4092, 0.0
      %v4205 = vmax.f32 %v4097, 0.0
      %v4206 = vmax.f32 %v4100, 0.0
      %v4207 = vmax.f32 %v4105, 0.0
      %v4208 = vmax.f32 %v4108, 0.0
      %v4209 = vmax.f32 %v4113, 0.0
      %v4210 = vmax.f32 %v4116, 0.0
      %v4211 = vmax.f32 %v4121, 0.0
      %v4212 = vmax.f32 %v4124, 0.0
      %v4213 = vmax.f32 %v4129, 0.0
      %v4214 = vmax.f32 %v4132, 0.0
      %v4215 = vmax.f32 %v4137, 0.0
      %v4216 = vmax.f32 %v4140, 0.0
      %v4217 = vmax.f32 %v4145, 0.0
      %v4218 = vmax.f32 %v4148, 0.0
      %v4219 = vmax.f32 %v4153, 0.0
      %v4220 = vmax.f32 %v4156, 0.0
      %v4221 = vmax.f32 %v4161, 0.0
      %v4222 = vmax.f32 %v4164, 0.0
      %v4223 = vmax.f32 %v4169, 0.0
      %v4224 = vmax.f32 %v4172, 0.0
      %v4225 = vmax.f32 %v4177, 0.0
      %v4226 = vmax.f32 %v4180, 0.0
      %v4227 = vmax.f32 %v4185, 0.0
      %v4228 = vmax.f32 %v4188, 0.0
      %v4229 = vmax.f32 %v4193, 0.0
      %v4230 = vmax.f32 %v4196, 0.0
      %v4263 = vrot.slane %v4199, 7
      %v4264 = vrot.slane %v4200, 7
      %v4265 = vsel %vm374, %v4263, %v4264
      %v4266 = vrot.slane %v4201, 7
      %v4267 = vrot.slane %v4202, 7
      %v4268 = vsel %vm374, %v4266, %v4267
      %v4269 = vrot.slane %v4203, 7
      %v4270 = vrot.slane %v4204, 7
      %v4271 = vsel %vm374, %v4269, %v4270
      %v4272 = vrot.slane %v4205, 7
      %v4273 = vrot.slane %v4206, 7
      %v4274 = vsel %vm374, %v4272, %v4273
      %v4275 = vrot.slane %v4207, 7
      %v4276 = vrot.slane %v4208, 7
      %v4277 = vsel %vm374, %v4275, %v4276
      %v4278 = vrot.slane %v4209, 7
      %v4279 = vrot.slane %v4210, 7
      %v4280 = vsel %vm374, %v4278, %v4279
      %v4281 = vrot.slane %v4211, 7
      %v4282 = vrot.slane %v4212, 7
      %v4283 = vsel %vm374, %v4281, %v4282
      %v4284 = vrot.slane %v4213, 7
      %v4285 = vrot.slane %v4214, 7
      %v4286 = vsel %vm374, %v4284, %v4285
      %v4287 = vrot.slane %v4215, 7
      %v4288 = vrot.slane %v4216, 7
      %v4289 = vsel %vm374, %v4287, %v4288
      %v4290 = vrot.slane %v4217, 7
      %v4291 = vrot.slane %v4218, 7
      %v4292 = vsel %vm374, %v4290, %v4291
      %v4293 = vrot.slane %v4219, 7
      %v4294 = vrot.slane %v4220, 7
      %v4295 = vsel %vm374, %v4293, %v4294
      %v4296 = vrot.slane %v4221, 7
      %v4297 = vrot.slane %v4222, 7
      %v4298 = vsel %vm374, %v4296, %v4297
      %v4299 = vrot.slane %v4223, 7
      %v4300 = vrot.slane %v4224, 7
      %v4301 = vsel %vm374, %v4299, %v4300
      %v4302 = vrot.slane %v4225, 7
      %v4303 = vrot.slane %v4226, 7
      %v4304 = vsel %vm374, %v4302, %v4303
      %v4305 = vrot.slane %v4227, 7
      %v4306 = vrot.slane %v4228, 7
      %v4307 = vsel %vm374, %v4305, %v4306
      %v4308 = vrot.slane %v4229, 7
      %v4309 = vrot.slane %v4230, 7
      %v4310 = vsel %vm374, %v4308, %v4309
      %v4358 = vsel %vm374, 0.0, %v4263
      %v4359 = vsel %vm374, 0.0, %v4266
      %v4360 = vsel %vm374, 0.0, %v4269
      %v4361 = vsel %vm374, 0.0, %v4272
      %v4362 = vsel %vm374, 0.0, %v4275
      %v4363 = vsel %vm374, 0.0, %v4278
      %v4364 = vsel %vm374, 0.0, %v4281
      %v4365 = vsel %vm374, 0.0, %v4284
      %v4366 = vsel %vm374, 0.0, %v4287
      %v4367 = vsel %vm374, 0.0, %v4290
      %v4368 = vsel %vm374, 0.0, %v4293
      %v4369 = vsel %vm374, 0.0, %v4296
      %v4370 = vsel %vm374, 0.0, %v4299
      %v4371 = vsel %vm374, 0.0, %v4302
      %v4372 = vsel %vm374, 0.0, %v4305
      %v4373 = vsel %vm374, 0.0, %v4308
      %v4374 = vsel %vm374, %v4264, 0.0
      %v4375 = vsel %vm374, %v4267, 0.0
      %v4376 = vsel %vm374, %v4270, 0.0
      %v4377 = vsel %vm374, %v4273, 0.0
      %v4378 = vsel %vm374, %v4276, 0.0
      %v4379 = vsel %vm374, %v4279, 0.0
      %v4380 = vsel %vm374, %v4282, 0.0
      %v4381 = vsel %vm374, %v4285, 0.0
      %v4382 = vsel %vm374, %v4288, 0.0
      %v4383 = vsel %vm374, %v4291, 0.0
      %v4384 = vsel %vm374, %v4294, 0.0
      %v4385 = vsel %vm374, %v4297, 0.0
      %v4386 = vsel %vm374, %v4300, 0.0
      %v4387 = vsel %vm374, %v4303, 0.0
      %v4388 = vsel %vm374, %v4306, 0.0
      %v4389 = vsel %vm374, %v4309, 0.0
      %v4420 = vrot.slane %v4358, 1
      %v4421 = vrot.slane %v4265, 1
      %v4422 = vsel %vm540, %v4420, %v4421
      %v4423 = vrot.slane %v4374, 1
      %v4424 = vsel %vm540, %v4421, %v4423
      %v4425 = vrot.slane %v4359, 1
      %v4426 = vrot.slane %v4268, 1
      %v4427 = vsel %vm540, %v4425, %v4426
      %v4428 = vrot.slane %v4375, 1
      %v4429 = vsel %vm540, %v4426, %v4428
      %v4430 = vrot.slane %v4360, 1
      %v4431 = vrot.slane %v4271, 1
      %v4432 = vsel %vm540, %v4430, %v4431
      %v4433 = vrot.slane %v4376, 1
      %v4434 = vsel %vm540, %v4431, %v4433
      %v4435 = vrot.slane %v4361, 1
      %v4436 = vrot.slane %v4274, 1
      %v4437 = vsel %vm540, %v4435, %v4436
      %v4438 = vrot.slane %v4377, 1
      %v4439 = vsel %vm540, %v4436, %v4438
      %v4440 = vrot.slane %v4362, 1
      %v4441 = vrot.slane %v4277, 1
      %v4442 = vsel %vm540, %v4440, %v4441
      %v4443 = vrot.slane %v4378, 1
      %v4444 = vsel %vm540, %v4441, %v4443
      %v4445 = vrot.slane %v4363, 1
      %v4446 = vrot.slane %v4280, 1
      %v4447 = vsel %vm540, %v4445, %v4446
      %v4448 = vrot.slane %v4379, 1
      %v4449 = vsel %vm540, %v4446, %v4448
      %v4450 = vrot.slane %v4364, 1
      %v4451 = vrot.slane %v4283, 1
      %v4452 = vsel %vm540, %v4450, %v4451
      %v4453 = vrot.slane %v4380, 1
      %v4454 = vsel %vm540, %v4451, %v4453
      %v4455 = vrot.slane %v4365, 1
      %v4456 = vrot.slane %v4286, 1
      %v4457 = vsel %vm540, %v4455, %v4456
      %v4458 = vrot.slane %v4381, 1
      %v4459 = vsel %vm540, %v4456, %v4458
      %v4460 = vrot.slane %v4366, 1
      %v4461 = vrot.slane %v4289, 1
      %v4462 = vsel %vm540, %v4460, %v4461
      %v4463 = vrot.slane %v4382, 1
      %v4464 = vsel %vm540, %v4461, %v4463
      %v4465 = vrot.slane %v4367, 1
      %v4466 = vrot.slane %v4292, 1
      %v4467 = vsel %vm540, %v4465, %v4466
      %v4468 = vrot.slane %v4383, 1
      %v4469 = vsel %vm540, %v4466, %v4468
      %v4470 = vrot.slane %v4368, 1
      %v4471 = vrot.slane %v4295, 1
      %v4472 = vsel %vm540, %v4470, %v4471
      %v4473 = vrot.slane %v4384, 1
      %v4474 = vsel %vm540, %v4471, %v4473
      %v4475 = vrot.slane %v4369, 1
      %v4476 = vrot.slane %v4298, 1
      %v4477 = vsel %vm540, %v4475, %v4476
      %v4478 = vrot.slane %v4385, 1
      %v4479 = vsel %vm540, %v4476, %v4478
      %v4480 = vrot.slane %v4370, 1
      %v4481 = vrot.slane %v4301, 1
      %v4482 = vsel %vm540, %v4480, %v4481
      %v4483 = vrot.slane %v4386, 1
      %v4484 = vsel %vm540, %v4481, %v4483
      %v4485 = vrot.slane %v4371, 1
      %v4486 = vrot.slane %v4304, 1
      %v4487 = vsel %vm540, %v4485, %v4486
      %v4488 = vrot.slane %v4387, 1
      %v4489 = vsel %vm540, %v4486, %v4488
      %v4490 = vrot.slane %v4372, 1
      %v4491 = vrot.slane %v4307, 1
      %v4492 = vsel %vm540, %v4490, %v4491
      %v4493 = vrot.slane %v4388, 1
      %v4494 = vsel %vm540, %v4491, %v4493
      %v4495 = vrot.slane %v4358, 2
      %v4496 = vrot.slane %v4265, 2
      %v4497 = vsel %vm621, %v4495, %v4496
      %v4498 = vrot.slane %v4374, 2
      %v4499 = vsel %vm621, %v4496, %v4498
      %v4500 = vrot.slane %v4359, 2
      %v4501 = vrot.slane %v4268, 2
      %v4502 = vsel %vm621, %v4500, %v4501
      %v4503 = vrot.slane %v4375, 2
      %v4504 = vsel %vm621, %v4501, %v4503
      %v4505 = vrot.slane %v4360, 2
      %v4506 = vrot.slane %v4271, 2
      %v4507 = vsel %vm621, %v4505, %v4506
      %v4508 = vrot.slane %v4376, 2
      %v4509 = vsel %vm621, %v4506, %v4508
      %v4510 = vrot.slane %v4361, 2
      %v4511 = vrot.slane %v4274, 2
      %v4512 = vsel %vm621, %v4510, %v4511
      %v4513 = vrot.slane %v4377, 2
      %v4514 = vsel %vm621, %v4511, %v4513
      %v4515 = vrot.slane %v4362, 2
      %v4516 = vrot.slane %v4277, 2
      %v4517 = vsel %vm621, %v4515, %v4516
      %v4518 = vrot.slane %v4378, 2
      %v4519 = vsel %vm621, %v4516, %v4518
      %v4520 = vrot.slane %v4363, 2
      %v4521 = vrot.slane %v4280, 2
      %v4522 = vsel %vm621, %v4520, %v4521
      %v4523 = vrot.slane %v4379, 2
      %v4524 = vsel %vm621, %v4521, %v4523
      %v4525 = vrot.slane %v4364, 2
      %v4526 = vrot.slane %v4283, 2
      %v4527 = vsel %vm621, %v4525, %v4526
      %v4528 = vrot.slane %v4380, 2
      %v4529 = vsel %vm621, %v4526, %v4528
      %v4530 = vrot.slane %v4365, 2
      %v4531 = vrot.slane %v4286, 2
      %v4532 = vsel %vm621, %v4530, %v4531
      %v4533 = vrot.slane %v4381, 2
      %v4534 = vsel %vm621, %v4531, %v4533
      %v4535 = vrot.slane %v4366, 2
      %v4536 = vrot.slane %v4289, 2
      %v4537 = vsel %vm621, %v4535, %v4536
      %v4538 = vrot.slane %v4382, 2
      %v4539 = vsel %vm621, %v4536, %v4538
      %v4540 = vrot.slane %v4367, 2
      %v4541 = vrot.slane %v4292, 2
      %v4542 = vsel %vm621, %v4540, %v4541
      %v4543 = vrot.slane %v4383, 2
      %v4544 = vsel %vm621, %v4541, %v4543
      %v4545 = vrot.slane %v4368, 2
      %v4546 = vrot.slane %v4295, 2
      %v4547 = vsel %vm621, %v4545, %v4546
      %v4548 = vrot.slane %v4384, 2
      %v4549 = vsel %vm621, %v4546, %v4548
      %v4550 = vrot.slane %v4369, 2
      %v4551 = vrot.slane %v4298, 2
      %v4552 = vsel %vm621, %v4550, %v4551
      %v4553 = vrot.slane %v4385, 2
      %v4554 = vsel %vm621, %v4551, %v4553
      %v4555 = vrot.slane %v4370, 2
      %v4556 = vrot.slane %v4301, 2
      %v4557 = vsel %vm621, %v4555, %v4556
      %v4558 = vrot.slane %v4386, 2
      %v4559 = vsel %vm621, %v4556, %v4558
      %v4560 = vrot.slane %v4371, 2
      %v4561 = vrot.slane %v4304, 2
      %v4562 = vsel %vm621, %v4560, %v4561
      %v4563 = vrot.slane %v4387, 2
      %v4564 = vsel %vm621, %v4561, %v4563
      %v4565 = vrot.slane %v4372, 2
      %v4566 = vrot.slane %v4307, 2
      %v4567 = vsel %vm621, %v4565, %v4566
      %v4568 = vrot.slane %v4388, 2
      %v4569 = vsel %vm621, %v4566, %v4568
      %v4572 = vrot.slane %v4373, 1
      %v4573 = vrot.slane %v4310, 1
      %v4574 = vsel %vm540, %v4572, %v4573
      %v4575 = vrot.slane %v4389, 1
      %v4576 = vsel %vm540, %v4573, %v4575
      %v4577 = vrot.slane %v4373, 2
      %v4578 = vrot.slane %v4310, 2
      %v4579 = vsel %vm621, %v4577, %v4578
      %v4580 = vrot.slane %v4389, 2
      %v4581 = vsel %vm621, %v4578, %v4580
      %4614 = vrot.lane.b32.xlu0 %v543, 16
      %v4615 = vpop.permute.xlu0 %4614
      %4616 = vrot.lane.b32.xlu0 %v545, 16
      %v4617 = vpop.permute.xlu0 %4616
      %4618 = vrot.lane.b32.xlu0 %v4422, 16
      %v4619 = vpop.permute.xlu0 %4618
      %4620 = vrot.lane.b32.xlu0 %v4424, 16
      %v4621 = vpop.permute.xlu0 %4620
      %4622 = vrot.lane.b32.xlu0 %v4427, 16
      %v4623 = vpop.permute.xlu0 %4622
      %4624 = vrot.lane.b32.xlu0 %v4429, 16
      %v4625 = vpop.permute.xlu0 %4624
      %4626 = vrot.lane.b32.xlu0 %v4432, 16
      %v4627 = vpop.permute.xlu0 %4626
      %4628 = vrot.lane.b32.xlu0 %v4434, 16
      %v4629 = vpop.permute.xlu0 %4628
      %4630 = vrot.lane.b32.xlu0 %v4437, 16
      %v4631 = vpop.permute.xlu0 %4630
      %4632 = vrot.lane.b32.xlu0 %v4439, 16
      %v4633 = vpop.permute.xlu0 %4632
      %4634 = vrot.lane.b32.xlu0 %v4442, 16
      %v4635 = vpop.permute.xlu0 %4634
      %4636 = vrot.lane.b32.xlu0 %v4444, 16
      %v4637 = vpop.permute.xlu0 %4636
      %4638 = vrot.lane.b32.xlu0 %v4447, 16
      %v4639 = vpop.permute.xlu0 %4638
      %4640 = vrot.lane.b32.xlu0 %v4449, 16
      %v4641 = vpop.permute.xlu0 %4640
      %4642 = vrot.lane.b32.xlu0 %v4452, 16
      %v4643 = vpop.permute.xlu0 %4642
      %4644 = vrot.lane.b32.xlu0 %v4454, 16
      %v4645 = vpop.permute.xlu0 %4644
      %4646 = vrot.lane.b32.xlu0 %v4457, 16
      %v4647 = vpop.permute.xlu0 %4646
      %4648 = vrot.lane.b32.xlu0 %v4459, 16
      %v4649 = vpop.permute.xlu0 %4648
      %4650 = vrot.lane.b32.xlu0 %v4462, 16
      %v4651 = vpop.permute.xlu0 %4650
      %4652 = vrot.lane.b32.xlu0 %v4464, 16
      %v4653 = vpop.permute.xlu0 %4652
      %4654 = vrot.lane.b32.xlu0 %v4467, 16
      %v4655 = vpop.permute.xlu0 %4654
      %4656 = vrot.lane.b32.xlu0 %v4469, 16
      %v4657 = vpop.permute.xlu0 %4656
      %4658 = vrot.lane.b32.xlu0 %v4472, 16
      %v4659 = vpop.permute.xlu0 %4658
      %4660 = vrot.lane.b32.xlu0 %v4474, 16
      %v4661 = vpop.permute.xlu0 %4660
      %4662 = vrot.lane.b32.xlu0 %v4477, 16
      %v4663 = vpop.permute.xlu0 %4662
      %4664 = vrot.lane.b32.xlu0 %v4479, 16
      %v4665 = vpop.permute.xlu0 %4664
      %4666 = vrot.lane.b32.xlu0 %v4482, 16
      %v4667 = vpop.permute.xlu0 %4666
      %4668 = vrot.lane.b32.xlu0 %v4484, 16
      %v4669 = vpop.permute.xlu0 %4668
      %4670 = vrot.lane.b32.xlu0 %v4487, 16
      %v4671 = vpop.permute.xlu0 %4670
      %4672 = vrot.lane.b32.xlu0 %v4489, 16
      %v4673 = vpop.permute.xlu0 %4672
      %4674 = vrot.lane.b32.xlu0 %v4492, 16
      %v4675 = vpop.permute.xlu0 %4674
      %4676 = vrot.lane.b32.xlu0 %v4494, 16
      %v4677 = vpop.permute.xlu0 %4676
      %4710 = vrot.lane.b32.xlu0 %v624, 32
      %v4711 = vpop.permute.xlu0 %4710
      %4712 = vrot.lane.b32.xlu0 %v626, 32
      %v4713 = vpop.permute.xlu0 %4712
      %4714 = vrot.lane.b32.xlu0 %v4497, 32
      %v4715 = vpop.permute.xlu0 %4714
      %4716 = vrot.lane.b32.xlu0 %v4499, 32
      %v4717 = vpop.permute.xlu0 %4716
      %4718 = vrot.lane.b32.xlu0 %v4502, 32
      %v4719 = vpop.permute.xlu0 %4718
      %4720 = vrot.lane.b32.xlu0 %v4504, 32
      %v4721 = vpop.permute.xlu0 %4720
      %4722 = vrot.lane.b32.xlu0 %v4507, 32
      %v4723 = vpop.permute.xlu0 %4722
      %4724 = vrot.lane.b32.xlu0 %v4509, 32
      %v4725 = vpop.permute.xlu0 %4724
      %4726 = vrot.lane.b32.xlu0 %v4512, 32
      %v4727 = vpop.permute.xlu0 %4726
      %4728 = vrot.lane.b32.xlu0 %v4514, 32
      %v4729 = vpop.permute.xlu0 %4728
      %4730 = vrot.lane.b32.xlu0 %v4517, 32
      %v4731 = vpop.permute.xlu0 %4730
      %4732 = vrot.lane.b32.xlu0 %v4519, 32
      %v4733 = vpop.permute.xlu0 %4732
      %4734 = vrot.lane.b32.xlu0 %v4522, 32
      %v4735 = vpop.permute.xlu0 %4734
      %4736 = vrot.lane.b32.xlu0 %v4524, 32
      %v4737 = vpop.permute.xlu0 %4736
      %4738 = vrot.lane.b32.xlu0 %v4527, 32
      %v4739 = vpop.permute.xlu0 %4738
      %4740 = vrot.lane.b32.xlu0 %v4529, 32
      %v4741 = vpop.permute.xlu0 %4740
      %4742 = vrot.lane.b32.xlu0 %v4532, 32
      %v4743 = vpop.permute.xlu0 %4742
      %4744 = vrot.lane.b32.xlu0 %v4534, 32
      %v4745 = vpop.permute.xlu0 %4744
      %4746 = vrot.lane.b32.xlu0 %v4537, 32
      %v4747 = vpop.permute.xlu0 %4746
      %4748 = vrot.lane.b32.xlu0 %v4539, 32
      %v4749 = vpop.permute.xlu0 %4748
      %4750 = vrot.lane.b32.xlu0 %v4542, 32
      %v4751 = vpop.permute.xlu0 %4750
      %4752 = vrot.lane.b32.xlu0 %v4544, 32
      %v4753 = vpop.permute.xlu0 %4752
      %4754 = vrot.lane.b32.xlu0 %v4547, 32
      %v4755 = vpop.permute.xlu0 %4754
      %4756 = vrot.lane.b32.xlu0 %v4549, 32
      %v4757 = vpop.permute.xlu0 %4756
      %4758 = vrot.lane.b32.xlu0 %v4552, 32
      %v4759 = vpop.permute.xlu0 %4758
      %4760 = vrot.lane.b32.xlu0 %v4554, 32
      %v4761 = vpop.permute.xlu0 %4760
      %4762 = vrot.lane.b32.xlu0 %v4557, 32
      %v4763 = vpop.permute.xlu0 %4762
      %4764 = vrot.lane.b32.xlu0 %v4559, 32
      %v4765 = vpop.permute.xlu0 %4764
      %4766 = vrot.lane.b32.xlu0 %v4562, 32
      %v4767 = vpop.permute.xlu0 %4766
      %4768 = vrot.lane.b32.xlu0 %v4564, 32
      %v4769 = vpop.permute.xlu0 %4768
      %4770 = vrot.lane.b32.xlu0 %v4567, 32
      %v4771 = vpop.permute.xlu0 %4770
      %4772 = vrot.lane.b32.xlu0 %v4569, 32
      %v4773 = vpop.permute.xlu0 %4772
      %4806 = vrot.lane.b32.xlu0 %v4358, 48
      %v4807 = vpop.permute.xlu0 %4806
      %4808 = vrot.lane.b32.xlu0 %v4265, 48
      %v4809 = vpop.permute.xlu0 %4808
      %4810 = vrot.lane.b32.xlu0 %v4359, 48
      %v4811 = vpop.permute.xlu0 %4810
      %4812 = vrot.lane.b32.xlu0 %v4268, 48
      %v4813 = vpop.permute.xlu0 %4812
      %4814 = vrot.lane.b32.xlu0 %v4360, 48
      %v4815 = vpop.permute.xlu0 %4814
      %4816 = vrot.lane.b32.xlu0 %v4271, 48
      %v4817 = vpop.permute.xlu0 %4816
      %4818 = vrot.lane.b32.xlu0 %v4361, 48
      %v4819 = vpop.permute.xlu0 %4818
      %4820 = vrot.lane.b32.xlu0 %v4274, 48
      %v4821 = vpop.permute.xlu0 %4820
      %4822 = vrot.lane.b32.xlu0 %v4362, 48
      %v4823 = vpop.permute.xlu0 %4822
      %4824 = vrot.lane.b32.xlu0 %v4277, 48
      %v4825 = vpop.permute.xlu0 %4824
      %4826 = vrot.lane.b32.xlu0 %v4363, 48
      %v4827 = vpop.permute.xlu0 %4826
      %4828 = vrot.lane.b32.xlu0 %v4280, 48
      %v4829 = vpop.permute.xlu0 %4828
      %4830 = vrot.lane.b32.xlu0 %v4364, 48
      %v4831 = vpop.permute.xlu0 %4830
      %4832 = vrot.lane.b32.xlu0 %v4283, 48
      %v4833 = vpop.permute.xlu0 %4832
      %4834 = vrot.lane.b32.xlu0 %v4365, 48
      %v4835 = vpop.permute.xlu0 %4834
      %4836 = vrot.lane.b32.xlu0 %v4286, 48
      %v4837 = vpop.permute.xlu0 %4836
      %4838 = vrot.lane.b32.xlu0 %v4366, 48
      %v4839 = vpop.permute.xlu0 %4838
      %4840 = vrot.lane.b32.xlu0 %v4289, 48
      %v4841 = vpop.permute.xlu0 %4840
      %4842 = vrot.lane.b32.xlu0 %v4367, 48
      %v4843 = vpop.permute.xlu0 %4842
      %4844 = vrot.lane.b32.xlu0 %v4292, 48
      %v4845 = vpop.permute.xlu0 %4844
      %4846 = vrot.lane.b32.xlu0 %v4368, 48
      %v4847 = vpop.permute.xlu0 %4846
      %4848 = vrot.lane.b32.xlu0 %v4295, 48
      %v4849 = vpop.permute.xlu0 %4848
      %4850 = vrot.lane.b32.xlu0 %v4369, 48
      %v4851 = vpop.permute.xlu0 %4850
      %4852 = vrot.lane.b32.xlu0 %v4298, 48
      %v4853 = vpop.permute.xlu0 %4852
      %4854 = vrot.lane.b32.xlu0 %v4370, 48
      %v4855 = vpop.permute.xlu0 %4854
      %4856 = vrot.lane.b32.xlu0 %v4301, 48
      %v4857 = vpop.permute.xlu0 %4856
      %4858 = vrot.lane.b32.xlu0 %v4371, 48
      %v4859 = vpop.permute.xlu0 %4858
      %4860 = vrot.lane.b32.xlu0 %v4304, 48
      %v4861 = vpop.permute.xlu0 %4860
      %4862 = vrot.lane.b32.xlu0 %v4372, 48
      %v4863 = vpop.permute.xlu0 %4862
      %4864 = vrot.lane.b32.xlu0 %v4307, 48
      %v4865 = vpop.permute.xlu0 %4864
      %4866 = vrot.lane.b32.xlu0 %v4373, 48
      %v4867 = vpop.permute.xlu0 %4866
      %4868 = vrot.lane.b32.xlu0 %v4310, 48
      %v4869 = vpop.permute.xlu0 %4868
      %4902 = vrot.lane.b32.xlu0 %v4422, 64
      %v4903 = vpop.permute.xlu0 %4902
      %4904 = vrot.lane.b32.xlu0 %v4424, 64
      %v4905 = vpop.permute.xlu0 %4904
      %4906 = vrot.lane.b32.xlu0 %v4427, 64
      %v4907 = vpop.permute.xlu0 %4906
      %4908 = vrot.lane.b32.xlu0 %v4429, 64
      %v4909 = vpop.permute.xlu0 %4908
      %4910 = vrot.lane.b32.xlu0 %v4432, 64
      %v4911 = vpop.permute.xlu0 %4910
      %4912 = vrot.lane.b32.xlu0 %v4434, 64
      %v4913 = vpop.permute.xlu0 %4912
      %4914 = vrot.lane.b32.xlu0 %v4437, 64
      %v4915 = vpop.permute.xlu0 %4914
      %4916 = vrot.lane.b32.xlu0 %v4439, 64
      %v4917 = vpop.permute.xlu0 %4916
      %4918 = vrot.lane.b32.xlu0 %v4442, 64
      %v4919 = vpop.permute.xlu0 %4918
      %4920 = vrot.lane.b32.xlu0 %v4444, 64
      %v4921 = vpop.permute.xlu0 %4920
      %4922 = vrot.lane.b32.xlu0 %v4447, 64
      %v4923 = vpop.permute.xlu0 %4922
      %4924 = vrot.lane.b32.xlu0 %v4449, 64
      %v4925 = vpop.permute.xlu0 %4924
      %4926 = vrot.lane.b32.xlu0 %v4452, 64
      %v4927 = vpop.permute.xlu0 %4926
      %4928 = vrot.lane.b32.xlu0 %v4454, 64
      %v4929 = vpop.permute.xlu0 %4928
      %4930 = vrot.lane.b32.xlu0 %v4457, 64
      %v4931 = vpop.permute.xlu0 %4930
      %4932 = vrot.lane.b32.xlu0 %v4459, 64
      %v4933 = vpop.permute.xlu0 %4932
      %4934 = vrot.lane.b32.xlu0 %v4462, 64
      %v4935 = vpop.permute.xlu0 %4934
      %4936 = vrot.lane.b32.xlu0 %v4464, 64
      %v4937 = vpop.permute.xlu0 %4936
      %4938 = vrot.lane.b32.xlu0 %v4467, 64
      %v4939 = vpop.permute.xlu0 %4938
      %4940 = vrot.lane.b32.xlu0 %v4469, 64
      %v4941 = vpop.permute.xlu0 %4940
      %4942 = vrot.lane.b32.xlu0 %v4472, 64
      %v4943 = vpop.permute.xlu0 %4942
      %4944 = vrot.lane.b32.xlu0 %v4474, 64
      %v4945 = vpop.permute.xlu0 %4944
      %4946 = vrot.lane.b32.xlu0 %v4477, 64
      %v4947 = vpop.permute.xlu0 %4946
      %4948 = vrot.lane.b32.xlu0 %v4479, 64
      %v4949 = vpop.permute.xlu0 %4948
      %4950 = vrot.lane.b32.xlu0 %v4482, 64
      %v4951 = vpop.permute.xlu0 %4950
      %4952 = vrot.lane.b32.xlu0 %v4484, 64
      %v4953 = vpop.permute.xlu0 %4952
      %4954 = vrot.lane.b32.xlu0 %v4487, 64
      %v4955 = vpop.permute.xlu0 %4954
      %4956 = vrot.lane.b32.xlu0 %v4489, 64
      %v4957 = vpop.permute.xlu0 %4956
      %4958 = vrot.lane.b32.xlu0 %v4492, 64
      %v4959 = vpop.permute.xlu0 %4958
      %4960 = vrot.lane.b32.xlu0 %v4494, 64
      %v4961 = vpop.permute.xlu0 %4960
      %4962 = vrot.lane.b32.xlu0 %v4574, 64
      %v4963 = vpop.permute.xlu0 %4962
      %4964 = vrot.lane.b32.xlu0 %v4576, 64
      %v4965 = vpop.permute.xlu0 %4964
      %4998 = vrot.lane.b32.xlu0 %v4497, 80
      %v4999 = vpop.permute.xlu0 %4998
      %5000 = vrot.lane.b32.xlu0 %v4499, 80
      %v5001 = vpop.permute.xlu0 %5000
      %5002 = vrot.lane.b32.xlu0 %v4502, 80
      %v5003 = vpop.permute.xlu0 %5002
      %5004 = vrot.lane.b32.xlu0 %v4504, 80
      %v5005 = vpop.permute.xlu0 %5004
      %5006 = vrot.lane.b32.xlu0 %v4507, 80
      %v5007 = vpop.permute.xlu0 %5006
      %5008 = vrot.lane.b32.xlu0 %v4509, 80
      %v5009 = vpop.permute.xlu0 %5008
      %5010 = vrot.lane.b32.xlu0 %v4512, 80
      %v5011 = vpop.permute.xlu0 %5010
      %5012 = vrot.lane.b32.xlu0 %v4514, 80
      %v5013 = vpop.permute.xlu0 %5012
      %5014 = vrot.lane.b32.xlu0 %v4517, 80
      %v5015 = vpop.permute.xlu0 %5014
      %5016 = vrot.lane.b32.xlu0 %v4519, 80
      %v5017 = vpop.permute.xlu0 %5016
      %5018 = vrot.lane.b32.xlu0 %v4522, 80
      %v5019 = vpop.permute.xlu0 %5018
      %5020 = vrot.lane.b32.xlu0 %v4524, 80
      %v5021 = vpop.permute.xlu0 %5020
      %5022 = vrot.lane.b32.xlu0 %v4527, 80
      %v5023 = vpop.permute.xlu0 %5022
      %5024 = vrot.lane.b32.xlu0 %v4529, 80
      %v5025 = vpop.permute.xlu0 %5024
      %5026 = vrot.lane.b32.xlu0 %v4532, 80
      %v5027 = vpop.permute.xlu0 %5026
      %5028 = vrot.lane.b32.xlu0 %v4534, 80
      %v5029 = vpop.permute.xlu0 %5028
      %5030 = vrot.lane.b32.xlu0 %v4537, 80
      %v5031 = vpop.permute.xlu0 %5030
      %5032 = vrot.lane.b32.xlu0 %v4539, 80
      %v5033 = vpop.permute.xlu0 %5032
      %5034 = vrot.lane.b32.xlu0 %v4542, 80
      %v5035 = vpop.permute.xlu0 %5034
      %5036 = vrot.lane.b32.xlu0 %v4544, 80
      %v5037 = vpop.permute.xlu0 %5036
      %5038 = vrot.lane.b32.xlu0 %v4547, 80
      %v5039 = vpop.permute.xlu0 %5038
      %5040 = vrot.lane.b32.xlu0 %v4549, 80
      %v5041 = vpop.permute.xlu0 %5040
      %5042 = vrot.lane.b32.xlu0 %v4552, 80
      %v5043 = vpop.permute.xlu0 %5042
      %5044 = vrot.lane.b32.xlu0 %v4554, 80
      %v5045 = vpop.permute.xlu0 %5044
      %5046 = vrot.lane.b32.xlu0 %v4557, 80
      %v5047 = vpop.permute.xlu0 %5046
      %5048 = vrot.lane.b32.xlu0 %v4559, 80
      %v5049 = vpop.permute.xlu0 %5048
      %5050 = vrot.lane.b32.xlu0 %v4562, 80
      %v5051 = vpop.permute.xlu0 %5050
      %5052 = vrot.lane.b32.xlu0 %v4564, 80
      %v5053 = vpop.permute.xlu0 %5052
      %5054 = vrot.lane.b32.xlu0 %v4567, 80
      %v5055 = vpop.permute.xlu0 %5054
      %5056 = vrot.lane.b32.xlu0 %v4569, 80
      %v5057 = vpop.permute.xlu0 %5056
      %5058 = vrot.lane.b32.xlu0 %v4579, 80
      %v5059 = vpop.permute.xlu0 %5058
      %5060 = vrot.lane.b32.xlu0 %v4581, 80
      %v5061 = vpop.permute.xlu0 %5060
      %5094 = vrot.lane.b32.xlu0 %v4359, 96
      %v5095 = vpop.permute.xlu0 %5094
      %5096 = vrot.lane.b32.xlu0 %v4268, 96
      %v5097 = vpop.permute.xlu0 %5096
      %5098 = vrot.lane.b32.xlu0 %v4360, 96
      %v5099 = vpop.permute.xlu0 %5098
      %5100 = vrot.lane.b32.xlu0 %v4271, 96
      %v5101 = vpop.permute.xlu0 %5100
      %5102 = vrot.lane.b32.xlu0 %v4361, 96
      %v5103 = vpop.permute.xlu0 %5102
      %5104 = vrot.lane.b32.xlu0 %v4274, 96
      %v5105 = vpop.permute.xlu0 %5104
      %5106 = vrot.lane.b32.xlu0 %v4362, 96
      %v5107 = vpop.permute.xlu0 %5106
      %5108 = vrot.lane.b32.xlu0 %v4277, 96
      %v5109 = vpop.permute.xlu0 %5108
      %5110 = vrot.lane.b32.xlu0 %v4363, 96
      %v5111 = vpop.permute.xlu0 %5110
      %5112 = vrot.lane.b32.xlu0 %v4280, 96
      %v5113 = vpop.permute.xlu0 %5112
      %5114 = vrot.lane.b32.xlu0 %v4364, 96
      %v5115 = vpop.permute.xlu0 %5114
      %5116 = vrot.lane.b32.xlu0 %v4283, 96
      %v5117 = vpop.permute.xlu0 %5116
      %5118 = vrot.lane.b32.xlu0 %v4365, 96
      %v5119 = vpop.permute.xlu0 %5118
      %5120 = vrot.lane.b32.xlu0 %v4286, 96
      %v5121 = vpop.permute.xlu0 %5120
      %5122 = vrot.lane.b32.xlu0 %v4366, 96
      %v5123 = vpop.permute.xlu0 %5122
      %5124 = vrot.lane.b32.xlu0 %v4289, 96
      %v5125 = vpop.permute.xlu0 %5124
      %5126 = vrot.lane.b32.xlu0 %v4367, 96
      %v5127 = vpop.permute.xlu0 %5126
      %5128 = vrot.lane.b32.xlu0 %v4292, 96
      %v5129 = vpop.permute.xlu0 %5128
      %5130 = vrot.lane.b32.xlu0 %v4368, 96
      %v5131 = vpop.permute.xlu0 %5130
      %5132 = vrot.lane.b32.xlu0 %v4295, 96
      %v5133 = vpop.permute.xlu0 %5132
      %5134 = vrot.lane.b32.xlu0 %v4369, 96
      %v5135 = vpop.permute.xlu0 %5134
      %5136 = vrot.lane.b32.xlu0 %v4298, 96
      %v5137 = vpop.permute.xlu0 %5136
      %5138 = vrot.lane.b32.xlu0 %v4370, 96
      %v5139 = vpop.permute.xlu0 %5138
      %5140 = vrot.lane.b32.xlu0 %v4301, 96
      %v5141 = vpop.permute.xlu0 %5140
      %5142 = vrot.lane.b32.xlu0 %v4371, 96
      %v5143 = vpop.permute.xlu0 %5142
      %5144 = vrot.lane.b32.xlu0 %v4304, 96
      %v5145 = vpop.permute.xlu0 %5144
      %5146 = vrot.lane.b32.xlu0 %v4372, 96
      %v5147 = vpop.permute.xlu0 %5146
      %5148 = vrot.lane.b32.xlu0 %v4307, 96
      %v5149 = vpop.permute.xlu0 %5148
      %5150 = vrot.lane.b32.xlu0 %v4373, 96
      %v5151 = vpop.permute.xlu0 %5150
      %5152 = vrot.lane.b32.xlu0 %v4310, 96
      %v5153 = vpop.permute.xlu0 %5152
      %5154 = vrot.lane.b32.xlu0 %v474, 96
      %v5155 = vpop.permute.xlu0 %5154
      %5156 = vrot.lane.b32.xlu0 %v376, 96
      %v5157 = vpop.permute.xlu0 %5156
      %5190 = vrot.lane.b32.xlu0 %v4427, 112
      %v5191 = vpop.permute.xlu0 %5190
      %5192 = vrot.lane.b32.xlu0 %v4429, 112
      %v5193 = vpop.permute.xlu0 %5192
      %5194 = vrot.lane.b32.xlu0 %v4432, 112
      %v5195 = vpop.permute.xlu0 %5194
      %5196 = vrot.lane.b32.xlu0 %v4434, 112
      %v5197 = vpop.permute.xlu0 %5196
      %5198 = vrot.lane.b32.xlu0 %v4437, 112
      %v5199 = vpop.permute.xlu0 %5198
      %5200 = vrot.lane.b32.xlu0 %v4439, 112
      %v5201 = vpop.permute.xlu0 %5200
      %5202 = vrot.lane.b32.xlu0 %v4442, 112
      %v5203 = vpop.permute.xlu0 %5202
      %5204 = vrot.lane.b32.xlu0 %v4444, 112
      %v5205 = vpop.permute.xlu0 %5204
      %5206 = vrot.lane.b32.xlu0 %v4447, 112
      %v5207 = vpop.permute.xlu0 %5206
      %5208 = vrot.lane.b32.xlu0 %v4449, 112
      %v5209 = vpop.permute.xlu0 %5208
      %5210 = vrot.lane.b32.xlu0 %v4452, 112
      %v5211 = vpop.permute.xlu0 %5210
      %5212 = vrot.lane.b32.xlu0 %v4454, 112
      %v5213 = vpop.permute.xlu0 %5212
      %5214 = vrot.lane.b32.xlu0 %v4457, 112
      %v5215 = vpop.permute.xlu0 %5214
      %5216 = vrot.lane.b32.xlu0 %v4459, 112
      %v5217 = vpop.permute.xlu0 %5216
      %5218 = vrot.lane.b32.xlu0 %v4462, 112
      %v5219 = vpop.permute.xlu0 %5218
      %5220 = vrot.lane.b32.xlu0 %v4464, 112
      %v5221 = vpop.permute.xlu0 %5220
      %5222 = vrot.lane.b32.xlu0 %v4467, 112
      %v5223 = vpop.permute.xlu0 %5222
      %5224 = vrot.lane.b32.xlu0 %v4469, 112
      %v5225 = vpop.permute.xlu0 %5224
      %5226 = vrot.lane.b32.xlu0 %v4472, 112
      %v5227 = vpop.permute.xlu0 %5226
      %5228 = vrot.lane.b32.xlu0 %v4474, 112
      %v5229 = vpop.permute.xlu0 %5228
      %5230 = vrot.lane.b32.xlu0 %v4477, 112
      %v5231 = vpop.permute.xlu0 %5230
      %5232 = vrot.lane.b32.xlu0 %v4479, 112
      %v5233 = vpop.permute.xlu0 %5232
      %5234 = vrot.lane.b32.xlu0 %v4482, 112
      %v5235 = vpop.permute.xlu0 %5234
      %5236 = vrot.lane.b32.xlu0 %v4484, 112
      %v5237 = vpop.permute.xlu0 %5236
      %5238 = vrot.lane.b32.xlu0 %v4487, 112
      %v5239 = vpop.permute.xlu0 %5238
      %5240 = vrot.lane.b32.xlu0 %v4489, 112
      %v5241 = vpop.permute.xlu0 %5240
      %5242 = vrot.lane.b32.xlu0 %v4492, 112
      %v5243 = vpop.permute.xlu0 %5242
      %5244 = vrot.lane.b32.xlu0 %v4494, 112
      %v5245 = vpop.permute.xlu0 %5244
      %5246 = vrot.lane.b32.xlu0 %v4574, 112
      %v5247 = vpop.permute.xlu0 %5246
      %5248 = vrot.lane.b32.xlu0 %v4576, 112
      %v5249 = vpop.permute.xlu0 %5248
      %5250 = vrot.lane.b32.xlu0 %v543, 112
      %v5251 = vpop.permute.xlu0 %5250
      %5252 = vrot.lane.b32.xlu0 %v545, 112
      %v5253 = vpop.permute.xlu0 %5252
      %v5286 = vsel %vm2049, %v474, %v4615
      %v5287 = vsel %vm2049, %v376, %v4617
      %v5288 = vsel %vm2049, %v4358, %v4619
      %v5289 = vsel %vm2049, %v4265, %v4621
      %v5290 = vsel %vm2049, %v4359, %v4623
      %v5291 = vsel %vm2049, %v4268, %v4625
      %v5292 = vsel %vm2049, %v4360, %v4627
      %v5293 = vsel %vm2049, %v4271, %v4629
      %v5294 = vsel %vm2049, %v4361, %v4631
      %v5295 = vsel %vm2049, %v4274, %v4633
      %v5296 = vsel %vm2049, %v4362, %v4635
      %v5297 = vsel %vm2049, %v4277, %v4637
      %v5298 = vsel %vm2049, %v4363, %v4639
      %v5299 = vsel %vm2049, %v4280, %v4641
      %v5300 = vsel %vm2049, %v4364, %v4643
      %v5301 = vsel %vm2049, %v4283, %v4645
      %v5302 = vsel %vm2049, %v4365, %v4647
      %v5303 = vsel %vm2049, %v4286, %v4649
      %v5304 = vsel %vm2049, %v4366, %v4651
      %v5305 = vsel %vm2049, %v4289, %v4653
      %v5306 = vsel %vm2049, %v4367, %v4655
      %v5307 = vsel %vm2049, %v4292, %v4657
      %v5308 = vsel %vm2049, %v4368, %v4659
      %v5309 = vsel %vm2049, %v4295, %v4661
      %v5310 = vsel %vm2049, %v4369, %v4663
      %v5311 = vsel %vm2049, %v4298, %v4665
      %v5312 = vsel %vm2049, %v4370, %v4667
      %v5313 = vsel %vm2049, %v4301, %v4669
      %v5314 = vsel %vm2049, %v4371, %v4671
      %v5315 = vsel %vm2049, %v4304, %v4673
      %v5316 = vsel %vm2049, %v4372, %v4675
      %v5317 = vsel %vm2049, %v4307, %v4677
      %v5318 = vsel %vm3507, %v5286, %v4711
      %v5319 = vsel %vm3507, %v5287, %v4713
      %v5320 = vsel %vm3507, %v5288, %v4715
      %v5321 = vsel %vm3507, %v5289, %v4717
      %v5322 = vsel %vm3507, %v5290, %v4719
      %v5323 = vsel %vm3507, %v5291, %v4721
      %v5324 = vsel %vm3507, %v5292, %v4723
      %v5325 = vsel %vm3507, %v5293, %v4725
      %v5326 = vsel %vm3507, %v5294, %v4727
      %v5327 = vsel %vm3507, %v5295, %v4729
      %v5328 = vsel %vm3507, %v5296, %v4731
      %v5329 = vsel %vm3507, %v5297, %v4733
      %v5330 = vsel %vm3507, %v5298, %v4735
      %v5331 = vsel %vm3507, %v5299, %v4737
      %v5332 = vsel %vm3507, %v5300, %v4739
      %v5333 = vsel %vm3507, %v5301, %v4741
      %v5334 = vsel %vm3507, %v5302, %v4743
      %v5335 = vsel %vm3507, %v5303, %v4745
      %v5336 = vsel %vm3507, %v5304, %v4747
      %v5337 = vsel %vm3507, %v5305, %v4749
      %v5338 = vsel %vm3507, %v5306, %v4751
      %v5339 = vsel %vm3507, %v5307, %v4753
      %v5340 = vsel %vm3507, %v5308, %v4755
      %v5341 = vsel %vm3507, %v5309, %v4757
      %v5342 = vsel %vm3507, %v5310, %v4759
      %v5343 = vsel %vm3507, %v5311, %v4761
      %v5344 = vsel %vm3507, %v5312, %v4763
      %v5345 = vsel %vm3507, %v5313, %v4765
      %v5346 = vsel %vm3507, %v5314, %v4767
      %v5347 = vsel %vm3507, %v5315, %v4769
      %v5348 = vsel %vm3507, %v5316, %v4771
      %v5349 = vsel %vm3507, %v5317, %v4773
      %v5350 = vsel %vm3573, %v5318, %v4807
      %v5351 = vsel %vm3573, %v5319, %v4809
      %v5352 = vsel %vm3573, %v5320, %v4811
      %v5353 = vsel %vm3573, %v5321, %v4813
      %v5354 = vsel %vm3573, %v5322, %v4815
      %v5355 = vsel %vm3573, %v5323, %v4817
      %v5356 = vsel %vm3573, %v5324, %v4819
      %v5357 = vsel %vm3573, %v5325, %v4821
      %v5358 = vsel %vm3573, %v5326, %v4823
      %v5359 = vsel %vm3573, %v5327, %v4825
      %v5360 = vsel %vm3573, %v5328, %v4827
      %v5361 = vsel %vm3573, %v5329, %v4829
      %v5362 = vsel %vm3573, %v5330, %v4831
      %v5363 = vsel %vm3573, %v5331, %v4833
      %v5364 = vsel %vm3573, %v5332, %v4835
      %v5365 = vsel %vm3573, %v5333, %v4837
      %v5366 = vsel %vm3573, %v5334, %v4839
      %v5367 = vsel %vm3573, %v5335, %v4841
      %v5368 = vsel %vm3573, %v5336, %v4843
      %v5369 = vsel %vm3573, %v5337, %v4845
      %v5370 = vsel %vm3573, %v5338, %v4847
      %v5371 = vsel %vm3573, %v5339, %v4849
      %v5372 = vsel %vm3573, %v5340, %v4851
      %v5373 = vsel %vm3573, %v5341, %v4853
      %v5374 = vsel %vm3573, %v5342, %v4855
      %v5375 = vsel %vm3573, %v5343, %v4857
      %v5376 = vsel %vm3573, %v5344, %v4859
      %v5377 = vsel %vm3573, %v5345, %v4861
      %v5378 = vsel %vm3573, %v5346, %v4863
      %v5379 = vsel %vm3573, %v5347, %v4865
      %v5380 = vsel %vm3573, %v5348, %v4867
      %v5381 = vsel %vm3573, %v5349, %v4869
      %v5382 = vsel %vm3639, %v5350, %v4903
      %v5383 = vsel %vm3639, %v5351, %v4905
      %v5384 = vsel %vm3639, %v5352, %v4907
      %v5385 = vsel %vm3639, %v5353, %v4909
      %v5386 = vsel %vm3639, %v5354, %v4911
      %v5387 = vsel %vm3639, %v5355, %v4913
      %v5388 = vsel %vm3639, %v5356, %v4915
      %v5389 = vsel %vm3639, %v5357, %v4917
      %v5390 = vsel %vm3639, %v5358, %v4919
      %v5391 = vsel %vm3639, %v5359, %v4921
      %v5392 = vsel %vm3639, %v5360, %v4923
      %v5393 = vsel %vm3639, %v5361, %v4925
      %v5394 = vsel %vm3639, %v5362, %v4927
      %v5395 = vsel %vm3639, %v5363, %v4929
      %v5396 = vsel %vm3639, %v5364, %v4931
      %v5397 = vsel %vm3639, %v5365, %v4933
      %v5398 = vsel %vm3639, %v5366, %v4935
      %v5399 = vsel %vm3639, %v5367, %v4937
      %v5400 = vsel %vm3639, %v5368, %v4939
      %v5401 = vsel %vm3639, %v5369, %v4941
      %v5402 = vsel %vm3639, %v5370, %v4943
      %v5403 = vsel %vm3639, %v5371, %v4945
      %v5404 = vsel %vm3639, %v5372, %v4947
      %v5405 = vsel %vm3639, %v5373, %v4949
      %v5406 = vsel %vm3639, %v5374, %v4951
      %v5407 = vsel %vm3639, %v5375, %v4953
      %v5408 = vsel %vm3639, %v5376, %v4955
      %v5409 = vsel %vm3639, %v5377, %v4957
      %v5410 = vsel %vm3639, %v5378, %v4959
      %v5411 = vsel %vm3639, %v5379, %v4961
      %v5412 = vsel %vm3639, %v5380, %v4963
      %v5413 = vsel %vm3639, %v5381, %v4965
      %vm5414 = vcmask 654336
      %v5415 = vsel %vm5414, %v5382, %v4999
      %v5416 = vsel %vm5414, %v5383, %v5001
      %v5417 = vsel %vm5414, %v5384, %v5003
      %v5418 = vsel %vm5414, %v5385, %v5005
      %v5419 = vsel %vm5414, %v5386, %v5007
      %v5420 = vsel %vm5414, %v5387, %v5009
      %v5421 = vsel %vm5414, %v5388, %v5011
      %v5422 = vsel %vm5414, %v5389, %v5013
      %v5423 = vsel %vm5414, %v5390, %v5015
      %v5424 = vsel %vm5414, %v5391, %v5017
      %v5425 = vsel %vm5414, %v5392, %v5019
      %v5426 = vsel %vm5414, %v5393, %v5021
      %v5427 = vsel %vm5414, %v5394, %v5023
      %v5428 = vsel %vm5414, %v5395, %v5025
      %v5429 = vsel %vm5414, %v5396, %v5027
      %v5430 = vsel %vm5414, %v5397, %v5029
      %v5431 = vsel %vm5414, %v5398, %v5031
      %v5432 = vsel %vm5414, %v5399, %v5033
      %v5433 = vsel %vm5414, %v5400, %v5035
      %v5434 = vsel %vm5414, %v5401, %v5037
      %v5435 = vsel %vm5414, %v5402, %v5039
      %v5436 = vsel %vm5414, %v5403, %v5041
      %v5437 = vsel %vm5414, %v5404, %v5043
      %v5438 = vsel %vm5414, %v5405, %v5045
      %v5439 = vsel %vm5414, %v5406, %v5047
      %v5440 = vsel %vm5414, %v5407, %v5049
      %v5441 = vsel %vm5414, %v5408, %v5051
      %v5442 = vsel %vm5414, %v5409, %v5053
      %v5443 = vsel %vm5414, %v5410, %v5055
      %v5444 = vsel %vm5414, %v5411, %v5057
      %v5445 = vsel %vm5414, %v5412, %v5059
      %v5446 = vsel %vm5414, %v5413, %v5061
      %vm5447 = vcmask 785408
      %v5448 = vsel %vm5447, %v5415, %v5095
      %v5449 = vsel %vm5447, %v5416, %v5097
      %v5450 = vsel %vm5447, %v5417, %v5099
      %v5451 = vsel %vm5447, %v5418, %v5101
      %v5452 = vsel %vm5447, %v5419, %v5103
      %v5453 = vsel %vm5447, %v5420, %v5105
      %v5454 = vsel %vm5447, %v5421, %v5107
      %v5455 = vsel %vm5447, %v5422, %v5109
      %v5456 = vsel %vm5447, %v5423, %v5111
      %v5457 = vsel %vm5447, %v5424, %v5113
      %v5458 = vsel %vm5447, %v5425, %v5115
      %v5459 = vsel %vm5447, %v5426, %v5117
      %v5460 = vsel %vm5447, %v5427, %v5119
      %v5461 = vsel %vm5447, %v5428, %v5121
      %v5462 = vsel %vm5447, %v5429, %v5123
      %v5463 = vsel %vm5447, %v5430, %v5125
      %v5464 = vsel %vm5447, %v5431, %v5127
      %v5465 = vsel %vm5447, %v5432, %v5129
      %v5466 = vsel %vm5447, %v5433, %v5131
      %v5467 = vsel %vm5447, %v5434, %v5133
      %v5468 = vsel %vm5447, %v5435, %v5135
      %v5469 = vsel %vm5447, %v5436, %v5137
      %v5470 = vsel %vm5447, %v5437, %v5139
      %v5471 = vsel %vm5447, %v5438, %v5141
      %v5472 = vsel %vm5447, %v5439, %v5143
      %v5473 = vsel %vm5447, %v5440, %v5145
      %v5474 = vsel %vm5447, %v5441, %v5147
      %v5475 = vsel %vm5447, %v5442, %v5149
      %v5476 = vsel %vm5447, %v5443, %v5151
      %v5477 = vsel %vm5447, %v5444, %v5153
      %v5478 = vsel %vm5447, %v5445, %v5155
      %v5479 = vsel %vm5447, %v5446, %v5157
      %vm5480 = vcmask 916480
      %v5481 = vsel %vm5480, %v5448, %v5191
      %v5482 = vsel %vm5480, %v5449, %v5193
      %v5483 = vsel %vm5480, %v5450, %v5195
      %v5484 = vsel %vm5480, %v5451, %v5197
      %v5485 = vsel %vm5480, %v5452, %v5199
      %v5486 = vsel %vm5480, %v5453, %v5201
      %v5487 = vsel %vm5480, %v5454, %v5203
      %v5488 = vsel %vm5480, %v5455, %v5205
      %v5489 = vsel %vm5480, %v5456, %v5207
      %v5490 = vsel %vm5480, %v5457, %v5209
      %v5491 = vsel %vm5480, %v5458, %v5211
      %v5492 = vsel %vm5480, %v5459, %v5213
      %v5493 = vsel %vm5480, %v5460, %v5215
      %v5494 = vsel %vm5480, %v5461, %v5217
      %v5495 = vsel %vm5480, %v5462, %v5219
      %v5496 = vsel %vm5480, %v5463, %v5221
      %v5497 = vsel %vm5480, %v5464, %v5223
      %v5498 = vsel %vm5480, %v5465, %v5225
      %v5499 = vsel %vm5480, %v5466, %v5227
      %v5500 = vsel %vm5480, %v5467, %v5229
      %v5501 = vsel %vm5480, %v5468, %v5231
      %v5502 = vsel %vm5480, %v5469, %v5233
      %v5503 = vsel %vm5480, %v5470, %v5235
      %v5504 = vsel %vm5480, %v5471, %v5237
      %v5505 = vsel %vm5480, %v5472, %v5239
      %v5506 = vsel %vm5480, %v5473, %v5241
      %v5507 = vsel %vm5480, %v5474, %v5243
      %v5508 = vsel %vm5480, %v5475, %v5245
      %v5509 = vsel %vm5480, %v5476, %v5247
      %v5510 = vsel %vm5480, %v5477, %v5249
      %v5511 = vsel %vm5480, %v5478, %v5251
      %v5512 = vsel %vm5480, %v5479, %v5253
      %v5513 = vpack.c.bf16 %v5482, %v5481
      %v5514 = vpack.c.bf16 %v4504, %v4502
      %v5515 = vpack.c.bf16 %v5484, %v5483
      %v5516 = vpack.c.bf16 %v4509, %v4507
      %v5517 = vpack.c.bf16 %v5486, %v5485
      %v5518 = vpack.c.bf16 %v4514, %v4512
      %v5519 = vpack.c.bf16 %v5488, %v5487
      %v5520 = vpack.c.bf16 %v4519, %v4517
      %v5521 = vpack.c.bf16 %v5490, %v5489
      %v5522 = vpack.c.bf16 %v4524, %v4522
      %v5523 = vpack.c.bf16 %v5492, %v5491
      %v5524 = vpack.c.bf16 %v4529, %v4527
      %v5525 = vpack.c.bf16 %v5494, %v5493
      %v5526 = vpack.c.bf16 %v4534, %v4532
      %v5527 = vpack.c.bf16 %v5496, %v5495
      %v5528 = vpack.c.bf16 %v4539, %v4537
      %v5529 = vpack.c.bf16 %v5498, %v5497
      %v5530 = vpack.c.bf16 %v4544, %v4542
      %v5531 = vpack.c.bf16 %v5500, %v5499
      %v5532 = vpack.c.bf16 %v4549, %v4547
      %v5533 = vpack.c.bf16 %v5502, %v5501
      %v5534 = vpack.c.bf16 %v4554, %v4552
      %v5535 = vpack.c.bf16 %v5504, %v5503
      %v5536 = vpack.c.bf16 %v4559, %v4557
      %v5537 = vpack.c.bf16 %v5506, %v5505
      %v5538 = vpack.c.bf16 %v4564, %v4562
      %v5539 = vpack.c.bf16 %v5508, %v5507
      %v5540 = vpack.c.bf16 %v4569, %v4567
      %v5541 = vpack.c.bf16 %v5510, %v5509
      %v5542 = vpack.c.bf16 %v4581, %v4579
      %v5543 = vpack.c.bf16 %v5512, %v5511
      %v5544 = vpack.c.bf16 %v626, %v624
      %v5545 = vld [vmem:[%s5] sm:$0xf]
      %v5546 = vld [vmem:[%s5 + $0x4] sm:$0xf]
      %v5547 = vld [vmem:[%s5 + $0x8] sm:$0xf]
      %v5548 = vld [vmem:[%s5 + $0xc] sm:$0xf]
      %v5549 = vld [vmem:[%s5 + $0x10] sm:$0xf]
      %v5550 = vld [vmem:[%s5 + $0x14] sm:$0xf]
      %v5551 = vld [vmem:[%s5 + $0x18] sm:$0xf]
      %v5552 = vld [vmem:[%s5 + $0x1c] sm:$0xf]
      %v5553 = vld [vmem:[%s5 + $0x20] sm:$0xf]
      %v5554 = vld [vmem:[%s5 + $0x24] sm:$0xf]
      %v5555 = vld [vmem:[%s5 + $0x28] sm:$0xf]
      %v5556 = vld [vmem:[%s5 + $0x2c] sm:$0xf]
      %v5557 = vld [vmem:[%s5 + $0x30] sm:$0xf]
      %v5558 = vld [vmem:[%s5 + $0x34] sm:$0xf]
      %v5559 = vld [vmem:[%s5 + $0x38] sm:$0xf]
      %v5560 = vld [vmem:[%s5 + $0x3c] sm:$0xf]
      %v5561 = vld [vmem:[%s5 + $0x40] sm:$0xf]
      %v5562 = vld [vmem:[%s5 + $0x44] sm:$0xf]
      %v5581 = vunpack.c.l.b16 %v5545
      %v5582 = vunpack.c.l.b16 %v5546
      %v5583 = vunpack.c.l.b16 %v5547
      %v5584 = vunpack.c.l.b16 %v5548
      %v5585 = vunpack.c.l.b16 %v5549
      %v5586 = vunpack.c.l.b16 %v5550
      %v5587 = vunpack.c.l.b16 %v5551
      %v5588 = vunpack.c.l.b16 %v5552
      %v5589 = vunpack.c.l.b16 %v5553
      %v5590 = vunpack.c.l.b16 %v5554
      %v5591 = vunpack.c.l.b16 %v5555
      %v5592 = vunpack.c.l.b16 %v5556
      %v5593 = vunpack.c.l.b16 %v5557
      %v5594 = vunpack.c.l.b16 %v5558
      %v5595 = vunpack.c.l.b16 %v5559
      %v5596 = vunpack.c.l.b16 %v5560
      %v5597 = vunpack.c.l.b16 %v5561
      %v5598 = vunpack.c.l.b16 %v5562
      %v5599 = vpack.c.b16 %v5582, %v5581
      %v5600 = vpack.c.b16 %v5584, %v5583
      %v5601 = vpack.c.b16 %v5586, %v5585
      %v5602 = vpack.c.b16 %v5588, %v5587
      %v5603 = vpack.c.b16 %v5590, %v5589
      %v5604 = vpack.c.b16 %v5592, %v5591
      %v5605 = vpack.c.b16 %v5594, %v5593
      %v5606 = vpack.c.b16 %v5596, %v5595
      %v5607 = vpack.c.b16 %v5598, %v5597
      %v5618 = vsel %vm2049, %v5514, 0
      %v5621 = vsel %vm2049, %v5516, 0
      %v5624 = vsel %vm2049, %v5518, 0
      %v5627 = vsel %vm2049, %v5520, 0
      %v5630 = vsel %vm2049, %v5522, 0
      %v5633 = vsel %vm2049, %v5524, 0
      %v5636 = vsel %vm2049, %v5526, 0
      %v5639 = vsel %vm2049, %v5528, 0
      %v5642 = vsel %vm2049, %v5530, 0
      %v5645 = vsel %vm2049, %v5532, 0
      %v5648 = vsel %vm2049, %v5534, 0
      %v5651 = vsel %vm2049, %v5536, 0
      %v5654 = vsel %vm2049, %v5538, 0
      %v5657 = vsel %vm2049, %v5540, 0
      %v5660 = vsel %vm2049, %v5542, 0
      %v5663 = vsel %vm2049, %v5544, 0
      %5665 = vmatprep.subr.bf16.mxu0 0
      %5666 = vmatpush1.bf16.msra.mxu0 %v5599
      %5667 = vmatprep.subr.bf16.mxu0 0
      %5668 = vmatpush1.bf16.msra.mxu0 %v5600
      %5669 = vmatprep.subr.bf16.mxu0 0
      %5670 = vmatpush1.bf16.msra.mxu0 %v5601
      %5671 = vmatprep.subr.bf16.mxu0 0
      %5672 = vmatpush1.bf16.msra.mxu0 %v5602
      %5673 = vmatprep.subr.bf16.mxu0 0
      %5674 = vmatpush1.bf16.msra.mxu0 %v5603
      %5675 = vmatprep.subr.bf16.mxu0 0
      %5676 = vmatpush1.bf16.msra.mxu0 %v5604
      %5677 = vmatprep.subr.bf16.mxu0 0
      %5678 = vmatpush1.bf16.msra.mxu0 %v5605
      %5679 = vmatprep.subr.bf16.mxu0 0
      %5680 = vmatpush1.bf16.msra.mxu0 %v5606
      %5681 = vmatprep.subr.bf16.mxu0 0
      %5682 = vmatpush1.bf16.msra.mxu0 %v5607
      %5683 = vmatprep.subr.bf16.mxu0 0
      %5684 = vmatpush1.bf16.msra.mxu0 0
      %5685 = vmatprep.subr.bf16.mxu0 0
      %5686 = vmatpush1.bf16.msra.mxu0 0
      %5687 = vmatprep.subr.bf16.mxu0 0
      %5688 = vmatpush1.bf16.msra.mxu0 0
      %5689 = vmatprep.subr.bf16.mxu0 0
      %5690 = vmatpush1.bf16.msra.mxu0 0
      %5691 = vmatprep.subr.bf16.mxu0 0
      %5692 = vmatpush1.bf16.msra.mxu0 0
      %5693 = vmatprep.subr.bf16.mxu0 0
      %5694 = vmatpush1.bf16.msra.mxu0 0
      %5695 = vmatprep.subr.bf16.mxu0 0
      %5696 = vmatpush1.bf16.msra.mxu0 0
      %5697 = vmatprep.mubr.bf16.mxu0 %v5618
      %5698 = vmatmul.mubr.bf16.gmra.mrb[0].mxu0 %v5513
      %v5699 = vpop.f32.mrb[0].mxu0
      %v5700 = vadd.f32 0.0, %v5699
      %v5701 = vpop.f32.mrb[0].mxu0
      %v5702 = vpop.f32.mrb[0].mxu0
      %v5703 = vadd.f32 0.0, %v5702
      %v5704 = vpop.f32.mrb[0].mxu0
      %5705 = vmatprep.mubr.bf16.mxu0 %v5621
      %5706 = vmatmul.mubr.bf16.gmra.mrb[0].mxu0 %v5515
      %v5707 = vpop.f32.mrb[0].mxu0
      %v5708 = vadd.f32 0.0, %v5707
      %v5709 = vpop.f32.mrb[0].mxu0
      %v5710 = vpop.f32.mrb[0].mxu0
      %v5711 = vadd.f32 0.0, %v5710
      %v5712 = vpop.f32.mrb[0].mxu0
      %5713 = vmatprep.mubr.bf16.mxu0 %v5624
      %5714 = vmatmul.mubr.bf16.gmra.mrb[0].mxu0 %v5517
      %v5715 = vpop.f32.mrb[0].mxu0
      %v5716 = vadd.f32 0.0, %v5715
      %v5717 = vpop.f32.mrb[0].mxu0
      %v5718 = vpop.f32.mrb[0].mxu0
      %v5719 = vadd.f32 0.0, %v5718
      %v5720 = vpop.f32.mrb[0].mxu0
      %5721 = vmatprep.mubr.bf16.mxu0 %v5627
      %5722 = vmatmul.mubr.bf16.gmra.mrb[0].mxu0 %v5519
      %v5723 = vpop.f32.mrb[0].mxu0
      %v5724 = vadd.f32 0.0, %v5723
      %v5725 = vpop.f32.mrb[0].mxu0
      %v5726 = vpop.f32.mrb[0].mxu0
      %v5727 = vadd.f32 0.0, %v5726
      %v5728 = vpop.f32.mrb[0].mxu0
      %5729 = vmatprep.mubr.bf16.mxu0 %v5630
      %5730 = vmatmul.mubr.bf16.gmra.mrb[0].mxu0 %v5521
      %v5731 = vpop.f32.mrb[0].mxu0
      %v5732 = vadd.f32 0.0, %v5731
      %v5733 = vpop.f32.mrb[0].mxu0
      %v5734 = vpop.f32.mrb[0].mxu0
      %v5735 = vadd.f32 0.0, %v5734
      %v5736 = vpop.f32.mrb[0].mxu0
      %5737 = vmatprep.mubr.bf16.mxu0 %v5633
      %5738 = vmatmul.mubr.bf16.gmra.mrb[0].mxu0 %v5523
      %v5739 = vpop.f32.mrb[0].mxu0
      %v5740 = vadd.f32 0.0, %v5739
      %v5741 = vpop.f32.mrb[0].mxu0
      %v5742 = vpop.f32.mrb[0].mxu0
      %v5743 = vadd.f32 0.0, %v5742
      %v5744 = vpop.f32.mrb[0].mxu0
      %5745 = vmatprep.mubr.bf16.mxu0 %v5636
      %5746 = vmatmul.mubr.bf16.gmra.mrb[0].mxu0 %v5525
      %v5747 = vpop.f32.mrb[0].mxu0
      %v5748 = vadd.f32 0.0, %v5747
      %v5749 = vpop.f32.mrb[0].mxu0
      %v5750 = vpop.f32.mrb[0].mxu0
      %v5751 = vadd.f32 0.0, %v5750
      %v5752 = vpop.f32.mrb[0].mxu0
      %5753 = vmatprep.mubr.bf16.mxu0 %v5639
      %5754 = vmatmul.mubr.bf16.gmra.mrb[0].mxu0 %v5527
      %v5755 = vpop.f32.mrb[0].mxu0
      %v5756 = vadd.f32 0.0, %v5755
      %v5757 = vpop.f32.mrb[0].mxu0
      %v5758 = vpop.f32.mrb[0].mxu0
      %v5759 = vadd.f32 0.0, %v5758
      %v5760 = vpop.f32.mrb[0].mxu0
      %5761 = vmatprep.mubr.bf16.mxu0 %v5642
      %5762 = vmatmul.mubr.bf16.gmra.mrb[0].mxu0 %v5529
      %v5763 = vpop.f32.mrb[0].mxu0
      %v5764 = vadd.f32 0.0, %v5763
      %v5765 = vpop.f32.mrb[0].mxu0
      %v5766 = vpop.f32.mrb[0].mxu0
      %v5767 = vadd.f32 0.0, %v5766
      %v5768 = vpop.f32.mrb[0].mxu0
      %5769 = vmatprep.mubr.bf16.mxu0 %v5645
      %5770 = vmatmul.mubr.bf16.gmra.mrb[0].mxu0 %v5531
      %v5771 = vpop.f32.mrb[0].mxu0
      %v5772 = vadd.f32 0.0, %v5771
      %v5773 = vpop.f32.mrb[0].mxu0
      %v5774 = vpop.f32.mrb[0].mxu0
      %v5775 = vadd.f32 0.0, %v5774
      %v5776 = vpop.f32.mrb[0].mxu0
      %5777 = vmatprep.mubr.bf16.mxu0 %v5648
      %5778 = vmatmul.mubr.bf16.gmra.mrb[0].mxu0 %v5533
      %v5779 = vpop.f32.mrb[0].mxu0
      %v5780 = vadd.f32 0.0, %v5779
      %v5781 = vpop.f32.mrb[0].mxu0
      %v5782 = vpop.f32.mrb[0].mxu0
      %v5783 = vadd.f32 0.0, %v5782
      %v5784 = vpop.f32.mrb[0].mxu0
      %5785 = vmatprep.mubr.bf16.mxu0 %v5651
      %5786 = vmatmul.mubr.bf16.gmra.mrb[0].mxu0 %v5535
      %v5787 = vpop.f32.mrb[0].mxu0
      %v5788 = vadd.f32 0.0, %v5787
      %v5789 = vpop.f32.mrb[0].mxu0
      %v5790 = vpop.f32.mrb[0].mxu0
      %v5791 = vadd.f32 0.0, %v5790
      %v5792 = vpop.f32.mrb[0].mxu0
      %5793 = vmatprep.mubr.bf16.mxu0 %v5654
      %5794 = vmatmul.mubr.bf16.gmra.mrb[0].mxu0 %v5537
      %v5795 = vpop.f32.mrb[0].mxu0
      %v5796 = vadd.f32 0.0, %v5795
      %v5797 = vpop.f32.mrb[0].mxu0
      %v5798 = vpop.f32.mrb[0].mxu0
      %v5799 = vadd.f32 0.0, %v5798
      %v5800 = vpop.f32.mrb[0].mxu0
      %5801 = vmatprep.mubr.bf16.mxu0 %v5657
      %5802 = vmatmul.mubr.bf16.gmra.mrb[0].mxu0 %v5539
      %v5803 = vpop.f32.mrb[0].mxu0
      %v5804 = vadd.f32 0.0, %v5803
      %v5805 = vpop.f32.mrb[0].mxu0
      %v5806 = vpop.f32.mrb[0].mxu0
      %v5807 = vadd.f32 0.0, %v5806
      %v5808 = vpop.f32.mrb[0].mxu0
      %5809 = vmatprep.mubr.bf16.mxu0 %v5660
      %5810 = vmatmul.mubr.bf16.gmra.mrb[0].mxu0 %v5541
      %v5811 = vpop.f32.mrb[0].mxu0
      %v5812 = vadd.f32 0.0, %v5811
      %v5813 = vpop.f32.mrb[0].mxu0
      %v5814 = vpop.f32.mrb[0].mxu0
      %v5815 = vadd.f32 0.0, %v5814
      %v5816 = vpop.f32.mrb[0].mxu0
      %5817 = vmatprep.mubr.bf16.mxu0 %v5663
      %5818 = vmatmul.mubr.bf16.gmra.mrb[0].mxu0 %v5543
      %v5819 = vpop.f32.mrb[0].mxu0
      %v5820 = vadd.f32 0.0, %v5819
      %v5821 = vpop.f32.mrb[0].mxu0
      %v5822 = vpop.f32.mrb[0].mxu0
      %v5823 = vadd.f32 0.0, %v5822
      %v5824 = vpop.f32.mrb[0].mxu0
      %5825 = vdwg.mxu0
      %v5826 = vtanh.pop %v5700
      %v5827 = vtanh.pop %v5703
      %v5828 = vtanh.pop %v5708
      %v5829 = vtanh.pop %v5711
      %v5830 = vtanh.pop %v5716
      %v5831 = vtanh.pop %v5719
      %v5832 = vtanh.pop %v5724
      %v5833 = vtanh.pop %v5727
      %v5834 = vtanh.pop %v5732
      %v5835 = vtanh.pop %v5735
      %v5836 = vtanh.pop %v5740
      %v5837 = vtanh.pop %v5743
      %v5838 = vtanh.pop %v5748
      %v5839 = vtanh.pop %v5751
      %v5840 = vtanh.pop %v5756
      %v5841 = vtanh.pop %v5759
      %v5842 = vtanh.pop %v5764
      %v5843 = vtanh.pop %v5767
      %v5844 = vtanh.pop %v5772
      %v5845 = vtanh.pop %v5775
      %v5846 = vtanh.pop %v5780
      %v5847 = vtanh.pop %v5783
      %v5848 = vtanh.pop %v5788
      %v5849 = vtanh.pop %v5791
      %v5850 = vtanh.pop %v5796
      %v5851 = vtanh.pop %v5799
      %v5852 = vtanh.pop %v5804
      %v5853 = vtanh.pop %v5807
      %v5854 = vtanh.pop %v5812
      %v5855 = vtanh.pop %v5815
      %v5856 = vtanh.pop %v5820
      %v5857 = vtanh.pop %v5823
      %5890 = vrot.lane.b32.xlu0 %v1993, 112
      %v5891 = vpop.permute.xlu0 %5890
      %5892 = vrot.lane.b32.xlu0 %v1994, 112
      %v5893 = vpop.permute.xlu0 %5892
      %5894 = vrot.lane.b32.xlu0 %v1995, 112
      %v5895 = vpop.permute.xlu0 %5894
      %5896 = vrot.lane.b32.xlu0 %v1996, 112
      %v5897 = vpop.permute.xlu0 %5896
      %5898 = vrot.lane.b32.xlu0 %v1997, 112
      %v5899 = vpop.permute.xlu0 %5898
      %5900 = vrot.lane.b32.xlu0 %v1998, 112
      %v5901 = vpop.permute.xlu0 %5900
      %5902 = vrot.lane.b32.xlu0 %v1999, 112
      %v5903 = vpop.permute.xlu0 %5902
      %5904 = vrot.lane.b32.xlu0 %v2000, 112
      %v5905 = vpop.permute.xlu0 %5904
      %5906 = vrot.lane.b32.xlu0 %v2001, 112
      %v5907 = vpop.permute.xlu0 %5906
      %5908 = vrot.lane.b32.xlu0 %v2002, 112
      %v5909 = vpop.permute.xlu0 %5908
      %5910 = vrot.lane.b32.xlu0 %v2003, 112
      %v5911 = vpop.permute.xlu0 %5910
      %5912 = vrot.lane.b32.xlu0 %v2004, 112
      %v5913 = vpop.permute.xlu0 %5912
      %5914 = vrot.lane.b32.xlu0 %v2005, 112
      %v5915 = vpop.permute.xlu0 %5914
      %5916 = vrot.lane.b32.xlu0 %v2006, 112
      %v5917 = vpop.permute.xlu0 %5916
      %5918 = vrot.lane.b32.xlu0 %v2007, 112
      %v5919 = vpop.permute.xlu0 %5918
      %5920 = vrot.lane.b32.xlu0 %v2008, 112
      %v5921 = vpop.permute.xlu0 %5920
      %5922 = vrot.lane.b32.xlu0 %v2009, 112
      %v5923 = vpop.permute.xlu0 %5922
      %5924 = vrot.lane.b32.xlu0 %v2010, 112
      %v5925 = vpop.permute.xlu0 %5924
      %5926 = vrot.lane.b32.xlu0 %v2011, 112
      %v5927 = vpop.permute.xlu0 %5926
      %5928 = vrot.lane.b32.xlu0 %v2012, 112
      %v5929 = vpop.permute.xlu0 %5928
      %5930 = vrot.lane.b32.xlu0 %v2013, 112
      %v5931 = vpop.permute.xlu0 %5930
      %5932 = vrot.lane.b32.xlu0 %v2014, 112
      %v5933 = vpop.permute.xlu0 %5932
      %5934 = vrot.lane.b32.xlu0 %v2015, 112
      %v5935 = vpop.permute.xlu0 %5934
      %5936 = vrot.lane.b32.xlu0 %v2016, 112
      %v5937 = vpop.permute.xlu0 %5936
      %5938 = vrot.lane.b32.xlu0 %v2017, 112
      %v5939 = vpop.permute.xlu0 %5938
      %5940 = vrot.lane.b32.xlu0 %v2018, 112
      %v5941 = vpop.permute.xlu0 %5940
      %5942 = vrot.lane.b32.xlu0 %v2019, 112
      %v5943 = vpop.permute.xlu0 %5942
      %5944 = vrot.lane.b32.xlu0 %v2020, 112
      %v5945 = vpop.permute.xlu0 %5944
      %5946 = vrot.lane.b32.xlu0 %v2021, 112
      %v5947 = vpop.permute.xlu0 %5946
      %5948 = vrot.lane.b32.xlu0 %v2022, 112
      %v5949 = vpop.permute.xlu0 %5948
      %5950 = vrot.lane.b32.xlu0 %v2023, 112
      %v5951 = vpop.permute.xlu0 %5950
      %5952 = vrot.lane.b32.xlu0 %v2024, 112
      %v5953 = vpop.permute.xlu0 %5952
      %v5954 = vrot.slane %v5891, 7
      %v5955 = vrot.slane %v5893, 7
      %v5956 = vsel %vm374, %v5954, %v5955
      %v5957 = vrot.slane %v5895, 7
      %v5958 = vrot.slane %v5897, 7
      %v5959 = vsel %vm374, %v5957, %v5958
      %v5960 = vrot.slane %v5899, 7
      %v5961 = vrot.slane %v5901, 7
      %v5962 = vsel %vm374, %v5960, %v5961
      %v5963 = vrot.slane %v5903, 7
      %v5964 = vrot.slane %v5905, 7
      %v5965 = vsel %vm374, %v5963, %v5964
      %v5966 = vrot.slane %v5907, 7
      %v5967 = vrot.slane %v5909, 7
      %v5968 = vsel %vm374, %v5966, %v5967
      %v5969 = vrot.slane %v5911, 7
      %v5970 = vrot.slane %v5913, 7
      %v5971 = vsel %vm374, %v5969, %v5970
      %v5972 = vrot.slane %v5915, 7
      %v5973 = vrot.slane %v5917, 7
      %v5974 = vsel %vm374, %v5972, %v5973
      %v5975 = vrot.slane %v5919, 7
      %v5976 = vrot.slane %v5921, 7
      %v5977 = vsel %vm374, %v5975, %v5976
      %v5978 = vrot.slane %v5923, 7
      %v5979 = vrot.slane %v5925, 7
      %v5980 = vsel %vm374, %v5978, %v5979
      %v5981 = vrot.slane %v5927, 7
      %v5982 = vrot.slane %v5929, 7
      %v5983 = vsel %vm374, %v5981, %v5982
      %v5984 = vrot.slane %v5931, 7
      %v5985 = vrot.slane %v5933, 7
      %v5986 = vsel %vm374, %v5984, %v5985
      %v5987 = vrot.slane %v5935, 7
      %v5988 = vrot.slane %v5937, 7
      %v5989 = vsel %vm374, %v5987, %v5988
      %v5990 = vrot.slane %v5939, 7
      %v5991 = vrot.slane %v5941, 7
      %v5992 = vsel %vm374, %v5990, %v5991
      %v5993 = vrot.slane %v5943, 7
      %v5994 = vrot.slane %v5945, 7
      %v5995 = vsel %vm374, %v5993, %v5994
      %v5996 = vrot.slane %v5947, 7
      %v5997 = vrot.slane %v5949, 7
      %v5998 = vsel %vm374, %v5996, %v5997
      %v5999 = vrot.slane %v5951, 7
      %v6000 = vrot.slane %v5953, 7
      %v6001 = vsel %vm374, %v5999, %v6000
      %v6049 = vsel %vm374, 0.0, %v5954
      %v6050 = vsel %vm374, 0.0, %v5957
      %v6051 = vsel %vm374, 0.0, %v5960
      %v6052 = vsel %vm374, 0.0, %v5963
      %v6053 = vsel %vm374, 0.0, %v5966
      %v6054 = vsel %vm374, 0.0, %v5969
      %v6055 = vsel %vm374, 0.0, %v5972
      %v6056 = vsel %vm374, 0.0, %v5975
      %v6057 = vsel %vm374, 0.0, %v5978
      %v6058 = vsel %vm374, 0.0, %v5981
      %v6059 = vsel %vm374, 0.0, %v5984
      %v6060 = vsel %vm374, 0.0, %v5987
      %v6061 = vsel %vm374, 0.0, %v5990
      %v6062 = vsel %vm374, 0.0, %v5993
      %v6063 = vsel %vm374, 0.0, %v5996
      %v6064 = vsel %vm374, 0.0, %v5999
      %v6065 = vsel %vm374, %v5955, 0.0
      %v6066 = vsel %vm374, %v5958, 0.0
      %v6067 = vsel %vm374, %v5961, 0.0
      %v6068 = vsel %vm374, %v5964, 0.0
      %v6069 = vsel %vm374, %v5967, 0.0
      %v6070 = vsel %vm374, %v5970, 0.0
      %v6071 = vsel %vm374, %v5973, 0.0
      %v6072 = vsel %vm374, %v5976, 0.0
      %v6073 = vsel %vm374, %v5979, 0.0
      %v6074 = vsel %vm374, %v5982, 0.0
      %v6075 = vsel %vm374, %v5985, 0.0
      %v6076 = vsel %vm374, %v5988, 0.0
      %v6077 = vsel %vm374, %v5991, 0.0
      %v6078 = vsel %vm374, %v5994, 0.0
      %v6079 = vsel %vm374, %v5997, 0.0
      %v6080 = vsel %vm374, %v6000, 0.0
      %v6111 = vrot.slane %v6049, 1
      %v6112 = vrot.slane %v5956, 1
      %v6113 = vsel %vm540, %v6111, %v6112
      %v6114 = vrot.slane %v6065, 1
      %v6115 = vsel %vm540, %v6112, %v6114
      %v6116 = vrot.slane %v6050, 1
      %v6117 = vrot.slane %v5959, 1
      %v6118 = vsel %vm540, %v6116, %v6117
      %v6119 = vrot.slane %v6066, 1
      %v6120 = vsel %vm540, %v6117, %v6119
      %v6121 = vrot.slane %v6051, 1
      %v6122 = vrot.slane %v5962, 1
      %v6123 = vsel %vm540, %v6121, %v6122
      %v6124 = vrot.slane %v6067, 1
      %v6125 = vsel %vm540, %v6122, %v6124
      %v6126 = vrot.slane %v6052, 1
      %v6127 = vrot.slane %v5965, 1
      %v6128 = vsel %vm540, %v6126, %v6127
      %v6129 = vrot.slane %v6068, 1
      %v6130 = vsel %vm540, %v6127, %v6129
      %v6131 = vrot.slane %v6053, 1
      %v6132 = vrot.slane %v5968, 1
      %v6133 = vsel %vm540, %v6131, %v6132
      %v6134 = vrot.slane %v6069, 1
      %v6135 = vsel %vm540, %v6132, %v6134
      %v6136 = vrot.slane %v6054, 1
      %v6137 = vrot.slane %v5971, 1
      %v6138 = vsel %vm540, %v6136, %v6137
      %v6139 = vrot.slane %v6070, 1
      %v6140 = vsel %vm540, %v6137, %v6139
      %v6141 = vrot.slane %v6055, 1
      %v6142 = vrot.slane %v5974, 1
      %v6143 = vsel %vm540, %v6141, %v6142
      %v6144 = vrot.slane %v6071, 1
      %v6145 = vsel %vm540, %v6142, %v6144
      %v6146 = vrot.slane %v6056, 1
      %v6147 = vrot.slane %v5977, 1
      %v6148 = vsel %vm540, %v6146, %v6147
      %v6149 = vrot.slane %v6072, 1
      %v6150 = vsel %vm540, %v6147, %v6149
      %v6151 = vrot.slane %v6057, 1
      %v6152 = vrot.slane %v5980, 1
      %v6153 = vsel %vm540, %v6151, %v6152
      %v6154 = vrot.slane %v6073, 1
      %v6155 = vsel %vm540, %v6152, %v6154
      %v6156 = vrot.slane %v6058, 1
      %v6157 = vrot.slane %v5983, 1
      %v6158 = vsel %vm540, %v6156, %v6157
      %v6159 = vrot.slane %v6074, 1
      %v6160 = vsel %vm540, %v6157, %v6159
      %v6161 = vrot.slane %v6059, 1
      %v6162 = vrot.slane %v5986, 1
      %v6163 = vsel %vm540, %v6161, %v6162
      %v6164 = vrot.slane %v6075, 1
      %v6165 = vsel %vm540, %v6162, %v6164
      %v6166 = vrot.slane %v6060, 1
      %v6167 = vrot.slane %v5989, 1
      %v6168 = vsel %vm540, %v6166, %v6167
      %v6169 = vrot.slane %v6076, 1
      %v6170 = vsel %vm540, %v6167, %v6169
      %v6171 = vrot.slane %v6061, 1
      %v6172 = vrot.slane %v5992, 1
      %v6173 = vsel %vm540, %v6171, %v6172
      %v6174 = vrot.slane %v6077, 1
      %v6175 = vsel %vm540, %v6172, %v6174
      %v6176 = vrot.slane %v6062, 1
      %v6177 = vrot.slane %v5995, 1
      %v6178 = vsel %vm540, %v6176, %v6177
      %v6179 = vrot.slane %v6078, 1
      %v6180 = vsel %vm540, %v6177, %v6179
      %v6181 = vrot.slane %v6063, 1
      %v6182 = vrot.slane %v5998, 1
      %v6183 = vsel %vm540, %v6181, %v6182
      %v6184 = vrot.slane %v6079, 1
      %v6185 = vsel %vm540, %v6182, %v6184
      %v6186 = vrot.slane %v6049, 2
      %v6187 = vrot.slane %v5956, 2
      %v6188 = vsel %vm621, %v6186, %v6187
      %v6189 = vrot.slane %v6065, 2
      %v6190 = vsel %vm621, %v6187, %v6189
      %v6191 = vrot.slane %v6050, 2
      %v6192 = vrot.slane %v5959, 2
      %v6193 = vsel %vm621, %v6191, %v6192
      %v6194 = vrot.slane %v6066, 2
      %v6195 = vsel %vm621, %v6192, %v6194
      %v6196 = vrot.slane %v6051, 2
      %v6197 = vrot.slane %v5962, 2
      %v6198 = vsel %vm621, %v6196, %v6197
      %v6199 = vrot.slane %v6067, 2
      %v6200 = vsel %vm621, %v6197, %v6199
      %v6201 = vrot.slane %v6052, 2
      %v6202 = vrot.slane %v5965, 2
      %v6203 = vsel %vm621, %v6201, %v6202
      %v6204 = vrot.slane %v6068, 2
      %v6205 = vsel %vm621, %v6202, %v6204
      %v6206 = vrot.slane %v6053, 2
      %v6207 = vrot.slane %v5968, 2
      %v6208 = vsel %vm621, %v6206, %v6207
      %v6209 = vrot.slane %v6069, 2
      %v6210 = vsel %vm621, %v6207, %v6209
      %v6211 = vrot.slane %v6054, 2
      %v6212 = vrot.slane %v5971, 2
      %v6213 = vsel %vm621, %v6211, %v6212
      %v6214 = vrot.slane %v6070, 2
      %v6215 = vsel %vm621, %v6212, %v6214
      %v6216 = vrot.slane %v6055, 2
      %v6217 = vrot.slane %v5974, 2
      %v6218 = vsel %vm621, %v6216, %v6217
      %v6219 = vrot.slane %v6071, 2
      %v6220 = vsel %vm621, %v6217, %v6219
      %v6221 = vrot.slane %v6056, 2
      %v6222 = vrot.slane %v5977, 2
      %v6223 = vsel %vm621, %v6221, %v6222
      %v6224 = vrot.slane %v6072, 2
      %v6225 = vsel %vm621, %v6222, %v6224
      %v6226 = vrot.slane %v6057, 2
      %v6227 = vrot.slane %v5980, 2
      %v6228 = vsel %vm621, %v6226, %v6227
      %v6229 = vrot.slane %v6073, 2
      %v6230 = vsel %vm621, %v6227, %v6229
      %v6231 = vrot.slane %v6058, 2
      %v6232 = vrot.slane %v5983, 2
      %v6233 = vsel %vm621, %v6231, %v6232
      %v6234 = vrot.slane %v6074, 2
      %v6235 = vsel %vm621, %v6232, %v6234
      %v6236 = vrot.slane %v6059, 2
      %v6237 = vrot.slane %v5986, 2
      %v6238 = vsel %vm621, %v6236, %v6237
      %v6239 = vrot.slane %v6075, 2
      %v6240 = vsel %vm621, %v6237, %v6239
      %v6241 = vrot.slane %v6060, 2
      %v6242 = vrot.slane %v5989, 2
      %v6243 = vsel %vm621, %v6241, %v6242
      %v6244 = vrot.slane %v6076, 2
      %v6245 = vsel %vm621, %v6242, %v6244
      %v6246 = vrot.slane %v6061, 2
      %v6247 = vrot.slane %v5992, 2
      %v6248 = vsel %vm621, %v6246, %v6247
      %v6249 = vrot.slane %v6077, 2
      %v6250 = vsel %vm621, %v6247, %v6249
      %v6251 = vrot.slane %v6062, 2
      %v6252 = vrot.slane %v5995, 2
      %v6253 = vsel %vm621, %v6251, %v6252
      %v6254 = vrot.slane %v6078, 2
      %v6255 = vsel %vm621, %v6252, %v6254
      %v6256 = vrot.slane %v6063, 2
      %v6257 = vrot.slane %v5998, 2
      %v6258 = vsel %vm621, %v6256, %v6257
      %v6259 = vrot.slane %v6079, 2
      %v6260 = vsel %vm621, %v6257, %v6259
      %v6263 = vrot.slane %v6064, 1
      %v6264 = vrot.slane %v6001, 1
      %v6265 = vsel %vm540, %v6263, %v6264
      %v6266 = vrot.slane %v6080, 1
      %v6267 = vsel %vm540, %v6264, %v6266
      %v6268 = vrot.slane %v6064, 2
      %v6269 = vrot.slane %v6001, 2
      %v6270 = vsel %vm621, %v6268, %v6269
      %v6271 = vrot.slane %v6080, 2
      %v6272 = vsel %vm621, %v6269, %v6271
      %6303 = vrot.lane.b32.xlu0 %v6113, 16
      %v6304 = vpop.permute.xlu0 %6303
      %6305 = vrot.lane.b32.xlu0 %v6115, 16
      %v6306 = vpop.permute.xlu0 %6305
      %6307 = vrot.lane.b32.xlu0 %v6118, 16
      %v6308 = vpop.permute.xlu0 %6307
      %6309 = vrot.lane.b32.xlu0 %v6120, 16
      %v6310 = vpop.permute.xlu0 %6309
      %6311 = vrot.lane.b32.xlu0 %v6123, 16
      %v6312 = vpop.permute.xlu0 %6311
      %6313 = vrot.lane.b32.xlu0 %v6125, 16
      %v6314 = vpop.permute.xlu0 %6313
      %6315 = vrot.lane.b32.xlu0 %v6128, 16
      %v6316 = vpop.permute.xlu0 %6315
      %6317 = vrot.lane.b32.xlu0 %v6130, 16
      %v6318 = vpop.permute.xlu0 %6317
      %6319 = vrot.lane.b32.xlu0 %v6133, 16
      %v6320 = vpop.permute.xlu0 %6319
      %6321 = vrot.lane.b32.xlu0 %v6135, 16
      %v6322 = vpop.permute.xlu0 %6321
      %6323 = vrot.lane.b32.xlu0 %v6138, 16
      %v6324 = vpop.permute.xlu0 %6323
      %6325 = vrot.lane.b32.xlu0 %v6140, 16
      %v6326 = vpop.permute.xlu0 %6325
      %6327 = vrot.lane.b32.xlu0 %v6143, 16
      %v6328 = vpop.permute.xlu0 %6327
      %6329 = vrot.lane.b32.xlu0 %v6145, 16
      %v6330 = vpop.permute.xlu0 %6329
      %6331 = vrot.lane.b32.xlu0 %v6148, 16
      %v6332 = vpop.permute.xlu0 %6331
      %6333 = vrot.lane.b32.xlu0 %v6150, 16
      %v6334 = vpop.permute.xlu0 %6333
      %6335 = vrot.lane.b32.xlu0 %v6153, 16
      %v6336 = vpop.permute.xlu0 %6335
      %6337 = vrot.lane.b32.xlu0 %v6155, 16
      %v6338 = vpop.permute.xlu0 %6337
      %6339 = vrot.lane.b32.xlu0 %v6158, 16
      %v6340 = vpop.permute.xlu0 %6339
      %6341 = vrot.lane.b32.xlu0 %v6160, 16
      %v6342 = vpop.permute.xlu0 %6341
      %6343 = vrot.lane.b32.xlu0 %v6163, 16
      %v6344 = vpop.permute.xlu0 %6343
      %6345 = vrot.lane.b32.xlu0 %v6165, 16
      %v6346 = vpop.permute.xlu0 %6345
      %6347 = vrot.lane.b32.xlu0 %v6168, 16
      %v6348 = vpop.permute.xlu0 %6347
      %6349 = vrot.lane.b32.xlu0 %v6170, 16
      %v6350 = vpop.permute.xlu0 %6349
      %6351 = vrot.lane.b32.xlu0 %v6173, 16
      %v6352 = vpop.permute.xlu0 %6351
      %6353 = vrot.lane.b32.xlu0 %v6175, 16
      %v6354 = vpop.permute.xlu0 %6353
      %6355 = vrot.lane.b32.xlu0 %v6178, 16
      %v6356 = vpop.permute.xlu0 %6355
      %6357 = vrot.lane.b32.xlu0 %v6180, 16
      %v6358 = vpop.permute.xlu0 %6357
      %6359 = vrot.lane.b32.xlu0 %v6183, 16
      %v6360 = vpop.permute.xlu0 %6359
      %6361 = vrot.lane.b32.xlu0 %v6185, 16
      %v6362 = vpop.permute.xlu0 %6361
      %6393 = vrot.lane.b32.xlu0 %v6188, 32
      %v6394 = vpop.permute.xlu0 %6393
      %6395 = vrot.lane.b32.xlu0 %v6190, 32
      %v6396 = vpop.permute.xlu0 %6395
      %6397 = vrot.lane.b32.xlu0 %v6193, 32
      %v6398 = vpop.permute.xlu0 %6397
      %6399 = vrot.lane.b32.xlu0 %v6195, 32
      %v6400 = vpop.permute.xlu0 %6399
      %6401 = vrot.lane.b32.xlu0 %v6198, 32
      %v6402 = vpop.permute.xlu0 %6401
      %6403 = vrot.lane.b32.xlu0 %v6200, 32
      %v6404 = vpop.permute.xlu0 %6403
      %6405 = vrot.lane.b32.xlu0 %v6203, 32
      %v6406 = vpop.permute.xlu0 %6405
      %6407 = vrot.lane.b32.xlu0 %v6205, 32
      %v6408 = vpop.permute.xlu0 %6407
      %6409 = vrot.lane.b32.xlu0 %v6208, 32
      %v6410 = vpop.permute.xlu0 %6409
      %6411 = vrot.lane.b32.xlu0 %v6210, 32
      %v6412 = vpop.permute.xlu0 %6411
      %6413 = vrot.lane.b32.xlu0 %v6213, 32
      %v6414 = vpop.permute.xlu0 %6413
      %6415 = vrot.lane.b32.xlu0 %v6215, 32
      %v6416 = vpop.permute.xlu0 %6415
      %6417 = vrot.lane.b32.xlu0 %v6218, 32
      %v6418 = vpop.permute.xlu0 %6417
      %6419 = vrot.lane.b32.xlu0 %v6220, 32
      %v6420 = vpop.permute.xlu0 %6419
      %6421 = vrot.lane.b32.xlu0 %v6223, 32
      %v6422 = vpop.permute.xlu0 %6421
      %6423 = vrot.lane.b32.xlu0 %v6225, 32
      %v6424 = vpop.permute.xlu0 %6423
      %6425 = vrot.lane.b32.xlu0 %v6228, 32
      %v6426 = vpop.permute.xlu0 %6425
      %6427 = vrot.lane.b32.xlu0 %v6230, 32
      %v6428 = vpop.permute.xlu0 %6427
      %6429 = vrot.lane.b32.xlu0 %v6233, 32
      %v6430 = vpop.permute.xlu0 %6429
      %6431 = vrot.lane.b32.xlu0 %v6235, 32
      %v6432 = vpop.permute.xlu0 %6431
      %6433 = vrot.lane.b32.xlu0 %v6238, 32
      %v6434 = vpop.permute.xlu0 %6433
      %6435 = vrot.lane.b32.xlu0 %v6240, 32
      %v6436 = vpop.permute.xlu0 %6435
      %6437 = vrot.lane.b32.xlu0 %v6243, 32
      %v6438 = vpop.permute.xlu0 %6437
      %6439 = vrot.lane.b32.xlu0 %v6245, 32
      %v6440 = vpop.permute.xlu0 %6439
      %6441 = vrot.lane.b32.xlu0 %v6248, 32
      %v6442 = vpop.permute.xlu0 %6441
      %6443 = vrot.lane.b32.xlu0 %v6250, 32
      %v6444 = vpop.permute.xlu0 %6443
      %6445 = vrot.lane.b32.xlu0 %v6253, 32
      %v6446 = vpop.permute.xlu0 %6445
      %6447 = vrot.lane.b32.xlu0 %v6255, 32
      %v6448 = vpop.permute.xlu0 %6447
      %6449 = vrot.lane.b32.xlu0 %v6258, 32
      %v6450 = vpop.permute.xlu0 %6449
      %6451 = vrot.lane.b32.xlu0 %v6260, 32
      %v6452 = vpop.permute.xlu0 %6451
      %6483 = vrot.lane.b32.xlu0 %v6049, 48
      %v6484 = vpop.permute.xlu0 %6483
      %6485 = vrot.lane.b32.xlu0 %v5956, 48
      %v6486 = vpop.permute.xlu0 %6485
      %6487 = vrot.lane.b32.xlu0 %v6050, 48
      %v6488 = vpop.permute.xlu0 %6487
      %6489 = vrot.lane.b32.xlu0 %v5959, 48
      %v6490 = vpop.permute.xlu0 %6489
      %6491 = vrot.lane.b32.xlu0 %v6051, 48
      %v6492 = vpop.permute.xlu0 %6491
      %6493 = vrot.lane.b32.xlu0 %v5962, 48
      %v6494 = vpop.permute.xlu0 %6493
      %6495 = vrot.lane.b32.xlu0 %v6052, 48
      %v6496 = vpop.permute.xlu0 %6495
      %6497 = vrot.lane.b32.xlu0 %v5965, 48
      %v6498 = vpop.permute.xlu0 %6497
      %6499 = vrot.lane.b32.xlu0 %v6053, 48
      %v6500 = vpop.permute.xlu0 %6499
      %6501 = vrot.lane.b32.xlu0 %v5968, 48
      %v6502 = vpop.permute.xlu0 %6501
      %6503 = vrot.lane.b32.xlu0 %v6054, 48
      %v6504 = vpop.permute.xlu0 %6503
      %6505 = vrot.lane.b32.xlu0 %v5971, 48
      %v6506 = vpop.permute.xlu0 %6505
      %6507 = vrot.lane.b32.xlu0 %v6055, 48
      %v6508 = vpop.permute.xlu0 %6507
      %6509 = vrot.lane.b32.xlu0 %v5974, 48
      %v6510 = vpop.permute.xlu0 %6509
      %6511 = vrot.lane.b32.xlu0 %v6056, 48
      %v6512 = vpop.permute.xlu0 %6511
      %6513 = vrot.lane.b32.xlu0 %v5977, 48
      %v6514 = vpop.permute.xlu0 %6513
      %6515 = vrot.lane.b32.xlu0 %v6057, 48
      %v6516 = vpop.permute.xlu0 %6515
      %6517 = vrot.lane.b32.xlu0 %v5980, 48
      %v6518 = vpop.permute.xlu0 %6517
      %6519 = vrot.lane.b32.xlu0 %v6058, 48
      %v6520 = vpop.permute.xlu0 %6519
      %6521 = vrot.lane.b32.xlu0 %v5983, 48
      %v6522 = vpop.permute.xlu0 %6521
      %6523 = vrot.lane.b32.xlu0 %v6059, 48
      %v6524 = vpop.permute.xlu0 %6523
      %6525 = vrot.lane.b32.xlu0 %v5986, 48
      %v6526 = vpop.permute.xlu0 %6525
      %6527 = vrot.lane.b32.xlu0 %v6060, 48
      %v6528 = vpop.permute.xlu0 %6527
      %6529 = vrot.lane.b32.xlu0 %v5989, 48
      %v6530 = vpop.permute.xlu0 %6529
      %6531 = vrot.lane.b32.xlu0 %v6061, 48
      %v6532 = vpop.permute.xlu0 %6531
      %6533 = vrot.lane.b32.xlu0 %v5992, 48
      %v6534 = vpop.permute.xlu0 %6533
      %6535 = vrot.lane.b32.xlu0 %v6062, 48
      %v6536 = vpop.permute.xlu0 %6535
      %6537 = vrot.lane.b32.xlu0 %v5995, 48
      %v6538 = vpop.permute.xlu0 %6537
      %6539 = vrot.lane.b32.xlu0 %v6063, 48
      %v6540 = vpop.permute.xlu0 %6539
      %6541 = vrot.lane.b32.xlu0 %v5998, 48
      %v6542 = vpop.permute.xlu0 %6541
      %6543 = vrot.lane.b32.xlu0 %v6064, 48
      %v6544 = vpop.permute.xlu0 %6543
      %6545 = vrot.lane.b32.xlu0 %v6001, 48
      %v6546 = vpop.permute.xlu0 %6545
      %6579 = vrot.lane.b32.xlu0 %v6113, 64
      %v6580 = vpop.permute.xlu0 %6579
      %6581 = vrot.lane.b32.xlu0 %v6115, 64
      %v6582 = vpop.permute.xlu0 %6581
      %6583 = vrot.lane.b32.xlu0 %v6118, 64
      %v6584 = vpop.permute.xlu0 %6583
      %6585 = vrot.lane.b32.xlu0 %v6120, 64
      %v6586 = vpop.permute.xlu0 %6585
      %6587 = vrot.lane.b32.xlu0 %v6123, 64
      %v6588 = vpop.permute.xlu0 %6587
      %6589 = vrot.lane.b32.xlu0 %v6125, 64
      %v6590 = vpop.permute.xlu0 %6589
      %6591 = vrot.lane.b32.xlu0 %v6128, 64
      %v6592 = vpop.permute.xlu0 %6591
      %6593 = vrot.lane.b32.xlu0 %v6130, 64
      %v6594 = vpop.permute.xlu0 %6593
      %6595 = vrot.lane.b32.xlu0 %v6133, 64
      %v6596 = vpop.permute.xlu0 %6595
      %6597 = vrot.lane.b32.xlu0 %v6135, 64
      %v6598 = vpop.permute.xlu0 %6597
      %6599 = vrot.lane.b32.xlu0 %v6138, 64
      %v6600 = vpop.permute.xlu0 %6599
      %6601 = vrot.lane.b32.xlu0 %v6140, 64
      %v6602 = vpop.permute.xlu0 %6601
      %6603 = vrot.lane.b32.xlu0 %v6143, 64
      %v6604 = vpop.permute.xlu0 %6603
      %6605 = vrot.lane.b32.xlu0 %v6145, 64
      %v6606 = vpop.permute.xlu0 %6605
      %6607 = vrot.lane.b32.xlu0 %v6148, 64
      %v6608 = vpop.permute.xlu0 %6607
      %6609 = vrot.lane.b32.xlu0 %v6150, 64
      %v6610 = vpop.permute.xlu0 %6609
      %6611 = vrot.lane.b32.xlu0 %v6153, 64
      %v6612 = vpop.permute.xlu0 %6611
      %6613 = vrot.lane.b32.xlu0 %v6155, 64
      %v6614 = vpop.permute.xlu0 %6613
      %6615 = vrot.lane.b32.xlu0 %v6158, 64
      %v6616 = vpop.permute.xlu0 %6615
      %6617 = vrot.lane.b32.xlu0 %v6160, 64
      %v6618 = vpop.permute.xlu0 %6617
      %6619 = vrot.lane.b32.xlu0 %v6163, 64
      %v6620 = vpop.permute.xlu0 %6619
      %6621 = vrot.lane.b32.xlu0 %v6165, 64
      %v6622 = vpop.permute.xlu0 %6621
      %6623 = vrot.lane.b32.xlu0 %v6168, 64
      %v6624 = vpop.permute.xlu0 %6623
      %6625 = vrot.lane.b32.xlu0 %v6170, 64
      %v6626 = vpop.permute.xlu0 %6625
      %6627 = vrot.lane.b32.xlu0 %v6173, 64
      %v6628 = vpop.permute.xlu0 %6627
      %6629 = vrot.lane.b32.xlu0 %v6175, 64
      %v6630 = vpop.permute.xlu0 %6629
      %6631 = vrot.lane.b32.xlu0 %v6178, 64
      %v6632 = vpop.permute.xlu0 %6631
      %6633 = vrot.lane.b32.xlu0 %v6180, 64
      %v6634 = vpop.permute.xlu0 %6633
      %6635 = vrot.lane.b32.xlu0 %v6183, 64
      %v6636 = vpop.permute.xlu0 %6635
      %6637 = vrot.lane.b32.xlu0 %v6185, 64
      %v6638 = vpop.permute.xlu0 %6637
      %6639 = vrot.lane.b32.xlu0 %v6265, 64
      %v6640 = vpop.permute.xlu0 %6639
      %6641 = vrot.lane.b32.xlu0 %v6267, 64
      %v6642 = vpop.permute.xlu0 %6641
      %6675 = vrot.lane.b32.xlu0 %v6188, 80
      %v6676 = vpop.permute.xlu0 %6675
      %6677 = vrot.lane.b32.xlu0 %v6190, 80
      %v6678 = vpop.permute.xlu0 %6677
      %6679 = vrot.lane.b32.xlu0 %v6193, 80
      %v6680 = vpop.permute.xlu0 %6679
      %6681 = vrot.lane.b32.xlu0 %v6195, 80
      %v6682 = vpop.permute.xlu0 %6681
      %6683 = vrot.lane.b32.xlu0 %v6198, 80
      %v6684 = vpop.permute.xlu0 %6683
      %6685 = vrot.lane.b32.xlu0 %v6200, 80
      %v6686 = vpop.permute.xlu0 %6685
      %6687 = vrot.lane.b32.xlu0 %v6203, 80
      %v6688 = vpop.permute.xlu0 %6687
      %6689 = vrot.lane.b32.xlu0 %v6205, 80
      %v6690 = vpop.permute.xlu0 %6689
      %6691 = vrot.lane.b32.xlu0 %v6208, 80
      %v6692 = vpop.permute.xlu0 %6691
      %6693 = vrot.lane.b32.xlu0 %v6210, 80
      %v6694 = vpop.permute.xlu0 %6693
      %6695 = vrot.lane.b32.xlu0 %v6213, 80
      %v6696 = vpop.permute.xlu0 %6695
      %6697 = vrot.lane.b32.xlu0 %v6215, 80
      %v6698 = vpop.permute.xlu0 %6697
      %6699 = vrot.lane.b32.xlu0 %v6218, 80
      %v6700 = vpop.permute.xlu0 %6699
      %6701 = vrot.lane.b32.xlu0 %v6220, 80
      %v6702 = vpop.permute.xlu0 %6701
      %6703 = vrot.lane.b32.xlu0 %v6223, 80
      %v6704 = vpop.permute.xlu0 %6703
      %6705 = vrot.lane.b32.xlu0 %v6225, 80
      %v6706 = vpop.permute.xlu0 %6705
      %6707 = vrot.lane.b32.xlu0 %v6228, 80
      %v6708 = vpop.permute.xlu0 %6707
      %6709 = vrot.lane.b32.xlu0 %v6230, 80
      %v6710 = vpop.permute.xlu0 %6709
      %6711 = vrot.lane.b32.xlu0 %v6233, 80
      %v6712 = vpop.permute.xlu0 %6711
      %6713 = vrot.lane.b32.xlu0 %v6235, 80
      %v6714 = vpop.permute.xlu0 %6713
      %6715 = vrot.lane.b32.xlu0 %v6238, 80
      %v6716 = vpop.permute.xlu0 %6715
      %6717 = vrot.lane.b32.xlu0 %v6240, 80
      %v6718 = vpop.permute.xlu0 %6717
      %6719 = vrot.lane.b32.xlu0 %v6243, 80
      %v6720 = vpop.permute.xlu0 %6719
      %6721 = vrot.lane.b32.xlu0 %v6245, 80
      %v6722 = vpop.permute.xlu0 %6721
      %6723 = vrot.lane.b32.xlu0 %v6248, 80
      %v6724 = vpop.permute.xlu0 %6723
      %6725 = vrot.lane.b32.xlu0 %v6250, 80
      %v6726 = vpop.permute.xlu0 %6725
      %6727 = vrot.lane.b32.xlu0 %v6253, 80
      %v6728 = vpop.permute.xlu0 %6727
      %6729 = vrot.lane.b32.xlu0 %v6255, 80
      %v6730 = vpop.permute.xlu0 %6729
      %6731 = vrot.lane.b32.xlu0 %v6258, 80
      %v6732 = vpop.permute.xlu0 %6731
      %6733 = vrot.lane.b32.xlu0 %v6260, 80
      %v6734 = vpop.permute.xlu0 %6733
      %6735 = vrot.lane.b32.xlu0 %v6270, 80
      %v6736 = vpop.permute.xlu0 %6735
      %6737 = vrot.lane.b32.xlu0 %v6272, 80
      %v6738 = vpop.permute.xlu0 %6737
      %6771 = vrot.lane.b32.xlu0 %v6050, 96
      %v6772 = vpop.permute.xlu0 %6771
      %6773 = vrot.lane.b32.xlu0 %v5959, 96
      %v6774 = vpop.permute.xlu0 %6773
      %6775 = vrot.lane.b32.xlu0 %v6051, 96
      %v6776 = vpop.permute.xlu0 %6775
      %6777 = vrot.lane.b32.xlu0 %v5962, 96
      %v6778 = vpop.permute.xlu0 %6777
      %6779 = vrot.lane.b32.xlu0 %v6052, 96
      %v6780 = vpop.permute.xlu0 %6779
      %6781 = vrot.lane.b32.xlu0 %v5965, 96
      %v6782 = vpop.permute.xlu0 %6781
      %6783 = vrot.lane.b32.xlu0 %v6053, 96
      %v6784 = vpop.permute.xlu0 %6783
      %6785 = vrot.lane.b32.xlu0 %v5968, 96
      %v6786 = vpop.permute.xlu0 %6785
      %6787 = vrot.lane.b32.xlu0 %v6054, 96
      %v6788 = vpop.permute.xlu0 %6787
      %6789 = vrot.lane.b32.xlu0 %v5971, 96
      %v6790 = vpop.permute.xlu0 %6789
      %6791 = vrot.lane.b32.xlu0 %v6055, 96
      %v6792 = vpop.permute.xlu0 %6791
      %6793 = vrot.lane.b32.xlu0 %v5974, 96
      %v6794 = vpop.permute.xlu0 %6793
      %6795 = vrot.lane.b32.xlu0 %v6056, 96
      %v6796 = vpop.permute.xlu0 %6795
      %6797 = vrot.lane.b32.xlu0 %v5977, 96
      %v6798 = vpop.permute.xlu0 %6797
      %6799 = vrot.lane.b32.xlu0 %v6057, 96
      %v6800 = vpop.permute.xlu0 %6799
      %6801 = vrot.lane.b32.xlu0 %v5980, 96
      %v6802 = vpop.permute.xlu0 %6801
      %6803 = vrot.lane.b32.xlu0 %v6058, 96
      %v6804 = vpop.permute.xlu0 %6803
      %6805 = vrot.lane.b32.xlu0 %v5983, 96
      %v6806 = vpop.permute.xlu0 %6805
      %6807 = vrot.lane.b32.xlu0 %v6059, 96
      %v6808 = vpop.permute.xlu0 %6807
      %6809 = vrot.lane.b32.xlu0 %v5986, 96
      %v6810 = vpop.permute.xlu0 %6809
      %6811 = vrot.lane.b32.xlu0 %v6060, 96
      %v6812 = vpop.permute.xlu0 %6811
      %6813 = vrot.lane.b32.xlu0 %v5989, 96
      %v6814 = vpop.permute.xlu0 %6813
      %6815 = vrot.lane.b32.xlu0 %v6061, 96
      %v6816 = vpop.permute.xlu0 %6815
      %6817 = vrot.lane.b32.xlu0 %v5992, 96
      %v6818 = vpop.permute.xlu0 %6817
      %6819 = vrot.lane.b32.xlu0 %v6062, 96
      %v6820 = vpop.permute.xlu0 %6819
      %6821 = vrot.lane.b32.xlu0 %v5995, 96
      %v6822 = vpop.permute.xlu0 %6821
      %6823 = vrot.lane.b32.xlu0 %v6063, 96
      %v6824 = vpop.permute.xlu0 %6823
      %6825 = vrot.lane.b32.xlu0 %v5998, 96
      %v6826 = vpop.permute.xlu0 %6825
      %6827 = vrot.lane.b32.xlu0 %v6064, 96
      %v6828 = vpop.permute.xlu0 %6827
      %6829 = vrot.lane.b32.xlu0 %v6001, 96
      %v6830 = vpop.permute.xlu0 %6829
      %6861 = vrot.lane.b32.xlu0 %v6118, 112
      %v6862 = vpop.permute.xlu0 %6861
      %6863 = vrot.lane.b32.xlu0 %v6120, 112
      %v6864 = vpop.permute.xlu0 %6863
      %6865 = vrot.lane.b32.xlu0 %v6123, 112
      %v6866 = vpop.permute.xlu0 %6865
      %6867 = vrot.lane.b32.xlu0 %v6125, 112
      %v6868 = vpop.permute.xlu0 %6867
      %6869 = vrot.lane.b32.xlu0 %v6128, 112
      %v6870 = vpop.permute.xlu0 %6869
      %6871 = vrot.lane.b32.xlu0 %v6130, 112
      %v6872 = vpop.permute.xlu0 %6871
      %6873 = vrot.lane.b32.xlu0 %v6133, 112
      %v6874 = vpop.permute.xlu0 %6873
      %6875 = vrot.lane.b32.xlu0 %v6135, 112
      %v6876 = vpop.permute.xlu0 %6875
      %6877 = vrot.lane.b32.xlu0 %v6138, 112
      %v6878 = vpop.permute.xlu0 %6877
      %6879 = vrot.lane.b32.xlu0 %v6140, 112
      %v6880 = vpop.permute.xlu0 %6879
      %6881 = vrot.lane.b32.xlu0 %v6143, 112
      %v6882 = vpop.permute.xlu0 %6881
      %6883 = vrot.lane.b32.xlu0 %v6145, 112
      %v6884 = vpop.permute.xlu0 %6883
      %6885 = vrot.lane.b32.xlu0 %v6148, 112
      %v6886 = vpop.permute.xlu0 %6885
      %6887 = vrot.lane.b32.xlu0 %v6150, 112
      %v6888 = vpop.permute.xlu0 %6887
      %6889 = vrot.lane.b32.xlu0 %v6153, 112
      %v6890 = vpop.permute.xlu0 %6889
      %6891 = vrot.lane.b32.xlu0 %v6155, 112
      %v6892 = vpop.permute.xlu0 %6891
      %6893 = vrot.lane.b32.xlu0 %v6158, 112
      %v6894 = vpop.permute.xlu0 %6893
      %6895 = vrot.lane.b32.xlu0 %v6160, 112
      %v6896 = vpop.permute.xlu0 %6895
      %6897 = vrot.lane.b32.xlu0 %v6163, 112
      %v6898 = vpop.permute.xlu0 %6897
      %6899 = vrot.lane.b32.xlu0 %v6165, 112
      %v6900 = vpop.permute.xlu0 %6899
      %6901 = vrot.lane.b32.xlu0 %v6168, 112
      %v6902 = vpop.permute.xlu0 %6901
      %6903 = vrot.lane.b32.xlu0 %v6170, 112
      %v6904 = vpop.permute.xlu0 %6903
      %6905 = vrot.lane.b32.xlu0 %v6173, 112
      %v6906 = vpop.permute.xlu0 %6905
      %6907 = vrot.lane.b32.xlu0 %v6175, 112
      %v6908 = vpop.permute.xlu0 %6907
      %6909 = vrot.lane.b32.xlu0 %v6178, 112
      %v6910 = vpop.permute.xlu0 %6909
      %6911 = vrot.lane.b32.xlu0 %v6180, 112
      %v6912 = vpop.permute.xlu0 %6911
      %6913 = vrot.lane.b32.xlu0 %v6183, 112
      %v6914 = vpop.permute.xlu0 %6913
      %6915 = vrot.lane.b32.xlu0 %v6185, 112
      %v6916 = vpop.permute.xlu0 %6915
      %6917 = vrot.lane.b32.xlu0 %v6265, 112
      %v6918 = vpop.permute.xlu0 %6917
      %6919 = vrot.lane.b32.xlu0 %v6267, 112
      %v6920 = vpop.permute.xlu0 %6919
      %v6951 = vsel %vm2049, %v6049, %v6304
      %v6952 = vsel %vm2049, %v5956, %v6306
      %v6953 = vsel %vm2049, %v6050, %v6308
      %v6954 = vsel %vm2049, %v5959, %v6310
      %v6955 = vsel %vm2049, %v6051, %v6312
      %v6956 = vsel %vm2049, %v5962, %v6314
      %v6957 = vsel %vm2049, %v6052, %v6316
      %v6958 = vsel %vm2049, %v5965, %v6318
      %v6959 = vsel %vm2049, %v6053, %v6320
      %v6960 = vsel %vm2049, %v5968, %v6322
      %v6961 = vsel %vm2049, %v6054, %v6324
      %v6962 = vsel %vm2049, %v5971, %v6326
      %v6963 = vsel %vm2049, %v6055, %v6328
      %v6964 = vsel %vm2049, %v5974, %v6330
      %v6965 = vsel %vm2049, %v6056, %v6332
      %v6966 = vsel %vm2049, %v5977, %v6334
      %v6967 = vsel %vm2049, %v6057, %v6336
      %v6968 = vsel %vm2049, %v5980, %v6338
      %v6969 = vsel %vm2049, %v6058, %v6340
      %v6970 = vsel %vm2049, %v5983, %v6342
      %v6971 = vsel %vm2049, %v6059, %v6344
      %v6972 = vsel %vm2049, %v5986, %v6346
      %v6973 = vsel %vm2049, %v6060, %v6348
      %v6974 = vsel %vm2049, %v5989, %v6350
      %v6975 = vsel %vm2049, %v6061, %v6352
      %v6976 = vsel %vm2049, %v5992, %v6354
      %v6977 = vsel %vm2049, %v6062, %v6356
      %v6978 = vsel %vm2049, %v5995, %v6358
      %v6979 = vsel %vm2049, %v6063, %v6360
      %v6980 = vsel %vm2049, %v5998, %v6362
      %v6981 = vsel %vm3507, %v6951, %v6394
      %v6982 = vsel %vm3507, %v6952, %v6396
      %v6983 = vsel %vm3507, %v6953, %v6398
      %v6984 = vsel %vm3507, %v6954, %v6400
      %v6985 = vsel %vm3507, %v6955, %v6402
      %v6986 = vsel %vm3507, %v6956, %v6404
      %v6987 = vsel %vm3507, %v6957, %v6406
      %v6988 = vsel %vm3507, %v6958, %v6408
      %v6989 = vsel %vm3507, %v6959, %v6410
      %v6990 = vsel %vm3507, %v6960, %v6412
      %v6991 = vsel %vm3507, %v6961, %v6414
      %v6992 = vsel %vm3507, %v6962, %v6416
      %v6993 = vsel %vm3507, %v6963, %v6418
      %v6994 = vsel %vm3507, %v6964, %v6420
      %v6995 = vsel %vm3507, %v6965, %v6422
      %v6996 = vsel %vm3507, %v6966, %v6424
      %v6997 = vsel %vm3507, %v6967, %v6426
      %v6998 = vsel %vm3507, %v6968, %v6428
      %v6999 = vsel %vm3507, %v6969, %v6430
      %v7000 = vsel %vm3507, %v6970, %v6432
      %v7001 = vsel %vm3507, %v6971, %v6434
      %v7002 = vsel %vm3507, %v6972, %v6436
      %v7003 = vsel %vm3507, %v6973, %v6438
      %v7004 = vsel %vm3507, %v6974, %v6440
      %v7005 = vsel %vm3507, %v6975, %v6442
      %v7006 = vsel %vm3507, %v6976, %v6444
      %v7007 = vsel %vm3507, %v6977, %v6446
      %v7008 = vsel %vm3507, %v6978, %v6448
      %v7009 = vsel %vm3507, %v6979, %v6450
      %v7010 = vsel %vm3507, %v6980, %v6452
      %v7011 = vsel %vm3573, %v5318, %v6484
      %v7012 = vsel %vm3573, %v5319, %v6486
      %v7013 = vsel %vm3573, %v6981, %v6488
      %v7014 = vsel %vm3573, %v6982, %v6490
      %v7015 = vsel %vm3573, %v6983, %v6492
      %v7016 = vsel %vm3573, %v6984, %v6494
      %v7017 = vsel %vm3573, %v6985, %v6496
      %v7018 = vsel %vm3573, %v6986, %v6498
      %v7019 = vsel %vm3573, %v6987, %v6500
      %v7020 = vsel %vm3573, %v6988, %v6502
      %v7021 = vsel %vm3573, %v6989, %v6504
      %v7022 = vsel %vm3573, %v6990, %v6506
      %v7023 = vsel %vm3573, %v6991, %v6508
      %v7024 = vsel %vm3573, %v6992, %v6510
      %v7025 = vsel %vm3573, %v6993, %v6512
      %v7026 = vsel %vm3573, %v6994, %v6514
      %v7027 = vsel %vm3573, %v6995, %v6516
      %v7028 = vsel %vm3573, %v6996, %v6518
      %v7029 = vsel %vm3573, %v6997, %v6520
      %v7030 = vsel %vm3573, %v6998, %v6522
      %v7031 = vsel %vm3573, %v6999, %v6524
      %v7032 = vsel %vm3573, %v7000, %v6526
      %v7033 = vsel %vm3573, %v7001, %v6528
      %v7034 = vsel %vm3573, %v7002, %v6530
      %v7035 = vsel %vm3573, %v7003, %v6532
      %v7036 = vsel %vm3573, %v7004, %v6534
      %v7037 = vsel %vm3573, %v7005, %v6536
      %v7038 = vsel %vm3573, %v7006, %v6538
      %v7039 = vsel %vm3573, %v7007, %v6540
      %v7040 = vsel %vm3573, %v7008, %v6542
      %v7041 = vsel %vm3573, %v7009, %v6544
      %v7042 = vsel %vm3573, %v7010, %v6546
      %v7043 = vsel %vm3639, %v7011, %v6580
      %v7044 = vsel %vm3639, %v7012, %v6582
      %v7045 = vsel %vm3639, %v7013, %v6584
      %v7046 = vsel %vm3639, %v7014, %v6586
      %v7047 = vsel %vm3639, %v7015, %v6588
      %v7048 = vsel %vm3639, %v7016, %v6590
      %v7049 = vsel %vm3639, %v7017, %v6592
      %v7050 = vsel %vm3639, %v7018, %v6594
      %v7051 = vsel %vm3639, %v7019, %v6596
      %v7052 = vsel %vm3639, %v7020, %v6598
      %v7053 = vsel %vm3639, %v7021, %v6600
      %v7054 = vsel %vm3639, %v7022, %v6602
      %v7055 = vsel %vm3639, %v7023, %v6604
      %v7056 = vsel %vm3639, %v7024, %v6606
      %v7057 = vsel %vm3639, %v7025, %v6608
      %v7058 = vsel %vm3639, %v7026, %v6610
      %v7059 = vsel %vm3639, %v7027, %v6612
      %v7060 = vsel %vm3639, %v7028, %v6614
      %v7061 = vsel %vm3639, %v7029, %v6616
      %v7062 = vsel %vm3639, %v7030, %v6618
      %v7063 = vsel %vm3639, %v7031, %v6620
      %v7064 = vsel %vm3639, %v7032, %v6622
      %v7065 = vsel %vm3639, %v7033, %v6624
      %v7066 = vsel %vm3639, %v7034, %v6626
      %v7067 = vsel %vm3639, %v7035, %v6628
      %v7068 = vsel %vm3639, %v7036, %v6630
      %v7069 = vsel %vm3639, %v7037, %v6632
      %v7070 = vsel %vm3639, %v7038, %v6634
      %v7071 = vsel %vm3639, %v7039, %v6636
      %v7072 = vsel %vm3639, %v7040, %v6638
      %v7073 = vsel %vm3639, %v7041, %v6640
      %v7074 = vsel %vm3639, %v7042, %v6642
      %v7075 = vsel %vm5414, %v7043, %v6676
      %v7076 = vsel %vm5414, %v7044, %v6678
      %v7077 = vsel %vm5414, %v7045, %v6680
      %v7078 = vsel %vm5414, %v7046, %v6682
      %v7079 = vsel %vm5414, %v7047, %v6684
      %v7080 = vsel %vm5414, %v7048, %v6686
      %v7081 = vsel %vm5414, %v7049, %v6688
      %v7082 = vsel %vm5414, %v7050, %v6690
      %v7083 = vsel %vm5414, %v7051, %v6692
      %v7084 = vsel %vm5414, %v7052, %v6694
      %v7085 = vsel %vm5414, %v7053, %v6696
      %v7086 = vsel %vm5414, %v7054, %v6698
      %v7087 = vsel %vm5414, %v7055, %v6700
      %v7088 = vsel %vm5414, %v7056, %v6702
      %v7089 = vsel %vm5414, %v7057, %v6704
      %v7090 = vsel %vm5414, %v7058, %v6706
      %v7091 = vsel %vm5414, %v7059, %v6708
      %v7092 = vsel %vm5414, %v7060, %v6710
      %v7093 = vsel %vm5414, %v7061, %v6712
      %v7094 = vsel %vm5414, %v7062, %v6714
      %v7095 = vsel %vm5414, %v7063, %v6716
      %v7096 = vsel %vm5414, %v7064, %v6718
      %v7097 = vsel %vm5414, %v7065, %v6720
      %v7098 = vsel %vm5414, %v7066, %v6722
      %v7099 = vsel %vm5414, %v7067, %v6724
      %v7100 = vsel %vm5414, %v7068, %v6726
      %v7101 = vsel %vm5414, %v7069, %v6728
      %v7102 = vsel %vm5414, %v7070, %v6730
      %v7103 = vsel %vm5414, %v7071, %v6732
      %v7104 = vsel %vm5414, %v7072, %v6734
      %v7105 = vsel %vm5414, %v7073, %v6736
      %v7106 = vsel %vm5414, %v7074, %v6738
      %v7107 = vsel %vm5447, %v7075, %v6772
      %v7108 = vsel %vm5447, %v7076, %v6774
      %v7109 = vsel %vm5447, %v7077, %v6776
      %v7110 = vsel %vm5447, %v7078, %v6778
      %v7111 = vsel %vm5447, %v7079, %v6780
      %v7112 = vsel %vm5447, %v7080, %v6782
      %v7113 = vsel %vm5447, %v7081, %v6784
      %v7114 = vsel %vm5447, %v7082, %v6786
      %v7115 = vsel %vm5447, %v7083, %v6788
      %v7116 = vsel %vm5447, %v7084, %v6790
      %v7117 = vsel %vm5447, %v7085, %v6792
      %v7118 = vsel %vm5447, %v7086, %v6794
      %v7119 = vsel %vm5447, %v7087, %v6796
      %v7120 = vsel %vm5447, %v7088, %v6798
      %v7121 = vsel %vm5447, %v7089, %v6800
      %v7122 = vsel %vm5447, %v7090, %v6802
      %v7123 = vsel %vm5447, %v7091, %v6804
      %v7124 = vsel %vm5447, %v7092, %v6806
      %v7125 = vsel %vm5447, %v7093, %v6808
      %v7126 = vsel %vm5447, %v7094, %v6810
      %v7127 = vsel %vm5447, %v7095, %v6812
      %v7128 = vsel %vm5447, %v7096, %v6814
      %v7129 = vsel %vm5447, %v7097, %v6816
      %v7130 = vsel %vm5447, %v7098, %v6818
      %v7131 = vsel %vm5447, %v7099, %v6820
      %v7132 = vsel %vm5447, %v7100, %v6822
      %v7133 = vsel %vm5447, %v7101, %v6824
      %v7134 = vsel %vm5447, %v7102, %v6826
      %v7135 = vsel %vm5447, %v7103, %v6828
      %v7136 = vsel %vm5447, %v7104, %v6830
      %v7137 = vsel %vm5447, %v7105, %v5155
      %v7138 = vsel %vm5447, %v7106, %v5157
      %v7139 = vsel %vm5480, %v7107, %v6862
      %v7140 = vsel %vm5480, %v7108, %v6864
      %v7141 = vsel %vm5480, %v7109, %v6866
      %v7142 = vsel %vm5480, %v7110, %v6868
      %v7143 = vsel %vm5480, %v7111, %v6870
      %v7144 = vsel %vm5480, %v7112, %v6872
      %v7145 = vsel %vm5480, %v7113, %v6874
      %v7146 = vsel %vm5480, %v7114, %v6876
      %v7147 = vsel %vm5480, %v7115, %v6878
      %v7148 = vsel %vm5480, %v7116, %v6880
      %v7149 = vsel %vm5480, %v7117, %v6882
      %v7150 = vsel %vm5480, %v7118, %v6884
      %v7151 = vsel %vm5480, %v7119, %v6886
      %v7152 = vsel %vm5480, %v7120, %v6888
      %v7153 = vsel %vm5480, %v7121, %v6890
      %v7154 = vsel %vm5480, %v7122, %v6892
      %v7155 = vsel %vm5480, %v7123, %v6894
      %v7156 = vsel %vm5480, %v7124, %v6896
      %v7157 = vsel %vm5480, %v7125, %v6898
      %v7158 = vsel %vm5480, %v7126, %v6900
      %v7159 = vsel %vm5480, %v7127, %v6902
      %v7160 = vsel %vm5480, %v7128, %v6904
      %v7161 = vsel %vm5480, %v7129, %v6906
      %v7162 = vsel %vm5480, %v7130, %v6908
      %v7163 = vsel %vm5480, %v7131, %v6910
      %v7164 = vsel %vm5480, %v7132, %v6912
      %v7165 = vsel %vm5480, %v7133, %v6914
      %v7166 = vsel %vm5480, %v7134, %v6916
      %v7167 = vsel %vm5480, %v7135, %v6918
      %v7168 = vsel %vm5480, %v7136, %v6920
      %v7169 = vsel %vm5480, %v7137, %v5251
      %v7170 = vsel %vm5480, %v7138, %v5253
      %v7171 = vpack.c.bf16 %v7140, %v7139
      %v7172 = vpack.c.bf16 %v6195, %v6193
      %v7173 = vpack.c.bf16 %v7142, %v7141
      %v7174 = vpack.c.bf16 %v6200, %v6198
      %v7175 = vpack.c.bf16 %v7144, %v7143
      %v7176 = vpack.c.bf16 %v6205, %v6203
      %v7177 = vpack.c.bf16 %v7146, %v7145
      %v7178 = vpack.c.bf16 %v6210, %v6208
      %v7179 = vpack.c.bf16 %v7148, %v7147
      %v7180 = vpack.c.bf16 %v6215, %v6213
      %v7181 = vpack.c.bf16 %v7150, %v7149
      %v7182 = vpack.c.bf16 %v6220, %v6218
      %v7183 = vpack.c.bf16 %v7152, %v7151
      %v7184 = vpack.c.bf16 %v6225, %v6223
      %v7185 = vpack.c.bf16 %v7154, %v7153
      %v7186 = vpack.c.bf16 %v6230, %v6228
      %v7187 = vpack.c.bf16 %v7156, %v7155
      %v7188 = vpack.c.bf16 %v6235, %v6233
      %v7189 = vpack.c.bf16 %v7158, %v7157
      %v7190 = vpack.c.bf16 %v6240, %v6238
      %v7191 = vpack.c.bf16 %v7160, %v7159
      %v7192 = vpack.c.bf16 %v6245, %v6243
      %v7193 = vpack.c.bf16 %v7162, %v7161
      %v7194 = vpack.c.bf16 %v6250, %v6248
      %v7195 = vpack.c.bf16 %v7164, %v7163
      %v7196 = vpack.c.bf16 %v6255, %v6253
      %v7197 = vpack.c.bf16 %v7166, %v7165
      %v7198 = vpack.c.bf16 %v6260, %v6258
      %v7199 = vpack.c.bf16 %v7168, %v7167
      %v7200 = vpack.c.bf16 %v6272, %v6270
      %v7201 = vpack.c.bf16 %v7170, %v7169
      %v7202 = vld [vmem:[%s6] sm:$0xf]
      %v7203 = vld [vmem:[%s6 + $0x4] sm:$0xf]
      %v7204 = vld [vmem:[%s6 + $0x8] sm:$0xf]
      %v7205 = vld [vmem:[%s6 + $0xc] sm:$0xf]
      %v7206 = vld [vmem:[%s6 + $0x10] sm:$0xf]
      %v7207 = vld [vmem:[%s6 + $0x14] sm:$0xf]
      %v7208 = vld [vmem:[%s6 + $0x18] sm:$0xf]
      %v7209 = vld [vmem:[%s6 + $0x1c] sm:$0xf]
      %v7210 = vld [vmem:[%s6 + $0x20] sm:$0xf]
      %v7211 = vld [vmem:[%s6 + $0x24] sm:$0xf]
      %v7212 = vld [vmem:[%s6 + $0x28] sm:$0xf]
      %v7213 = vld [vmem:[%s6 + $0x2c] sm:$0xf]
      %v7214 = vld [vmem:[%s6 + $0x30] sm:$0xf]
      %v7215 = vld [vmem:[%s6 + $0x34] sm:$0xf]
      %v7216 = vld [vmem:[%s6 + $0x38] sm:$0xf]
      %v7217 = vld [vmem:[%s6 + $0x3c] sm:$0xf]
      %v7218 = vld [vmem:[%s6 + $0x40] sm:$0xf]
      %v7219 = vld [vmem:[%s6 + $0x44] sm:$0xf]
      %v7220 = vld [vmem:[#allocation2] sm:$0x1]
      %v7222 = vlaneseq
      %v7223 = vshrl.u32 %v7222, 7
      %v7224 = vsub.s32 0, %v7223
      %v7225 = vrot.slane %v7220, %v7224
      %v7245 = vunpack.c.l.b16 %v7202
      %v7246 = vunpack.c.l.b16 %v7203
      %v7247 = vunpack.c.l.b16 %v7204
      %v7248 = vunpack.c.l.b16 %v7205
      %v7249 = vunpack.c.l.b16 %v7206
      %v7250 = vunpack.c.l.b16 %v7207
      %v7251 = vunpack.c.l.b16 %v7208
      %v7252 = vunpack.c.l.b16 %v7209
      %v7253 = vunpack.c.l.b16 %v7210
      %v7254 = vunpack.c.l.b16 %v7211
      %v7255 = vunpack.c.l.b16 %v7212
      %v7256 = vunpack.c.l.b16 %v7213
      %v7257 = vunpack.c.l.b16 %v7214
      %v7258 = vunpack.c.l.b16 %v7215
      %v7259 = vunpack.c.l.b16 %v7216
      %v7260 = vunpack.c.l.b16 %v7217
      %v7261 = vunpack.c.l.b16 %v7218
      %v7262 = vunpack.c.l.b16 %v7219
      %v7263 = vpack.c.b16 %v7246, %v7245
      %v7264 = vpack.c.b16 %v7248, %v7247
      %v7265 = vpack.c.b16 %v7250, %v7249
      %v7266 = vpack.c.b16 %v7252, %v7251
      %v7267 = vpack.c.b16 %v7254, %v7253
      %v7268 = vpack.c.b16 %v7256, %v7255
      %v7269 = vpack.c.b16 %v7258, %v7257
      %v7270 = vpack.c.b16 %v7260, %v7259
      %v7271 = vpack.c.b16 %v7262, %v7261
      %v7282 = vsel %vm2049, %v7172, 0
      %v7285 = vsel %vm2049, %v7174, 0
      %v7288 = vsel %vm2049, %v7176, 0
      %v7291 = vsel %vm2049, %v7178, 0
      %v7294 = vsel %vm2049, %v7180, 0
      %v7297 = vsel %vm2049, %v7182, 0
      %v7300 = vsel %vm2049, %v7184, 0
      %v7303 = vsel %vm2049, %v7186, 0
      %v7306 = vsel %vm2049, %v7188, 0
      %v7309 = vsel %vm2049, %v7190, 0
      %v7312 = vsel %vm2049, %v7192, 0
      %v7315 = vsel %vm2049, %v7194, 0
      %v7318 = vsel %vm2049, %v7196, 0
      %v7321 = vsel %vm2049, %v7198, 0
      %v7324 = vsel %vm2049, %v7200, 0
      %7326 = vmatprep.subr.bf16.mxu0 0
      %7327 = vmatpush1.bf16.msra.mxu0 %v7263
      %7328 = vmatprep.subr.bf16.mxu0 0
      %7329 = vmatpush1.bf16.msra.mxu0 %v7264
      %7330 = vmatprep.subr.bf16.mxu0 0
      %7331 = vmatpush1.bf16.msra.mxu0 %v7265
      %7332 = vmatprep.subr.bf16.mxu0 0
      %7333 = vmatpush1.bf16.msra.mxu0 %v7266
      %7334 = vmatprep.subr.bf16.mxu0 0
      %7335 = vmatpush1.bf16.msra.mxu0 %v7267
      %7336 = vmatprep.subr.bf16.mxu0 0
      %7337 = vmatpush1.bf16.msra.mxu0 %v7268
      %7338 = vmatprep.subr.bf16.mxu0 0
      %7339 = vmatpush1.bf16.msra.mxu0 %v7269
      %7340 = vmatprep.subr.bf16.mxu0 0
      %7341 = vmatpush1.bf16.msra.mxu0 %v7270
      %7342 = vmatprep.subr.bf16.mxu0 0
      %7343 = vmatpush1.bf16.msra.mxu0 %v7271
      %7344 = vmatprep.subr.bf16.mxu0 0
      %7345 = vmatpush1.bf16.msra.mxu0 0
      %7346 = vmatprep.subr.bf16.mxu0 0
      %7347 = vmatpush1.bf16.msra.mxu0 0
      %7348 = vmatprep.subr.bf16.mxu0 0
      %7349 = vmatpush1.bf16.msra.mxu0 0
      %7350 = vmatprep.subr.bf16.mxu0 0
      %7351 = vmatpush1.bf16.msra.mxu0 0
      %7352 = vmatprep.subr.bf16.mxu0 0
      %7353 = vmatpush1.bf16.msra.mxu0 0
      %7354 = vmatprep.subr.bf16.mxu0 0
      %7355 = vmatpush1.bf16.msra.mxu0 0
      %7356 = vmatprep.subr.bf16.mxu0 0
      %7357 = vmatpush1.bf16.msra.mxu0 0
      %7358 = vmatprep.mubr.bf16.mxu0 %v7282
      %7359 = vmatmul.mubr.bf16.gmra.mrb[0].mxu0 %v7171
      %v7360 = vpop.f32.mrb[0].mxu0
      %v7361 = vadd.f32 %v7225, %v7360
      %v7362 = vpop.f32.mrb[0].mxu0
      %v7363 = vpop.f32.mrb[0].mxu0
      %v7364 = vadd.f32 %v7225, %v7363
      %v7365 = vpop.f32.mrb[0].mxu0
      %7366 = vmatprep.mubr.bf16.mxu0 %v7285
      %7367 = vmatmul.mubr.bf16.gmra.mrb[0].mxu0 %v7173
      %v7368 = vpop.f32.mrb[0].mxu0
      %v7369 = vadd.f32 %v7225, %v7368
      %v7370 = vpop.f32.mrb[0].mxu0
      %v7371 = vpop.f32.mrb[0].mxu0
      %v7372 = vadd.f32 %v7225, %v7371
      %v7373 = vpop.f32.mrb[0].mxu0
      %7374 = vmatprep.mubr.bf16.mxu0 %v7288
      %7375 = vmatmul.mubr.bf16.gmra.mrb[0].mxu0 %v7175
      %v7376 = vpop.f32.mrb[0].mxu0
      %v7377 = vadd.f32 %v7225, %v7376
      %v7378 = vpop.f32.mrb[0].mxu0
      %v7379 = vpop.f32.mrb[0].mxu0
      %v7380 = vadd.f32 %v7225, %v7379
      %v7381 = vpop.f32.mrb[0].mxu0
      %7382 = vmatprep.mubr.bf16.mxu0 %v7291
      %7383 = vmatmul.mubr.bf16.gmra.mrb[0].mxu0 %v7177
      %v7384 = vpop.f32.mrb[0].mxu0
      %v7385 = vadd.f32 %v7225, %v7384
      %v7386 = vpop.f32.mrb[0].mxu0
      %v7387 = vpop.f32.mrb[0].mxu0
      %v7388 = vadd.f32 %v7225, %v7387
      %v7389 = vpop.f32.mrb[0].mxu0
      %7390 = vmatprep.mubr.bf16.mxu0 %v7294
      %7391 = vmatmul.mubr.bf16.gmra.mrb[0].mxu0 %v7179
      %v7392 = vpop.f32.mrb[0].mxu0
      %v7393 = vadd.f32 %v7225, %v7392
      %v7394 = vpop.f32.mrb[0].mxu0
      %v7395 = vpop.f32.mrb[0].mxu0
      %v7396 = vadd.f32 %v7225, %v7395
      %v7397 = vpop.f32.mrb[0].mxu0
      %7398 = vmatprep.mubr.bf16.mxu0 %v7297
      %7399 = vmatmul.mubr.bf16.gmra.mrb[0].mxu0 %v7181
      %v7400 = vpop.f32.mrb[0].mxu0
      %v7401 = vadd.f32 %v7225, %v7400
      %v7402 = vpop.f32.mrb[0].mxu0
      %v7403 = vpop.f32.mrb[0].mxu0
      %v7404 = vadd.f32 %v7225, %v7403
      %v7405 = vpop.f32.mrb[0].mxu0
      %7406 = vmatprep.mubr.bf16.mxu0 %v7300
      %7407 = vmatmul.mubr.bf16.gmra.mrb[0].mxu0 %v7183
      %v7408 = vpop.f32.mrb[0].mxu0
      %v7409 = vadd.f32 %v7225, %v7408
      %v7410 = vpop.f32.mrb[0].mxu0
      %v7411 = vpop.f32.mrb[0].mxu0
      %v7412 = vadd.f32 %v7225, %v7411
      %v7413 = vpop.f32.mrb[0].mxu0
      %7414 = vmatprep.mubr.bf16.mxu0 %v7303
      %7415 = vmatmul.mubr.bf16.gmra.mrb[0].mxu0 %v7185
      %v7416 = vpop.f32.mrb[0].mxu0
      %v7417 = vadd.f32 %v7225, %v7416
      %v7418 = vpop.f32.mrb[0].mxu0
      %v7419 = vpop.f32.mrb[0].mxu0
      %v7420 = vadd.f32 %v7225, %v7419
      %v7421 = vpop.f32.mrb[0].mxu0
      %7422 = vmatprep.mubr.bf16.mxu0 %v7306
      %7423 = vmatmul.mubr.bf16.gmra.mrb[0].mxu0 %v7187
      %v7424 = vpop.f32.mrb[0].mxu0
      %v7425 = vadd.f32 %v7225, %v7424
      %v7426 = vpop.f32.mrb[0].mxu0
      %v7427 = vpop.f32.mrb[0].mxu0
      %v7428 = vadd.f32 %v7225, %v7427
      %v7429 = vpop.f32.mrb[0].mxu0
      %7430 = vmatprep.mubr.bf16.mxu0 %v7309
      %7431 = vmatmul.mubr.bf16.gmra.mrb[0].mxu0 %v7189
      %v7432 = vpop.f32.mrb[0].mxu0
      %v7433 = vadd.f32 %v7225, %v7432
      %v7434 = vpop.f32.mrb[0].mxu0
      %v7435 = vpop.f32.mrb[0].mxu0
      %v7436 = vadd.f32 %v7225, %v7435
      %v7437 = vpop.f32.mrb[0].mxu0
      %7438 = vmatprep.mubr.bf16.mxu0 %v7312
      %7439 = vmatmul.mubr.bf16.gmra.mrb[0].mxu0 %v7191
      %v7440 = vpop.f32.mrb[0].mxu0
      %v7441 = vadd.f32 %v7225, %v7440
      %v7442 = vpop.f32.mrb[0].mxu0
      %v7443 = vpop.f32.mrb[0].mxu0
      %v7444 = vadd.f32 %v7225, %v7443
      %v7445 = vpop.f32.mrb[0].mxu0
      %7446 = vmatprep.mubr.bf16.mxu0 %v7315
      %7447 = vmatmul.mubr.bf16.gmra.mrb[0].mxu0 %v7193
      %v7448 = vpop.f32.mrb[0].mxu0
      %v7449 = vadd.f32 %v7225, %v7448
      %v7450 = vpop.f32.mrb[0].mxu0
      %v7451 = vpop.f32.mrb[0].mxu0
      %v7452 = vadd.f32 %v7225, %v7451
      %v7453 = vpop.f32.mrb[0].mxu0
      %7454 = vmatprep.mubr.bf16.mxu0 %v7318
      %7455 = vmatmul.mubr.bf16.gmra.mrb[0].mxu0 %v7195
      %v7456 = vpop.f32.mrb[0].mxu0
      %v7457 = vadd.f32 %v7225, %v7456
      %v7458 = vpop.f32.mrb[0].mxu0
      %v7459 = vpop.f32.mrb[0].mxu0
      %v7460 = vadd.f32 %v7225, %v7459
      %v7461 = vpop.f32.mrb[0].mxu0
      %7462 = vmatprep.mubr.bf16.mxu0 %v7321
      %7463 = vmatmul.mubr.bf16.gmra.mrb[0].mxu0 %v7197
      %v7464 = vpop.f32.mrb[0].mxu0
      %v7465 = vadd.f32 %v7225, %v7464
      %v7466 = vpop.f32.mrb[0].mxu0
      %v7467 = vpop.f32.mrb[0].mxu0
      %v7468 = vadd.f32 %v7225, %v7467
      %v7469 = vpop.f32.mrb[0].mxu0
      %7470 = vmatprep.mubr.bf16.mxu0 %v7324
      %7471 = vmatmul.mubr.bf16.gmra.mrb[0].mxu0 %v7199
      %v7472 = vpop.f32.mrb[0].mxu0
      %v7473 = vadd.f32 %v7225, %v7472
      %v7474 = vpop.f32.mrb[0].mxu0
      %v7475 = vpop.f32.mrb[0].mxu0
      %v7476 = vadd.f32 %v7225, %v7475
      %v7477 = vpop.f32.mrb[0].mxu0
      %7478 = vmatprep.mubr.bf16.mxu0 %v5663
      %7479 = vmatmul.mubr.bf16.gmra.mrb[0].mxu0 %v7201
      %v7480 = vpop.f32.mrb[0].mxu0
      %v7481 = vadd.f32 %v7225, %v7480
      %v7482 = vpop.f32.mrb[0].mxu0
      %v7483 = vpop.f32.mrb[0].mxu0
      %v7484 = vadd.f32 %v7225, %v7483
      %v7485 = vpop.f32.mrb[0].mxu0
      %7486 = vdwg.mxu0
      %7519 = vrot.lane.b32.xlu0 %v5826, 1
      %v7520 = vpop.permute.xlu0 %7519
      %7521 = vrot.lane.b32.xlu0 %v5827, 1
      %v7522 = vpop.permute.xlu0 %7521
      %7523 = vrot.lane.b32.xlu0 %v5828, 1
      %v7524 = vpop.permute.xlu0 %7523
      %7525 = vrot.lane.b32.xlu0 %v5829, 1
      %v7526 = vpop.permute.xlu0 %7525
      %7527 = vrot.lane.b32.xlu0 %v5830, 1
      %v7528 = vpop.permute.xlu0 %7527
      %7529 = vrot.lane.b32.xlu0 %v5831, 1
      %v7530 = vpop.permute.xlu0 %7529
      %7531 = vrot.lane.b32.xlu0 %v5832, 1
      %v7532 = vpop.permute.xlu0 %7531
      %7533 = vrot.lane.b32.xlu0 %v5833, 1
      %v7534 = vpop.permute.xlu0 %7533
      %7535 = vrot.lane.b32.xlu0 %v5834, 1
      %v7536 = vpop.permute.xlu0 %7535
      %7537 = vrot.lane.b32.xlu0 %v5835, 1
      %v7538 = vpop.permute.xlu0 %7537
      %7539 = vrot.lane.b32.xlu0 %v5836, 1
      %v7540 = vpop.permute.xlu0 %7539
      %7541 = vrot.lane.b32.xlu0 %v5837, 1
      %v7542 = vpop.permute.xlu0 %7541
      %7543 = vrot.lane.b32.xlu0 %v5838, 1
      %v7544 = vpop.permute.xlu0 %7543
      %7545 = vrot.lane.b32.xlu0 %v5839, 1
      %v7546 = vpop.permute.xlu0 %7545
      %7547 = vrot.lane.b32.xlu0 %v5840, 1
      %v7548 = vpop.permute.xlu0 %7547
      %7549 = vrot.lane.b32.xlu0 %v5841, 1
      %v7550 = vpop.permute.xlu0 %7549
      %7551 = vrot.lane.b32.xlu0 %v5842, 1
      %v7552 = vpop.permute.xlu0 %7551
      %7553 = vrot.lane.b32.xlu0 %v5843, 1
      %v7554 = vpop.permute.xlu0 %7553
      %7555 = vrot.lane.b32.xlu0 %v5844, 1
      %v7556 = vpop.permute.xlu0 %7555
      %7557 = vrot.lane.b32.xlu0 %v5845, 1
      %v7558 = vpop.permute.xlu0 %7557
      %7559 = vrot.lane.b32.xlu0 %v5846, 1
      %v7560 = vpop.permute.xlu0 %7559
      %7561 = vrot.lane.b32.xlu0 %v5847, 1
      %v7562 = vpop.permute.xlu0 %7561
      %7563 = vrot.lane.b32.xlu0 %v5848, 1
      %v7564 = vpop.permute.xlu0 %7563
      %7565 = vrot.lane.b32.xlu0 %v5849, 1
      %v7566 = vpop.permute.xlu0 %7565
      %7567 = vrot.lane.b32.xlu0 %v5850, 1
      %v7568 = vpop.permute.xlu0 %7567
      %7569 = vrot.lane.b32.xlu0 %v5851, 1
      %v7570 = vpop.permute.xlu0 %7569
      %7571 = vrot.lane.b32.xlu0 %v5852, 1
      %v7572 = vpop.permute.xlu0 %7571
      %7573 = vrot.lane.b32.xlu0 %v5853, 1
      %v7574 = vpop.permute.xlu0 %7573
      %7575 = vrot.lane.b32.xlu0 %v5854, 1
      %v7576 = vpop.permute.xlu0 %7575
      %7577 = vrot.lane.b32.xlu0 %v5855, 1
      %v7578 = vpop.permute.xlu0 %7577
      %7579 = vrot.lane.b32.xlu0 %v5856, 1
      %v7580 = vpop.permute.xlu0 %7579
      %7581 = vrot.lane.b32.xlu0 %v5857, 1
      %v7582 = vpop.permute.xlu0 %7581
      %vm7615 = vcmask 7168
      %v7616 = vsel %vm7615, %v7361, %v7520
      %v7617 = vsel %vm7615, %v7364, %v7522
      %v7618 = vsel %vm7615, %v7369, %v7524
      %v7619 = vsel %vm7615, %v7372, %v7526
      %v7620 = vsel %vm7615, %v7377, %v7528
      %v7621 = vsel %vm7615, %v7380, %v7530
      %v7622 = vsel %vm7615, %v7385, %v7532
      %v7623 = vsel %vm7615, %v7388, %v7534
      %v7624 = vsel %vm7615, %v7393, %v7536
      %v7625 = vsel %vm7615, %v7396, %v7538
      %v7626 = vsel %vm7615, %v7401, %v7540
      %v7627 = vsel %vm7615, %v7404, %v7542
      %v7628 = vsel %vm7615, %v7409, %v7544
      %v7629 = vsel %vm7615, %v7412, %v7546
      %v7630 = vsel %vm7615, %v7417, %v7548
      %v7631 = vsel %vm7615, %v7420, %v7550
      %v7632 = vsel %vm7615, %v7425, %v7552
      %v7633 = vsel %vm7615, %v7428, %v7554
      %v7634 = vsel %vm7615, %v7433, %v7556
      %v7635 = vsel %vm7615, %v7436, %v7558
      %v7636 = vsel %vm7615, %v7441, %v7560
      %v7637 = vsel %vm7615, %v7444, %v7562
      %v7638 = vsel %vm7615, %v7449, %v7564
      %v7639 = vsel %vm7615, %v7452, %v7566
      %v7640 = vsel %vm7615, %v7457, %v7568
      %v7641 = vsel %vm7615, %v7460, %v7570
      %v7642 = vsel %vm7615, %v7465, %v7572
      %v7643 = vsel %vm7615, %v7468, %v7574
      %v7644 = vsel %vm7615, %v7473, %v7576
      %v7645 = vsel %vm7615, %v7476, %v7578
      %v7646 = vsel %vm7615, %v7481, %v7580
      %v7647 = vsel %vm7615, %v7484, %v7582
      %vm7648 = vcmask 31744
      %7649 = vst.msk [vmem:[%s307] sm:$0xff] %vm7648, %v7616
      %7650 = vst.msk [vmem:[%s307 + $0x8] sm:$0xff] %vm7648, %v7617
      %7651 = vst.msk [vmem:[%s307 + $0x10] sm:$0xff] %vm7648, %v7618
      %7652 = vst.msk [vmem:[%s307 + $0x18] sm:$0xff] %vm7648, %v7619
      %7653 = vst.msk [vmem:[%s307 + $0x20] sm:$0xff] %vm7648, %v7620
      %7654 = vst.msk [vmem:[%s307 + $0x28] sm:$0xff] %vm7648, %v7621
      %7655 = vst.msk [vmem:[%s307 + $0x30] sm:$0xff] %vm7648, %v7622
      %7656 = vst.msk [vmem:[%s307 + $0x38] sm:$0xff] %vm7648, %v7623
      %7657 = vst.msk [vmem:[%s307 + $0x40] sm:$0xff] %vm7648, %v7624
      %7658 = vst.msk [vmem:[%s307 + $0x48] sm:$0xff] %vm7648, %v7625
      %7659 = vst.msk [vmem:[%s307 + $0x50] sm:$0xff] %vm7648, %v7626
      %7660 = vst.msk [vmem:[%s307 + $0x58] sm:$0xff] %vm7648, %v7627
      %7661 = vst.msk [vmem:[%s307 + $0x60] sm:$0xff] %vm7648, %v7628
      %7662 = vst.msk [vmem:[%s307 + $0x68] sm:$0xff] %vm7648, %v7629
      %7663 = vst.msk [vmem:[%s307 + $0x70] sm:$0xff] %vm7648, %v7630
      %7664 = vst.msk [vmem:[%s307 + $0x78] sm:$0xff] %vm7648, %v7631
      %7665 = vst.msk [vmem:[%s307 + $0x80] sm:$0xff] %vm7648, %v7632
      %7666 = vst.msk [vmem:[%s307 + $0x88] sm:$0xff] %vm7648, %v7633
      %7667 = vst.msk [vmem:[%s307 + $0x90] sm:$0xff] %vm7648, %v7634
      %7668 = vst.msk [vmem:[%s307 + $0x98] sm:$0xff] %vm7648, %v7635
      %7669 = vst.msk [vmem:[%s307 + $0xa0] sm:$0xff] %vm7648, %v7636
      %7670 = vst.msk [vmem:[%s307 + $0xa8] sm:$0xff] %vm7648, %v7637
      %7671 = vst.msk [vmem:[%s307 + $0xb0] sm:$0xff] %vm7648, %v7638
      %7672 = vst.msk [vmem:[%s307 + $0xb8] sm:$0xff] %vm7648, %v7639
      %7673 = vst.msk [vmem:[%s307 + $0xc0] sm:$0xff] %vm7648, %v7640
      %7674 = vst.msk [vmem:[%s307 + $0xc8] sm:$0xff] %vm7648, %v7641
      %7675 = vst.msk [vmem:[%s307 + $0xd0] sm:$0xff] %vm7648, %v7642
      %7676 = vst.msk [vmem:[%s307 + $0xd8] sm:$0xff] %vm7648, %v7643
      %7677 = vst.msk [vmem:[%s307 + $0xe0] sm:$0xff] %vm7648, %v7644
      %7678 = vst.msk [vmem:[%s307 + $0xe8] sm:$0xff] %vm7648, %v7645
      %7679 = vst.msk [vmem:[%s307 + $0xf0] sm:$0xff] %vm7648, %v7646
      %7680 = vst.msk [vmem:[%s307 + $0xf8] sm:$0xff] %vm7648, %v7647
      %p7681 = scmp.lt.s32.totalorder %s21, 1
      %s7682 = scalar_select %p7681, %s21, 1
      %s7683 = smul.addr %s7682, 32
      %s7684 = smul.addr %s7683, 8
      %s7685 = scalar_lea.vmem %s8, %s7684
      // Predicated region
      $region53: #{caddn_forward.1} parent=51 // pred_check
        %p7686 = pneg %p212
      $region54: #{caddn_forward.1} parent=51 // pred_check_branch
        %7688 = sbr.rel (%p7686) target = $region56
      $region55: #{caddn_forward.1} parent=51 // pred_region
        _
      $region56: #{caddn_forward.1} parent=51 // pred_fallthru
        _
    $region52: #{caddn_forward.1} parent=5 // pred_fallthru
      _
    %p7689 = scmp.le.s32.totalorder 2, %s16
    // Predicated region
    $region57: #{caddn_forward.1} parent=5 // pred_check
      %p7690 = pneg %p7689
    $region58: #{caddn_forward.1} parent=5 // pred_check_branch
      %7692 = sbr.rel (%p7690) target = $region60
    $region59: #{caddn_forward.1} parent=5 // pred_region
      %s7693 = ssub.s32 %s16, 2
      // Predicated region
      $region61: #{caddn_forward.1} parent=59 // pred_check
        %p7694 = pneg %p218
      $region62: #{caddn_forward.1} parent=59 // pred_check_branch
        %7696 = sbr.rel (%p7694) target = $region64
      $region63: #{caddn_forward.1} parent=59 // pred_region
        %p7697 = scmp.lt.s32.totalorder %s22, 1
        %s7698 = scalar_select %p7697, %s22, 1
        %s7699 = smul.addr %s7698, 32
        %s7700 = smul.addr %s7699, 8
        %s7701 = scalar_lea.vmem %s8, %s7700
      $region64: #{caddn_forward.1} parent=59 // pred_fallthru
        _
    $region60: #{caddn_forward.1} parent=5 // pred_fallthru
      _
  $region6: #{caddn_forward.1} parent=0 // loop_footer
    %s20 = sadd.s32 1, %s16
  $region7: #{caddn_forward.1} parent=0 // loop_footer_branch
    %15 = sbr.rel target = $region3
  $region8: #{caddn_forward.1} parent=0 // loop_exit
    _

</llo_original>
